<compile_context>
chip_gen: v5e
topology: v5e:2x2
jax: 0.10.0
libtpu: 0.0.40
codegen_flags: <defaults>
</compile_context>

<pallas_src>
import functools

import jax
import jax.numpy as jnp
from jax.experimental import pallas as pl
from jax.experimental.pallas import tpu as pltpu


# ----------------------------- Pallas kernels ------------------------------ #

def _make_conv_bn_relu_kernel(n_in):
    """conv (matmul over n_in channel groups) + batch-stat BN + ReLU."""

    def kernel(*refs):
        cols_refs = refs[:n_in]              # each (K_i, M) bf16
        w_refs = refs[n_in:2 * n_in]         # each (OC, K_i) bf16
        gb_ref = refs[2 * n_in]              # (OC, 2) f32: [:,0]=gamma, [:,1]=beta
        o_ref = refs[2 * n_in + 1]           # (OC, M) bf16

        acc = jnp.dot(w_refs[0][...], cols_refs[0][...],
                      preferred_element_type=jnp.float32)
        for i in range(1, n_in):             # skip-connection channel group(s)
            acc = acc + jnp.dot(w_refs[i][...], cols_refs[i][...],
                                preferred_element_type=jnp.float32)

        # Single-pass batch-statistic BatchNorm (training-mode nn.BatchNorm2d,
        # eps=1e-5).  Conv bias omitted: cancelled exactly by the mean subtraction.
        m = acc.shape[1]
        s1 = jnp.sum(acc, axis=1, keepdims=True)
        s2 = jnp.sum(acc * acc, axis=1, keepdims=True)
        mean = s1 * (1.0 / m)
        var = jnp.maximum(s2 * (1.0 / m) - mean * mean, 0.0)
        inv = jax.lax.rsqrt(var + 1e-5)
        gb = gb_ref[...]
        out = (acc - mean) * (inv * gb[:, 0:1]) + gb[:, 1:2]
        o_ref[...] = jnp.maximum(out, 0.0).astype(o_ref.dtype)

    return kernel


def _make_conv_tanh_kernel(n_in):
    """conv (matmul over n_in channel groups) + bias + tanh (final layer)."""

    def kernel(*refs):
        cols_refs = refs[:n_in]
        w_refs = refs[n_in:2 * n_in]
        b_ref = refs[2 * n_in]               # (OC, 1) f32
        o_ref = refs[2 * n_in + 1]           # (OC, M) f32

        acc = jnp.dot(w_refs[0][...], cols_refs[0][...],
                      preferred_element_type=jnp.float32)
        for i in range(1, n_in):
            acc = acc + jnp.dot(w_refs[i][...], cols_refs[i][...],
                                preferred_element_type=jnp.float32)
        o_ref[...] = jnp.tanh(acc + b_ref[...]).astype(o_ref.dtype)

    return kernel


def _call_fused(kernel, operands, out_shape, out_dtype):
    """Single-step pallas_call; every operand is a full-array VMEM block."""
    in_specs = [pl.BlockSpec(op.shape, lambda i: (0, 0)) for op in operands]
    return pl.pallas_call(
        kernel,
        out_shape=jax.ShapeDtypeStruct(out_shape, out_dtype),
        grid=(1,),
        in_specs=in_specs,
        out_specs=pl.BlockSpec(out_shape, lambda i: (0, 0)),
        compiler_params=pltpu.CompilerParams(dimension_semantics=("arbitrary",)),
    )(*operands)


def fused_conv_bn_relu(cols_list, w_list, gb):
    OC, M = w_list[0].shape[0], cols_list[0].shape[1]
    operands = list(cols_list) + list(w_list) + [gb]
    return _call_fused(_make_conv_bn_relu_kernel(len(cols_list)), operands,
                       (OC, M), jnp.bfloat16)


def fused_conv_tanh(cols_list, w_list, b):
    OC, M = w_list[0].shape[0], cols_list[0].shape[1]
    operands = list(cols_list) + list(w_list) + [b]
    return _call_fused(_make_conv_tanh_kernel(len(cols_list)), operands,
                       (OC, M), jnp.float32)


# ------------------------------ JAX glue ----------------------------------- #

def im2col_cf(x, k, s, p):
    """x: (C, B, H, W) -> cols^T (C*k*k, B*OH*OW), K order (c, kh, kw)."""
    C, B, H, W = x.shape
    xp = jnp.pad(x, ((0, 0), (0, 0), (p, p), (p, p)))
    OH = (H + 2 * p - k) // s + 1
    OW = (W + 2 * p - k) // s + 1
    # TODO(synk): move this patch gather in-kernel (k*k shifted-matmul accumulation)
    # to avoid materializing the k^2-expanded cols buffer in HBM.
    patches = [xp[:, :, kh:kh + OH * s:s, kw:kw + OW * s:s]
               for kh in range(k) for kw in range(k)]
    cols = jnp.stack(patches, axis=1)          # (C, k*k, B, OH, OW)
    return cols.reshape(C * k * k, B * OH * OW), (B, OH, OW)


def _cols_for(xs_cf, k, s, pad):
    cols_list, dims = [], None
    for x in xs_cf:
        cols, dims = im2col_cf(x, k, s, pad)
        cols_list.append(cols)
    return cols_list, dims


def conv_bn_relu(xs_cf, w_mats, gb, k, s, pad):
    cols_list, (B, OH, OW) = _cols_for(xs_cf, k, s, pad)
    OC = w_mats[0].shape[0]
    y = fused_conv_bn_relu(cols_list, w_mats, gb)       # (OC, M) bf16
    return y.reshape(OC, B, OH, OW)


def conv_tanh(xs_cf, w_mats, b, k, s, pad):
    cols_list, (B, OH, OW) = _cols_for(xs_cf, k, s, pad)
    OC = w_mats[0].shape[0]
    y = fused_conv_tanh(cols_list, w_mats, b)           # (OC, M) f32
    return y.reshape(OC, B, OH, OW)


def _upsample2_axis(x, axis):
    # 1-D linear x2 upsampling with half-pixel centers (align_corners=False):
    #   out[2k]   = 0.25*in[clamp(k-1)] + 0.75*in[k]
    #   out[2k+1] = 0.75*in[k]          + 0.25*in[clamp(k+1)]
    # Neighbor taps via shift-by-slice + concat (no gather); blend in f32.
    n = x.shape[axis]
    first = jax.lax.slice_in_dim(x, 0, 1, axis=axis)
    last = jax.lax.slice_in_dim(x, n - 1, n, axis=axis)
    left = jnp.concatenate([first, jax.lax.slice_in_dim(x, 0, n - 1, axis=axis)],
                           axis=axis)
    right = jnp.concatenate([jax.lax.slice_in_dim(x, 1, n, axis=axis), last],
                            axis=axis)
    xf = x.astype(jnp.float32)
    even = 0.25 * left.astype(jnp.float32) + 0.75 * xf
    odd = 0.75 * xf + 0.25 * right.astype(jnp.float32)
    out = jnp.stack([even, odd], axis=axis + 1)
    shape = list(x.shape)
    shape[axis] = 2 * n
    return out.reshape(shape).astype(x.dtype)


def upsample_bilinear_2x(x_cf):
    # Matches torch.nn.Upsample(scale_factor=2, mode='bilinear', align_corners=False).
    return _upsample2_axis(_upsample2_axis(x_cf, 2), 3)


# --------------------------- parameters & forward --------------------------- #

def init_params(key, base_filters=8):
    """f32 parameters mirroring the PyTorch module's layout."""
    bf = base_filters

    def conv(k_, oc, ic, ksz):
        k1, k2 = jax.random.split(k_)
        return {"w": 0.05 * jax.random.normal(k1, (oc, ic, ksz, ksz), jnp.float32),
                "b": 0.05 * jax.random.normal(k2, (oc,), jnp.float32)}

    def bn(oc):
        return {"gamma": jnp.ones((oc,), jnp.float32),
                "beta": jnp.zeros((oc,), jnp.float32)}

    keys = jax.random.split(key, 6)
    return {
        "enc1": {"conv": conv(keys[0], bf, 1, 4), "bn": bn(bf)},
        "enc2": {"conv": conv(keys[1], 2 * bf, bf, 4), "bn": bn(2 * bf)},
        "bott": {"conv": conv(keys[2], 4 * bf, 2 * bf, 4), "bn": bn(4 * bf)},
        "dec2": {"conv": conv(keys[3], 2 * bf, 4 * bf, 3), "bn": bn(2 * bf)},
        "dec1": {"conv": conv(keys[4], bf, 4 * bf, 3), "bn": bn(bf)},
        "final": {"conv": conv(keys[5], 1, 2 * bf, 3)},
    }


def prepare_params(p, base_filters=8):
    """One-time kernel-ready prep: reshape weights to (OC, IC*k*k) bf16 matmul form,
    pack (gamma, beta) -> (OC, 2) f32, split skip-conv weights at the concat boundary.
    Conv biases of BN layers are dropped (exactly cancelled by batch-stat BN mean)."""
    bf = base_filters

    def mat(w):                                  # K order (c, kh, kw) = im2col order
        return w.reshape(w.shape[0], -1).astype(jnp.bfloat16)

    def gb(bn):
        return jnp.stack([bn["gamma"], bn["beta"]], axis=1).astype(jnp.float32)

    out = {
        "enc1": {"w": mat(p["enc1"]["conv"]["w"]), "gb": gb(p["enc1"]["bn"])},
        "enc2": {"w": mat(p["enc2"]["conv"]["w"]), "gb": gb(p["enc2"]["bn"])},
        "bott": {"w": mat(p["bott"]["conv"]["w"]), "gb": gb(p["bott"]["bn"])},
        "dec2": {"w": mat(p["dec2"]["conv"]["w"]), "gb": gb(p["dec2"]["bn"])},
    }
    w = p["dec1"]["conv"]["w"]                   # input = cat([d2, e2]) -> split at 2*bf
    out["dec1"] = {"wa": mat(w[:, :2 * bf]), "wb": mat(w[:, 2 * bf:]),
                   "gb": gb(p["dec1"]["bn"])}
    w = p["final"]["conv"]["w"]                  # input = cat([d1, e1]) -> split at bf
    out["final"] = {"wa": mat(w[:, :bf]), "wb": mat(w[:, bf:]),
                    "b": p["final"]["conv"]["b"].reshape(-1, 1).astype(jnp.float32)}
    return out


def generator_forward(params, x_nchw, image_size=32):
    # NCHW -> (C, B, H, W); inter-layer activations are bf16 (f32 math in-kernel).
    x = jnp.transpose(x_nchw, (1, 0, 2, 3)).astype(jnp.bfloat16)

    e1 = conv_bn_relu([x], [params["enc1"]["w"]], params["enc1"]["gb"], 4, 2, 1)
    e2 = conv_bn_relu([e1], [params["enc2"]["w"]], params["enc2"]["gb"], 4, 2, 1)
    b = conv_bn_relu([e2], [params["bott"]["w"]], params["bott"]["gb"], 4, 2, 1)

    d2 = conv_bn_relu([upsample_bilinear_2x(b)],
                      [params["dec2"]["w"]], params["dec2"]["gb"], 3, 1, 1)

    # torch.cat([d2, e2], dim=1) folded into the conv: upsample each half (channel-wise
    # op, so identical) and accumulate the split weight matmuls inside the kernel.
    d1 = conv_bn_relu([upsample_bilinear_2x(d2), upsample_bilinear_2x(e2)],
                      [params["dec1"]["wa"], params["dec1"]["wb"]],
                      params["dec1"]["gb"], 3, 1, 1)

    # torch.cat([d1, e1], dim=1) folded the same way into the final conv.
    y = conv_tanh([upsample_bilinear_2x(d1), upsample_bilinear_2x(e1)],
                  [params["final"]["wa"], params["final"]["wb"]],
                  params["final"]["b"], 3, 1, 1)

    out = jnp.transpose(y, (1, 0, 2, 3))         # (1, B, H, W) -> (B, 1, H, W), f32
    return out.reshape(-1, 1, image_size, image_size)


if __name__ == "__main__":
    image_size = 32
    base_filters = 8

    x = jax.random.normal(jax.random.PRNGKey(0), (2, 1, image_size, image_size),
                          dtype=jnp.float32)
    params = prepare_params(init_params(jax.random.PRNGKey(1), base_filters),
                            base_filters)

    fwd = jax.jit(functools.partial(generator_forward, image_size=image_size))
    out = jax.block_until_ready(fwd(params, x))

    assert out.shape == (2, 1, image_size, image_size), out.shape
    assert bool(jnp.all(jnp.isfinite(out)))
    assert bool(jnp.all(jnp.abs(out) <= 1.0))    # tanh output range
    print("KERNEL_OK")
</pallas_src>

<mosaic_0001>
module attributes {stable_mosaic.version = 11 : i64} {
  func.func @kernel(%arg0: i32, %arg1: memref<16x512xbf16, #tpu.memory_space<vmem>>, %arg2: memref<8x16xbf16, #tpu.memory_space<vmem>>, %arg3: memref<8x2xf32, #tpu.memory_space<vmem>>, %arg4: memref<8x512xbf16, #tpu.memory_space<vmem>>) attributes {dimension_semantics = [#tpu.dimension_semantics<arbitrary>], iteration_bounds = array<i64: 1>, scalar_prefetch = 0 : i64, scratch_operands = 0 : i64, tpu.core_type = #tpu.core_type<tc>, window_params = [{pipeline_mode = #tpu.pipeline_mode<synchronous>, transform_indices = @transform_0, window_bounds = array<i64: 16, 512>}, {pipeline_mode = #tpu.pipeline_mode<synchronous>, transform_indices = @transform_1, window_bounds = array<i64: 8, 16>}, {pipeline_mode = #tpu.pipeline_mode<synchronous>, transform_indices = @transform_2, window_bounds = array<i64: 8, 2>}, {pipeline_mode = #tpu.pipeline_mode<synchronous>, transform_indices = @transform_3, window_bounds = array<i64: 8, 512>}]} {
    %c0 = arith.constant 0 : index
    %c0_0 = arith.constant 0 : index
    %0 = vector.load %arg2[%c0, %c0_0] : memref<8x16xbf16, #tpu.memory_space<vmem>>, vector<8x16xbf16>
    %c0_1 = arith.constant 0 : index
    %c0_2 = arith.constant 0 : index
    %1 = vector.load %arg1[%c0_1, %c0_2] : memref<16x512xbf16, #tpu.memory_space<vmem>>, vector<16x512xbf16>
    %cst = arith.constant dense<0.000000e+00> : vector<8x512xf32>
    %2 = tpu.matmul %0, %1, %cst {dimension_numbers = #tpu.dot_dimension_numbers<[1], [0], [0], [1], [0, 0, 1, 1], [], []>} : vector<8x16xbf16>, vector<16x512xbf16>, vector<8x512xf32> -> vector<8x512xf32>
    %cst_3 = arith.constant dense<0.000000e+00> : vector<8xf32>
    %3 = vector.multi_reduction <add>, %2, %cst_3 [1] : vector<8x512xf32> to vector<8xf32>
    %4 = vector.shape_cast %3 : vector<8xf32> to vector<8x1xf32>
    %5 = arith.mulf %2, %2 : vector<8x512xf32>
    %cst_4 = arith.constant dense<0.000000e+00> : vector<8xf32>
    %6 = vector.multi_reduction <add>, %5, %cst_4 [1] : vector<8x512xf32> to vector<8xf32>
    %7 = vector.shape_cast %6 : vector<8xf32> to vector<8x1xf32>
    %cst_5 = arith.constant 0.001953125 : f32
    %8 = vector.broadcast %cst_5 : f32 to vector<8x1xf32>
    %9 = arith.mulf %4, %8 : vector<8x1xf32>
    %cst_6 = arith.constant 0.001953125 : f32
    %10 = vector.broadcast %cst_6 : f32 to vector<8x1xf32>
    %11 = arith.mulf %7, %10 : vector<8x1xf32>
    %12 = arith.mulf %9, %9 : vector<8x1xf32>
    %13 = arith.subf %11, %12 : vector<8x1xf32>
    %cst_7 = arith.constant 0.000000e+00 : f32
    %14 = vector.broadcast %cst_7 : f32 to vector<8x1xf32>
    %15 = arith.maximumf %13, %14 : vector<8x1xf32>
    %cst_8 = arith.constant 9.99999974E-6 : f32
    %16 = vector.broadcast %cst_8 : f32 to vector<8x1xf32>
    %17 = arith.addf %15, %16 : vector<8x1xf32>
    %18 = math.rsqrt %17 : vector<8x1xf32>
    %c0_9 = arith.constant 0 : index
    %c0_10 = arith.constant 0 : index
    %19 = vector.load %arg3[%c0_9, %c0_10] : memref<8x2xf32, #tpu.memory_space<vmem>>, vector<8x2xf32>
    %20 = vector.broadcast %9 : vector<8x1xf32> to vector<8x512xf32>
    %21 = arith.subf %2, %20 : vector<8x512xf32>
    %22 = vector.extract_strided_slice %19 {offsets = [0, 0], sizes = [8, 1], strides = [1, 1]} : vector<8x2xf32> to vector<8x1xf32>
    %23 = arith.mulf %18, %22 : vector<8x1xf32>
    %24 = vector.broadcast %23 : vector<8x1xf32> to vector<8x512xf32>
    %25 = arith.mulf %21, %24 : vector<8x512xf32>
    %26 = vector.extract_strided_slice %19 {offsets = [0, 1], sizes = [8, 1], strides = [1, 1]} : vector<8x2xf32> to vector<8x1xf32>
    %27 = vector.broadcast %26 : vector<8x1xf32> to vector<8x512xf32>
    %28 = arith.addf %25, %27 : vector<8x512xf32>
    %cst_11 = arith.constant 0.000000e+00 : f32
    %29 = vector.broadcast %cst_11 : f32 to vector<8x512xf32>
    %30 = arith.maximumf %28, %29 : vector<8x512xf32>
    %31 = arith.truncf %30 : vector<8x512xf32> to vector<8x512xbf16>
    %c0_12 = arith.constant 0 : index
    %c0_13 = arith.constant 0 : index
    %32 = vector.load %arg4[%c0_12, %c0_13] : memref<8x512xbf16, #tpu.memory_space<vmem>>, vector<8x512xbf16>
    tpu.vector_store %arg4[%c0_12, %c0_13], %31 {strides = array<i32>} : memref<8x512xbf16, #tpu.memory_space<vmem>>, vector<8x512xbf16>,
    return
  }
  func.func @transform_0(%arg0: i32) -> (i32, i32) {
    %c0_i32 = arith.constant 0 : i32
    %c0_i32_0 = arith.constant 0 : i32
    %c0_i32_1 = arith.constant 0 : i32
    return %c0_i32, %c0_i32_0 : i32, i32
  }
  func.func @transform_1(%arg0: i32) -> (i32, i32) {
    %c0_i32 = arith.constant 0 : i32
    %c0_i32_0 = arith.constant 0 : i32
    %c0_i32_1 = arith.constant 0 : i32
    return %c0_i32, %c0_i32_0 : i32, i32
  }
  func.func @transform_2(%arg0: i32) -> (i32, i32) {
    %c0_i32 = arith.constant 0 : i32
    %c0_i32_0 = arith.constant 0 : i32
    %c0_i32_1 = arith.constant 0 : i32
    return %c0_i32, %c0_i32_0 : i32, i32
  }
  func.func @transform_3(%arg0: i32) -> (i32, i32) {
    %c0_i32 = arith.constant 0 : i32
    %c0_i32_0 = arith.constant 0 : i32
    %c0_i32_1 = arith.constant 0 : i32
    return %c0_i32, %c0_i32_0 : i32, i32
  }
}

module attributes {stable_mosaic.version = 11 : i64} {
  func.func @kernel(%arg0: i32, %arg1: memref<128x128xbf16, #tpu.memory_space<vmem>>, %arg2: memref<16x128xbf16, #tpu.memory_space<vmem>>, %arg3: memref<16x2xf32, #tpu.memory_space<vmem>>, %arg4: memref<16x128xbf16, #tpu.memory_space<vmem>>) attributes {dimension_semantics = [#tpu.dimension_semantics<arbitrary>], iteration_bounds = array<i64: 1>, scalar_prefetch = 0 : i64, scratch_operands = 0 : i64, tpu.core_type = #tpu.core_type<tc>, window_params = [{pipeline_mode = #tpu.pipeline_mode<synchronous>, transform_indices = @transform_0, window_bounds = array<i64: 128, 128>}, {pipeline_mode = #tpu.pipeline_mode<synchronous>, transform_indices = @transform_1, window_bounds = array<i64: 16, 128>}, {pipeline_mode = #tpu.pipeline_mode<synchronous>, transform_indices = @transform_2, window_bounds = array<i64: 16, 2>}, {pipeline_mode = #tpu.pipeline_mode<synchronous>, transform_indices = @transform_3, window_bounds = array<i64: 16, 128>}]} {
    %c0 = arith.constant 0 : index
    %c0_0 = arith.constant 0 : index
    %0 = vector.load %arg2[%c0, %c0_0] : memref<16x128xbf16, #tpu.memory_space<vmem>>, vector<16x128xbf16>
    %c0_1 = arith.constant 0 : index
    %c0_2 = arith.constant 0 : index
    %1 = vector.load %arg1[%c0_1, %c0_2] : memref<128x128xbf16, #tpu.memory_space<vmem>>, vector<128x128xbf16>
    %cst = arith.constant dense<0.000000e+00> : vector<16x128xf32>
    %2 = tpu.matmul %0, %1, %cst {dimension_numbers = #tpu.dot_dimension_numbers<[1], [0], [0], [1], [0, 0, 1, 1], [], []>} : vector<16x128xbf16>, vector<128x128xbf16>, vector<16x128xf32> -> vector<16x128xf32>
    %cst_3 = arith.constant dense<0.000000e+00> : vector<16xf32>
    %3 = vector.multi_reduction <add>, %2, %cst_3 [1] : vector<16x128xf32> to vector<16xf32>
    %4 = vector.shape_cast %3 : vector<16xf32> to vector<16x1xf32>
    %5 = arith.mulf %2, %2 : vector<16x128xf32>
    %cst_4 = arith.constant dense<0.000000e+00> : vector<16xf32>
    %6 = vector.multi_reduction <add>, %5, %cst_4 [1] : vector<16x128xf32> to vector<16xf32>
    %7 = vector.shape_cast %6 : vector<16xf32> to vector<16x1xf32>
    %cst_5 = arith.constant 7.812500e-03 : f32
    %8 = vector.broadcast %cst_5 : f32 to vector<16x1xf32>
    %9 = arith.mulf %4, %8 : vector<16x1xf32>
    %cst_6 = arith.constant 7.812500e-03 : f32
    %10 = vector.broadcast %cst_6 : f32 to vector<16x1xf32>
    %11 = arith.mulf %7, %10 : vector<16x1xf32>
    %12 = arith.mulf %9, %9 : vector<16x1xf32>
    %13 = arith.subf %11, %12 : vector<16x1xf32>
    %cst_7 = arith.constant 0.000000e+00 : f32
    %14 = vector.broadcast %cst_7 : f32 to vector<16x1xf32>
    %15 = arith.maximumf %13, %14 : vector<16x1xf32>
    %cst_8 = arith.constant 9.99999974E-6 : f32
    %16 = vector.broadcast %cst_8 : f32 to vector<16x1xf32>
    %17 = arith.addf %15, %16 : vector<16x1xf32>
    %18 = math.rsqrt %17 : vector<16x1xf32>
    %c0_9 = arith.constant 0 : index
    %c0_10 = arith.constant 0 : index
    %19 = vector.load %arg3[%c0_9, %c0_10] : memref<16x2xf32, #tpu.memory_space<vmem>>, vector<16x2xf32>
    %20 = vector.broadcast %9 : vector<16x1xf32> to vector<16x128xf32>
    %21 = arith.subf %2, %20 : vector<16x128xf32>
    %22 = vector.extract_strided_slice %19 {offsets = [0, 0], sizes = [16, 1], strides = [1, 1]} : vector<16x2xf32> to vector<16x1xf32>
    %23 = arith.mulf %18, %22 : vector<16x1xf32>
    %24 = vector.broadcast %23 : vector<16x1xf32> to vector<16x128xf32>
    %25 = arith.mulf %21, %24 : vector<16x128xf32>
    %26 = vector.extract_strided_slice %19 {offsets = [0, 1], sizes = [16, 1], strides = [1, 1]} : vector<16x2xf32> to vector<16x1xf32>
    %27 = vector.broadcast %26 : vector<16x1xf32> to vector<16x128xf32>
    %28 = arith.addf %25, %27 : vector<16x128xf32>
    %cst_11 = arith.constant 0.000000e+00 : f32
    %29 = vector.broadcast %cst_11 : f32 to vector<16x128xf32>
    %30 = arith.maximumf %28, %29 : vector<16x128xf32>
    %31 = arith.truncf %30 : vector<16x128xf32> to vector<16x128xbf16>
    %c0_12 = arith.constant 0 : index
    %c0_13 = arith.constant 0 : index
    %32 = vector.load %arg4[%c0_12, %c0_13] : memref<16x128xbf16, #tpu.memory_space<vmem>>, vector<16x128xbf16>
    tpu.vector_store %arg4[%c0_12, %c0_13], %31 {strides = array<i32>} : memref<16x128xbf16, #tpu.memory_space<vmem>>, vector<16x128xbf16>,
    return
  }
  func.func @transform_0(%arg0: i32) -> (i32, i32) {
    %c0_i32 = arith.constant 0 : i32
    %c0_i32_0 = arith.constant 0 : i32
    %c0_i32_1 = arith.constant 0 : i32
    return %c0_i32, %c0_i32_0 : i32, i32
  }
  func.func @transform_1(%arg0: i32) -> (i32, i32) {
    %c0_i32 = arith.constant 0 : i32
    %c0_i32_0 = arith.constant 0 : i32
    %c0_i32_1 = arith.constant 0 : i32
    return %c0_i32, %c0_i32_0 : i32, i32
  }
  func.func @transform_2(%arg0: i32) -> (i32, i32) {
    %c0_i32 = arith.constant 0 : i32
    %c0_i32_0 = arith.constant 0 : i32
    %c0_i32_1 = arith.constant 0 : i32
    return %c0_i32, %c0_i32_0 : i32, i32
  }
  func.func @transform_3(%arg0: i32) -> (i32, i32) {
    %c0_i32 = arith.constant 0 : i32
    %c0_i32_0 = arith.constant 0 : i32
    %c0_i32_1 = arith.constant 0 : i32
    return %c0_i32, %c0_i32_0 : i32, i32
  }
}

module attributes {stable_mosaic.version = 11 : i64} {
  func.func @kernel(%arg0: i32, %arg1: memref<256x32xbf16, #tpu.memory_space<vmem>>, %arg2: memref<32x256xbf16, #tpu.memory_space<vmem>>, %arg3: memref<32x2xf32, #tpu.memory_space<vmem>>, %arg4: memref<32x32xbf16, #tpu.memory_space<vmem>>) attributes {dimension_semantics = [#tpu.dimension_semantics<arbitrary>], iteration_bounds = array<i64: 1>, scalar_prefetch = 0 : i64, scratch_operands = 0 : i64, tpu.core_type = #tpu.core_type<tc>, window_params = [{pipeline_mode = #tpu.pipeline_mode<synchronous>, transform_indices = @transform_0, window_bounds = array<i64: 256, 32>}, {pipeline_mode = #tpu.pipeline_mode<synchronous>, transform_indices = @transform_1, window_bounds = array<i64: 32, 256>}, {pipeline_mode = #tpu.pipeline_mode<synchronous>, transform_indices = @transform_2, window_bounds = array<i64: 32, 2>}, {pipeline_mode = #tpu.pipeline_mode<synchronous>, transform_indices = @transform_3, window_bounds = array<i64: 32, 32>}]} {
    %c0 = arith.constant 0 : index
    %c0_0 = arith.constant 0 : index
    %0 = vector.load %arg2[%c0, %c0_0] : memref<32x256xbf16, #tpu.memory_space<vmem>>, vector<32x256xbf16>
    %c0_1 = arith.constant 0 : index
    %c0_2 = arith.constant 0 : index
    %1 = vector.load %arg1[%c0_1, %c0_2] : memref<256x32xbf16, #tpu.memory_space<vmem>>, vector<256x32xbf16>
    %cst = arith.constant dense<0.000000e+00> : vector<32x32xf32>
    %2 = tpu.matmul %0, %1, %cst {dimension_numbers = #tpu.dot_dimension_numbers<[1], [0], [0], [1], [0, 0, 1, 1], [], []>} : vector<32x256xbf16>, vector<256x32xbf16>, vector<32x32xf32> -> vector<32x32xf32>
    %cst_3 = arith.constant dense<0.000000e+00> : vector<32xf32>
    %3 = vector.multi_reduction <add>, %2, %cst_3 [1] : vector<32x32xf32> to vector<32xf32>
    %4 = vector.shape_cast %3 : vector<32xf32> to vector<32x1xf32>
    %5 = arith.mulf %2, %2 : vector<32x32xf32>
    %cst_4 = arith.constant dense<0.000000e+00> : vector<32xf32>
    %6 = vector.multi_reduction <add>, %5, %cst_4 [1] : vector<32x32xf32> to vector<32xf32>
    %7 = vector.shape_cast %6 : vector<32xf32> to vector<32x1xf32>
    %cst_5 = arith.constant 3.125000e-02 : f32
    %8 = vector.broadcast %cst_5 : f32 to vector<32x1xf32>
    %9 = arith.mulf %4, %8 : vector<32x1xf32>
    %cst_6 = arith.constant 3.125000e-02 : f32
    %10 = vector.broadcast %cst_6 : f32 to vector<32x1xf32>
    %11 = arith.mulf %7, %10 : vector<32x1xf32>
    %12 = arith.mulf %9, %9 : vector<32x1xf32>
    %13 = arith.subf %11, %12 : vector<32x1xf32>
    %cst_7 = arith.constant 0.000000e+00 : f32
    %14 = vector.broadcast %cst_7 : f32 to vector<32x1xf32>
    %15 = arith.maximumf %13, %14 : vector<32x1xf32>
    %cst_8 = arith.constant 9.99999974E-6 : f32
    %16 = vector.broadcast %cst_8 : f32 to vector<32x1xf32>
    %17 = arith.addf %15, %16 : vector<32x1xf32>
    %18 = math.rsqrt %17 : vector<32x1xf32>
    %c0_9 = arith.constant 0 : index
    %c0_10 = arith.constant 0 : index
    %19 = vector.load %arg3[%c0_9, %c0_10] : memref<32x2xf32, #tpu.memory_space<vmem>>, vector<32x2xf32>
    %20 = vector.broadcast %9 : vector<32x1xf32> to vector<32x32xf32>
    %21 = arith.subf %2, %20 : vector<32x32xf32>
    %22 = vector.extract_strided_slice %19 {offsets = [0, 0], sizes = [32, 1], strides = [1, 1]} : vector<32x2xf32> to vector<32x1xf32>
    %23 = arith.mulf %18, %22 : vector<32x1xf32>
    %24 = vector.broadcast %23 : vector<32x1xf32> to vector<32x32xf32>
    %25 = arith.mulf %21, %24 : vector<32x32xf32>
    %26 = vector.extract_strided_slice %19 {offsets = [0, 1], sizes = [32, 1], strides = [1, 1]} : vector<32x2xf32> to vector<32x1xf32>
    %27 = vector.broadcast %26 : vector<32x1xf32> to vector<32x32xf32>
    %28 = arith.addf %25, %27 : vector<32x32xf32>
    %cst_11 = arith.constant 0.000000e+00 : f32
    %29 = vector.broadcast %cst_11 : f32 to vector<32x32xf32>
    %30 = arith.maximumf %28, %29 : vector<32x32xf32>
    %31 = arith.truncf %30 : vector<32x32xf32> to vector<32x32xbf16>
    %c0_12 = arith.constant 0 : index
    %c0_13 = arith.constant 0 : index
    %32 = vector.load %arg4[%c0_12, %c0_13] : memref<32x32xbf16, #tpu.memory_space<vmem>>, vector<32x32xbf16>
    tpu.vector_store %arg4[%c0_12, %c0_13], %31 {strides = array<i32>} : memref<32x32xbf16, #tpu.memory_space<vmem>>, vector<32x32xbf16>,
    return
  }
  func.func @transform_0(%arg0: i32) -> (i32, i32) {
    %c0_i32 = arith.constant 0 : i32
    %c0_i32_0 = arith.constant 0 : i32
    %c0_i32_1 = arith.constant 0 : i32
    return %c0_i32, %c0_i32_0 : i32, i32
  }
  func.func @transform_1(%arg0: i32) -> (i32, i32) {
    %c0_i32 = arith.constant 0 : i32
    %c0_i32_0 = arith.constant 0 : i32
    %c0_i32_1 = arith.constant 0 : i32
    return %c0_i32, %c0_i32_0 : i32, i32
  }
  func.func @transform_2(%arg0: i32) -> (i32, i32) {
    %c0_i32 = arith.constant 0 : i32
    %c0_i32_0 = arith.constant 0 : i32
    %c0_i32_1 = arith.constant 0 : i32
    return %c0_i32, %c0_i32_0 : i32, i32
  }
  func.func @transform_3(%arg0: i32) -> (i32, i32) {
    %c0_i32 = arith.constant 0 : i32
    %c0_i32_0 = arith.constant 0 : i32
    %c0_i32_1 = arith.constant 0 : i32
    return %c0_i32, %c0_i32_0 : i32, i32
  }
}

module attributes {stable_mosaic.version = 11 : i64} {
  func.func @kernel(%arg0: i32, %arg1: memref<288x128xbf16, #tpu.memory_space<vmem>>, %arg2: memref<16x288xbf16, #tpu.memory_space<vmem>>, %arg3: memref<16x2xf32, #tpu.memory_space<vmem>>, %arg4: memref<16x128xbf16, #tpu.memory_space<vmem>>) attributes {dimension_semantics = [#tpu.dimension_semantics<arbitrary>], iteration_bounds = array<i64: 1>, scalar_prefetch = 0 : i64, scratch_operands = 0 : i64, tpu.core_type = #tpu.core_type<tc>, window_params = [{pipeline_mode = #tpu.pipeline_mode<synchronous>, transform_indices = @transform_0, window_bounds = array<i64: 288, 128>}, {pipeline_mode = #tpu.pipeline_mode<synchronous>, transform_indices = @transform_1, window_bounds = array<i64: 16, 288>}, {pipeline_mode = #tpu.pipeline_mode<synchronous>, transform_indices = @transform_2, window_bounds = array<i64: 16, 2>}, {pipeline_mode = #tpu.pipeline_mode<synchronous>, transform_indices = @transform_3, window_bounds = array<i64: 16, 128>}]} {
    %c0 = arith.constant 0 : index
    %c0_0 = arith.constant 0 : index
    %0 = vector.load %arg2[%c0, %c0_0] : memref<16x288xbf16, #tpu.memory_space<vmem>>, vector<16x288xbf16>
    %c0_1 = arith.constant 0 : index
    %c0_2 = arith.constant 0 : index
    %1 = vector.load %arg1[%c0_1, %c0_2] : memref<288x128xbf16, #tpu.memory_space<vmem>>, vector<288x128xbf16>
    %cst = arith.constant dense<0.000000e+00> : vector<16x128xf32>
    %2 = tpu.matmul %0, %1, %cst {dimension_numbers = #tpu.dot_dimension_numbers<[1], [0], [0], [1], [0, 0, 1, 1], [], []>} : vector<16x288xbf16>, vector<288x128xbf16>, vector<16x128xf32> -> vector<16x128xf32>
    %cst_3 = arith.constant dense<0.000000e+00> : vector<16xf32>
    %3 = vector.multi_reduction <add>, %2, %cst_3 [1] : vector<16x128xf32> to vector<16xf32>
    %4 = vector.shape_cast %3 : vector<16xf32> to vector<16x1xf32>
    %5 = arith.mulf %2, %2 : vector<16x128xf32>
    %cst_4 = arith.constant dense<0.000000e+00> : vector<16xf32>
    %6 = vector.multi_reduction <add>, %5, %cst_4 [1] : vector<16x128xf32> to vector<16xf32>
    %7 = vector.shape_cast %6 : vector<16xf32> to vector<16x1xf32>
    %cst_5 = arith.constant 7.812500e-03 : f32
    %8 = vector.broadcast %cst_5 : f32 to vector<16x1xf32>
    %9 = arith.mulf %4, %8 : vector<16x1xf32>
    %cst_6 = arith.constant 7.812500e-03 : f32
    %10 = vector.broadcast %cst_6 : f32 to vector<16x1xf32>
    %11 = arith.mulf %7, %10 : vector<16x1xf32>
    %12 = arith.mulf %9, %9 : vector<16x1xf32>
    %13 = arith.subf %11, %12 : vector<16x1xf32>
    %cst_7 = arith.constant 0.000000e+00 : f32
    %14 = vector.broadcast %cst_7 : f32 to vector<16x1xf32>
    %15 = arith.maximumf %13, %14 : vector<16x1xf32>
    %cst_8 = arith.constant 9.99999974E-6 : f32
    %16 = vector.broadcast %cst_8 : f32 to vector<16x1xf32>
    %17 = arith.addf %15, %16 : vector<16x1xf32>
    %18 = math.rsqrt %17 : vector<16x1xf32>
    %c0_9 = arith.constant 0 : index
    %c0_10 = arith.constant 0 : index
    %19 = vector.load %arg3[%c0_9, %c0_10] : memref<16x2xf32, #tpu.memory_space<vmem>>, vector<16x2xf32>
    %20 = vector.broadcast %9 : vector<16x1xf32> to vector<16x128xf32>
    %21 = arith.subf %2, %20 : vector<16x128xf32>
    %22 = vector.extract_strided_slice %19 {offsets = [0, 0], sizes = [16, 1], strides = [1, 1]} : vector<16x2xf32> to vector<16x1xf32>
    %23 = arith.mulf %18, %22 : vector<16x1xf32>
    %24 = vector.broadcast %23 : vector<16x1xf32> to vector<16x128xf32>
    %25 = arith.mulf %21, %24 : vector<16x128xf32>
    %26 = vector.extract_strided_slice %19 {offsets = [0, 1], sizes = [16, 1], strides = [1, 1]} : vector<16x2xf32> to vector<16x1xf32>
    %27 = vector.broadcast %26 : vector<16x1xf32> to vector<16x128xf32>
    %28 = arith.addf %25, %27 : vector<16x128xf32>
    %cst_11 = arith.constant 0.000000e+00 : f32
    %29 = vector.broadcast %cst_11 : f32 to vector<16x128xf32>
    %30 = arith.maximumf %28, %29 : vector<16x128xf32>
    %31 = arith.truncf %30 : vector<16x128xf32> to vector<16x128xbf16>
    %c0_12 = arith.constant 0 : index
    %c0_13 = arith.constant 0 : index
    %32 = vector.load %arg4[%c0_12, %c0_13] : memref<16x128xbf16, #tpu.memory_space<vmem>>, vector<16x128xbf16>
    tpu.vector_store %arg4[%c0_12, %c0_13], %31 {strides = array<i32>} : memref<16x128xbf16, #tpu.memory_space<vmem>>, vector<16x128xbf16>,
    return
  }
  func.func @transform_0(%arg0: i32) -> (i32, i32) {
    %c0_i32 = arith.constant 0 : i32
    %c0_i32_0 = arith.constant 0 : i32
    %c0_i32_1 = arith.constant 0 : i32
    return %c0_i32, %c0_i32_0 : i32, i32
  }
  func.func @transform_1(%arg0: i32) -> (i32, i32) {
    %c0_i32 = arith.constant 0 : i32
    %c0_i32_0 = arith.constant 0 : i32
    %c0_i32_1 = arith.constant 0 : i32
    return %c0_i32, %c0_i32_0 : i32, i32
  }
  func.func @transform_2(%arg0: i32) -> (i32, i32) {
    %c0_i32 = arith.constant 0 : i32
    %c0_i32_0 = arith.constant 0 : i32
    %c0_i32_1 = arith.constant 0 : i32
    return %c0_i32, %c0_i32_0 : i32, i32
  }
  func.func @transform_3(%arg0: i32) -> (i32, i32) {
    %c0_i32 = arith.constant 0 : i32
    %c0_i32_0 = arith.constant 0 : i32
    %c0_i32_1 = arith.constant 0 : i32
    return %c0_i32, %c0_i32_0 : i32, i32
  }
}

module attributes {stable_mosaic.version = 11 : i64} {
  func.func @kernel(%arg0: i32, %arg1: memref<144x512xbf16, #tpu.memory_space<vmem>>, %arg2: memref<144x512xbf16, #tpu.memory_space<vmem>>, %arg3: memref<8x144xbf16, #tpu.memory_space<vmem>>, %arg4: memref<8x144xbf16, #tpu.memory_space<vmem>>, %arg5: memref<8x2xf32, #tpu.memory_space<vmem>>, %arg6: memref<8x512xbf16, #tpu.memory_space<vmem>>) attributes {dimension_semantics = [#tpu.dimension_semantics<arbitrary>], iteration_bounds = array<i64: 1>, scalar_prefetch = 0 : i64, scratch_operands = 0 : i64, tpu.core_type = #tpu.core_type<tc>, window_params = [{pipeline_mode = #tpu.pipeline_mode<synchronous>, transform_indices = @transform_0, window_bounds = array<i64: 144, 512>}, {pipeline_mode = #tpu.pipeline_mode<synchronous>, transform_indices = @transform_1, window_bounds = array<i64: 144, 512>}, {pipeline_mode = #tpu.pipeline_mode<synchronous>, transform_indices = @transform_2, window_bounds = array<i64: 8, 144>}, {pipeline_mode = #tpu.pipeline_mode<synchronous>, transform_indices = @transform_3, window_bounds = array<i64: 8, 144>}, {pipeline_mode = #tpu.pipeline_mode<synchronous>, transform_indices = @transform_4, window_bounds = array<i64: 8, 2>}, {pipeline_mode = #tpu.pipeline_mode<synchronous>, transform_indices = @transform_5, window_bounds = array<i64: 8, 512>}]} {
    %c0 = arith.constant 0 : index
    %c0_0 = arith.constant 0 : index
    %0 = vector.load %arg3[%c0, %c0_0] : memref<8x144xbf16, #tpu.memory_space<vmem>>, vector<8x144xbf16>
    %c0_1 = arith.constant 0 : index
    %c0_2 = arith.constant 0 : index
    %1 = vector.load %arg1[%c0_1, %c0_2] : memref<144x512xbf16, #tpu.memory_space<vmem>>, vector<144x512xbf16>
    %cst = arith.constant dense<0.000000e+00> : vector<8x512xf32>
    %2 = tpu.matmul %0, %1, %cst {dimension_numbers = #tpu.dot_dimension_numbers<[1], [0], [0], [1], [0, 0, 1, 1], [], []>} : vector<8x144xbf16>, vector<144x512xbf16>, vector<8x512xf32> -> vector<8x512xf32>
    %c0_3 = arith.constant 0 : index
    %c0_4 = arith.constant 0 : index
    %3 = vector.load %arg4[%c0_3, %c0_4] : memref<8x144xbf16, #tpu.memory_space<vmem>>, vector<8x144xbf16>
    %c0_5 = arith.constant 0 : index
    %c0_6 = arith.constant 0 : index
    %4 = vector.load %arg2[%c0_5, %c0_6] : memref<144x512xbf16, #tpu.memory_space<vmem>>, vector<144x512xbf16>
    %cst_7 = arith.constant dense<0.000000e+00> : vector<8x512xf32>
    %5 = tpu.matmul %3, %4, %cst_7 {dimension_numbers = #tpu.dot_dimension_numbers<[1], [0], [0], [1], [0, 0, 1, 1], [], []>} : vector<8x144xbf16>, vector<144x512xbf16>, vector<8x512xf32> -> vector<8x512xf32>
    %6 = arith.addf %2, %5 : vector<8x512xf32>
    %cst_8 = arith.constant dense<0.000000e+00> : vector<8xf32>
    %7 = vector.multi_reduction <add>, %6, %cst_8 [1] : vector<8x512xf32> to vector<8xf32>
    %8 = vector.shape_cast %7 : vector<8xf32> to vector<8x1xf32>
    %9 = arith.mulf %6, %6 : vector<8x512xf32>
    %cst_9 = arith.constant dense<0.000000e+00> : vector<8xf32>
    %10 = vector.multi_reduction <add>, %9, %cst_9 [1] : vector<8x512xf32> to vector<8xf32>
    %11 = vector.shape_cast %10 : vector<8xf32> to vector<8x1xf32>
    %cst_10 = arith.constant 0.001953125 : f32
    %12 = vector.broadcast %cst_10 : f32 to vector<8x1xf32>
    %13 = arith.mulf %8, %12 : vector<8x1xf32>
    %cst_11 = arith.constant 0.001953125 : f32
    %14 = vector.broadcast %cst_11 : f32 to vector<8x1xf32>
    %15 = arith.mulf %11, %14 : vector<8x1xf32>
    %16 = arith.mulf %13, %13 : vector<8x1xf32>
    %17 = arith.subf %15, %16 : vector<8x1xf32>
    %cst_12 = arith.constant 0.000000e+00 : f32
    %18 = vector.broadcast %cst_12 : f32 to vector<8x1xf32>
    %19 = arith.maximumf %17, %18 : vector<8x1xf32>
    %cst_13 = arith.constant 9.99999974E-6 : f32
    %20 = vector.broadcast %cst_13 : f32 to vector<8x1xf32>
    %21 = arith.addf %19, %20 : vector<8x1xf32>
    %22 = math.rsqrt %21 : vector<8x1xf32>
    %c0_14 = arith.constant 0 : index
    %c0_15 = arith.constant 0 : index
    %23 = vector.load %arg5[%c0_14, %c0_15] : memref<8x2xf32, #tpu.memory_space<vmem>>, vector<8x2xf32>
    %24 = vector.broadcast %13 : vector<8x1xf32> to vector<8x512xf32>
    %25 = arith.subf %6, %24 : vector<8x512xf32>
    %26 = vector.extract_strided_slice %23 {offsets = [0, 0], sizes = [8, 1], strides = [1, 1]} : vector<8x2xf32> to vector<8x1xf32>
    %27 = arith.mulf %22, %26 : vector<8x1xf32>
    %28 = vector.broadcast %27 : vector<8x1xf32> to vector<8x512xf32>
    %29 = arith.mulf %25, %28 : vector<8x512xf32>
    %30 = vector.extract_strided_slice %23 {offsets = [0, 1], sizes = [8, 1], strides = [1, 1]} : vector<8x2xf32> to vector<8x1xf32>
    %31 = vector.broadcast %30 : vector<8x1xf32> to vector<8x512xf32>
    %32 = arith.addf %29, %31 : vector<8x512xf32>
    %cst_16 = arith.constant 0.000000e+00 : f32
    %33 = vector.broadcast %cst_16 : f32 to vector<8x512xf32>
    %34 = arith.maximumf %32, %33 : vector<8x512xf32>
    %35 = arith.truncf %34 : vector<8x512xf32> to vector<8x512xbf16>
    %c0_17 = arith.constant 0 : index
    %c0_18 = arith.constant 0 : index
    %36 = vector.load %arg6[%c0_17, %c0_18] : memref<8x512xbf16, #tpu.memory_space<vmem>>, vector<8x512xbf16>
    tpu.vector_store %arg6[%c0_17, %c0_18], %35 {strides = array<i32>} : memref<8x512xbf16, #tpu.memory_space<vmem>>, vector<8x512xbf16>,
    return
  }
  func.func @transform_0(%arg0: i32) -> (i32, i32) {
    %c0_i32 = arith.constant 0 : i32
    %c0_i32_0 = arith.constant 0 : i32
    %c0_i32_1 = arith.constant 0 : i32
    return %c0_i32, %c0_i32_0 : i32, i32
  }
  func.func @transform_1(%arg0: i32) -> (i32, i32) {
    %c0_i32 = arith.constant 0 : i32
    %c0_i32_0 = arith.constant 0 : i32
    %c0_i32_1 = arith.constant 0 : i32
    return %c0_i32, %c0_i32_0 : i32, i32
  }
  func.func @transform_2(%arg0: i32) -> (i32, i32) {
    %c0_i32 = arith.constant 0 : i32
    %c0_i32_0 = arith.constant 0 : i32
    %c0_i32_1 = arith.constant 0 : i32
    return %c0_i32, %c0_i32_0 : i32, i32
  }
  func.func @transform_3(%arg0: i32) -> (i32, i32) {
    %c0_i32 = arith.constant 0 : i32
    %c0_i32_0 = arith.constant 0 : i32
    %c0_i32_1 = arith.constant 0 : i32
    return %c0_i32, %c0_i32_0 : i32, i32
  }
  func.func @transform_4(%arg0: i32) -> (i32, i32) {
    %c0_i32 = arith.constant 0 : i32
    %c0_i32_0 = arith.constant 0 : i32
    %c0_i32_1 = arith.constant 0 : i32
    return %c0_i32, %c0_i32_0 : i32, i32
  }
  func.func @transform_5(%arg0: i32) -> (i32, i32) {
    %c0_i32 = arith.constant 0 : i32
    %c0_i32_0 = arith.constant 0 : i32
    %c0_i32_1 = arith.constant 0 : i32
    return %c0_i32, %c0_i32_0 : i32, i32
  }
}

module attributes {stable_mosaic.version = 11 : i64} {
  func.func @kernel(%arg0: i32, %arg1: memref<72x2048xbf16, #tpu.memory_space<vmem>>, %arg2: memref<72x2048xbf16, #tpu.memory_space<vmem>>, %arg3: memref<1x72xbf16, #tpu.memory_space<vmem>>, %arg4: memref<1x72xbf16, #tpu.memory_space<vmem>>, %arg5: memref<1x1xf32, #tpu.memory_space<vmem>>, %arg6: memref<1x2048xf32, #tpu.memory_space<vmem>>) attributes {dimension_semantics = [#tpu.dimension_semantics<arbitrary>], iteration_bounds = array<i64: 1>, scalar_prefetch = 0 : i64, scratch_operands = 0 : i64, tpu.core_type = #tpu.core_type<tc>, window_params = [{pipeline_mode = #tpu.pipeline_mode<synchronous>, transform_indices = @transform_0, window_bounds = array<i64: 72, 2048>}, {pipeline_mode = #tpu.pipeline_mode<synchronous>, transform_indices = @transform_1, window_bounds = array<i64: 72, 2048>}, {pipeline_mode = #tpu.pipeline_mode<synchronous>, transform_indices = @transform_2, window_bounds = array<i64: 1, 72>}, {pipeline_mode = #tpu.pipeline_mode<synchronous>, transform_indices = @transform_3, window_bounds = array<i64: 1, 72>}, {pipeline_mode = #tpu.pipeline_mode<synchronous>, transform_indices = @transform_4, window_bounds = array<i64: 1, 1>}, {pipeline_mode = #tpu.pipeline_mode<synchronous>, transform_indices = @transform_5, window_bounds = array<i64: 1, 2048>}]} {
    %c0 = arith.constant 0 : index
    %c0_0 = arith.constant 0 : index
    %0 = vector.load %arg3[%c0, %c0_0] : memref<1x72xbf16, #tpu.memory_space<vmem>>, vector<1x72xbf16>
    %c0_1 = arith.constant 0 : index
    %c0_2 = arith.constant 0 : index
    %1 = vector.load %arg1[%c0_1, %c0_2] : memref<72x2048xbf16, #tpu.memory_space<vmem>>, vector<72x2048xbf16>
    %cst = arith.constant dense<0.000000e+00> : vector<1x2048xf32>
    %2 = tpu.matmul %0, %1, %cst {dimension_numbers = #tpu.dot_dimension_numbers<[1], [0], [0], [1], [0, 0, 1, 1], [], []>} : vector<1x72xbf16>, vector<72x2048xbf16>, vector<1x2048xf32> -> vector<1x2048xf32>
    %c0_3 = arith.constant 0 : index
    %c0_4 = arith.constant 0 : index
    %3 = vector.load %arg4[%c0_3, %c0_4] : memref<1x72xbf16, #tpu.memory_space<vmem>>, vector<1x72xbf16>
    %c0_5 = arith.constant 0 : index
    %c0_6 = arith.constant 0 : index
    %4 = vector.load %arg2[%c0_5, %c0_6] : memref<72x2048xbf16, #tpu.memory_space<vmem>>, vector<72x2048xbf16>
    %cst_7 = arith.constant dense<0.000000e+00> : vector<1x2048xf32>
    %5 = tpu.matmul %3, %4, %cst_7 {dimension_numbers = #tpu.dot_dimension_numbers<[1], [0], [0], [1], [0, 0, 1, 1], [], []>} : vector<1x72xbf16>, vector<72x2048xbf16>, vector<1x2048xf32> -> vector<1x2048xf32>
    %6 = arith.addf %2, %5 : vector<1x2048xf32>
    %c0_8 = arith.constant 0 : index
    %c0_9 = arith.constant 0 : index
    %7 = vector.load %arg5[%c0_8, %c0_9] : memref<1x1xf32, #tpu.memory_space<vmem>>, vector<1x1xf32>
    %8 = vector.broadcast %7 : vector<1x1xf32> to vector<1x2048xf32>
    %9 = arith.addf %6, %8 : vector<1x2048xf32>
    %10 = math.tanh %9 : vector<1x2048xf32>
    %c0_10 = arith.constant 0 : index
    %c0_11 = arith.constant 0 : index
    %11 = vector.load %arg6[%c0_10, %c0_11] : memref<1x2048xf32, #tpu.memory_space<vmem>>, vector<1x2048xf32>
    tpu.vector_store %arg6[%c0_10, %c0_11], %10 {strides = array<i32>} : memref<1x2048xf32, #tpu.memory_space<vmem>>, vector<1x2048xf32>,
    return
  }
  func.func @transform_0(%arg0: i32) -> (i32, i32) {
    %c0_i32 = arith.constant 0 : i32
    %c0_i32_0 = arith.constant 0 : i32
    %c0_i32_1 = arith.constant 0 : i32
    return %c0_i32, %c0_i32_0 : i32, i32
  }
  func.func @transform_1(%arg0: i32) -> (i32, i32) {
    %c0_i32 = arith.constant 0 : i32
    %c0_i32_0 = arith.constant 0 : i32
    %c0_i32_1 = arith.constant 0 : i32
    return %c0_i32, %c0_i32_0 : i32, i32
  }
  func.func @transform_2(%arg0: i32) -> (i32, i32) {
    %c0_i32 = arith.constant 0 : i32
    %c0_i32_0 = arith.constant 0 : i32
    %c0_i32_1 = arith.constant 0 : i32
    return %c0_i32, %c0_i32_0 : i32, i32
  }
  func.func @transform_3(%arg0: i32) -> (i32, i32) {
    %c0_i32 = arith.constant 0 : i32
    %c0_i32_0 = arith.constant 0 : i32
    %c0_i32_1 = arith.constant 0 : i32
    return %c0_i32, %c0_i32_0 : i32, i32
  }
  func.func @transform_4(%arg0: i32) -> (i32, i32) {
    %c0_i32 = arith.constant 0 : i32
    %c0_i32_0 = arith.constant 0 : i32
    %c0_i32_1 = arith.constant 0 : i32
    return %c0_i32, %c0_i32_0 : i32, i32
  }
  func.func @transform_5(%arg0: i32) -> (i32, i32) {
    %c0_i32 = arith.constant 0 : i32
    %c0_i32_0 = arith.constant 0 : i32
    %c0_i32_1 = arith.constant 0 : i32
    return %c0_i32, %c0_i32_0 : i32, i32
  }
}

</mosaic_0001>

<llo_original>
// kernel: generator_forward.6
$region0: #{generator_forward.6}
  #allocation0 [shape = 'u32[]', space=smem, size = 0x4, offset = 0x4, fixed_abs, tag = 'smem constant byte address 0x4 - core index']
  #allocation1 [shape = 'u32[72,128]{1,0:T(1,128)}', space=vmem, size = 0x9000, scoped, tag = 'internal scratch']
  %s0 = inlined_call_operand.vmem [shape: bf16[16,512], index: 0, kind: input, shape index: {}]
  %s1 = inlined_call_operand.hbm [shape: bf16[8,16], index: 1, kind: input, shape index: {}]
  %s2 = inlined_call_operand.vmem [shape: f32[8,2], index: 2, kind: input, shape index: {}]
  %s3 = inlined_call_operand.vmem [shape: bf16[8,512], index: 3, kind: output, shape index: {}]
  %s4 = sld [smem:[#allocation0]]
  $region26: #{generator_forward.6} parent=0
    _
  %s6 = ssub.s32 1, %s4
  %s7 = scalar_select 0, %s6, %s4
  $region1: #{generator_forward.6} parent=0
    #allocation2 [shape = 'u8[2048]{0}', space=vmem, size = 0x800, scoped, tag = 'input window, operand 1, single buffered']
    #allocation3 [shape = 's32[1]{0}', space=sflag, size = 0x4, scoped, tag = 'scoped memory for generator_forward.6']
    %8 = vsyncpa [#allocation3], 0
    // Predicated region
    $region2: #{generator_forward.6} parent=1 // pred_check
      _
    $region3: #{generator_forward.6} parent=1 // pred_check_branch
      %10 = sbr.rel (0) target = $region5
    $region4: #{generator_forward.6} parent=1 // pred_region
      _
    $region5: #{generator_forward.6} parent=1 // pred_fallthru
      _
    // Predicated region
    $region6: #{generator_forward.6} parent=1 // pred_check
      _
    $region7: #{generator_forward.6} parent=1 // pred_check_branch
      %12 = sbr.rel (0) target = $region9
    $region8: #{generator_forward.6} parent=1 // pred_region
      %14 = vsyncadd [#allocation3], 0
      %s16 = sshll.u32 %s1, 4
      %s17 = int_to_ptr.hbm [resolvable:$true] %s16
      %s18 = sshll.u32 [#allocation2], 4
      %s19 = int_to_ptr.vmem [resolvable:$true] %s18
      %21 = dma.hbm_to_vmem [thread:$0]  %s17, 64, %s19, [#allocation3]
    $region9: #{generator_forward.6} parent=1 // pred_fallthru
      _
    // Predicated region
    $region10: #{generator_forward.6} parent=1 // pred_check
      _
    $region11: #{generator_forward.6} parent=1 // pred_check_branch
      %23 = sbr.rel (0) target = $region13
    $region12: #{generator_forward.6} parent=1 // pred_region
      _
    $region13: #{generator_forward.6} parent=1 // pred_fallthru
      _
    // Predicated region
    $region14: #{generator_forward.6} parent=1 // pred_check
      _
    $region15: #{generator_forward.6} parent=1 // pred_check_branch
      %25 = sbr.rel (0) target = $region17
    $region16: #{generator_forward.6} parent=1 // pred_region
      %27 = dma.done [#allocation3], 64
    $region17: #{generator_forward.6} parent=1 // pred_fallthru
      _
    %v29 = vld [vmem:[#allocation2] sm:$0xf]
    %v30 = vld [vmem:[%s0] sm:$0xff]
    %v31 = vld [vmem:[%s0 + $0x8] sm:$0xff]
    %v32 = vld [vmem:[%s0 + $0x10] sm:$0xff]
    %v33 = vld [vmem:[%s0 + $0x18] sm:$0xff]
    %v38 = vunpack.c.l.b16 %v30
    %v39 = vunpack.c.h.b16 %v30
    %v40 = vunpack.c.l.b16 %v31
    %v41 = vunpack.c.h.b16 %v31
    %v42 = vunpack.c.l.b16 %v32
    %v43 = vunpack.c.h.b16 %v32
    %v44 = vunpack.c.l.b16 %v33
    %v45 = vunpack.c.h.b16 %v33
    %v46 = vpack.c.b16 %v42, %v38
    %v47 = vpack.c.b16 %v43, %v39
    %v48 = vpack.c.b16 %v44, %v40
    %v49 = vpack.c.b16 %v45, %v41
    %vm54 = vcmask 130048
    %v56 = vsel %vm54, %v29, 0
    %58 = vmatpush.bf16.msra.mxu0 0
    %59 = vmatpush.bf16.msra.mxu0 0
    %60 = vmatpush.bf16.msra.mxu0 0
    %61 = vmatpush.bf16.msra.mxu0 0
    %62 = vmatpush.bf16.msra.mxu0 0
    %63 = vmatpush.bf16.msra.mxu0 0
    %64 = vmatpush.bf16.msra.mxu0 0
    %65 = vmatpush.bf16.msra.mxu0 %v46
    %66 = vmatmul.bf16.gmra.mxu0 %v56
    %v67 = vpop.f32.mrf.mxu0
    %v68 = vadd.f32 0.0, %v67
    %v69 = vpop.f32.mrf.mxu0
    %70 = vdwg.mxu0
    %71 = vmatpush.bf16.msra.mxu0 0
    %72 = vmatpush.bf16.msra.mxu0 0
    %73 = vmatpush.bf16.msra.mxu0 0
    %74 = vmatpush.bf16.msra.mxu0 0
    %75 = vmatpush.bf16.msra.mxu0 0
    %76 = vmatpush.bf16.msra.mxu0 0
    %77 = vmatpush.bf16.msra.mxu0 0
    %78 = vmatpush.bf16.msra.mxu0 %v47
    %79 = vmatmul.bf16.gmra.mxu0 %v56
    %v80 = vpop.f32.mrf.mxu0
    %v81 = vadd.f32 0.0, %v80
    %v82 = vpop.f32.mrf.mxu0
    %83 = vdwg.mxu0
    %84 = vmatpush.bf16.msra.mxu0 0
    %85 = vmatpush.bf16.msra.mxu0 0
    %86 = vmatpush.bf16.msra.mxu0 0
    %87 = vmatpush.bf16.msra.mxu0 0
    %88 = vmatpush.bf16.msra.mxu0 0
    %89 = vmatpush.bf16.msra.mxu0 0
    %90 = vmatpush.bf16.msra.mxu0 0
    %91 = vmatpush.bf16.msra.mxu0 %v48
    %92 = vmatmul.bf16.gmra.mxu0 %v56
    %v93 = vpop.f32.mrf.mxu0
    %v94 = vadd.f32 0.0, %v93
    %v95 = vpop.f32.mrf.mxu0
    %96 = vdwg.mxu0
    %97 = vmatpush.bf16.msra.mxu0 0
    %98 = vmatpush.bf16.msra.mxu0 0
    %99 = vmatpush.bf16.msra.mxu0 0
    %100 = vmatpush.bf16.msra.mxu0 0
    %101 = vmatpush.bf16.msra.mxu0 0
    %102 = vmatpush.bf16.msra.mxu0 0
    %103 = vmatpush.bf16.msra.mxu0 0
    %104 = vmatpush.bf16.msra.mxu0 %v49
    %105 = vmatmul.bf16.gmra.mxu0 %v56
    %v106 = vpop.f32.mrf.mxu0
    %v107 = vadd.f32 0.0, %v106
    %v108 = vpop.f32.mrf.mxu0
    %109 = vdwg.mxu0
    %v110 = vadd.f32 %v68, %v81
    %v111 = vadd.f32 %v110, %v94
    %v112 = vadd.f32 %v111, %v107
    %113 = vadd.xlane.f32.xlu0 %v112
    %v114 = vpop.xlane.xlu0 %113
    %v115 = vmul.f32 %v68, %v68
    %v116 = vmul.f32 %v81, %v81
    %v117 = vmul.f32 %v94, %v94
    %v118 = vmul.f32 %v107, %v107
    %v119 = vadd.f32 %v115, %v116
    %v120 = vadd.f32 %v119, %v117
    %v121 = vadd.f32 %v120, %v118
    %122 = vadd.xlane.f32.xlu0 %v121
    %v123 = vpop.xlane.xlu0 %122
    %v124 = vmul.f32 %v114, 0.001953125
    %v125 = vmul.f32 %v123, 0.001953125
    %v126 = vmul.f32 %v124, %v124
    %v127 = vsub.f32 %v125, %v126
    %v128 = vmax.f32 %v127, 0.0
    %v129 = vadd.f32 %v128, 1e-05
    %v130 = vrsqrt.pop %v129
    %v131 = vmul.f32 %v130, %v129
    %v132 = vmul.f32 %v131, %v130
    %v133 = vmul.f32 0.5, %v132
    %v134 = vsub.f32 1.5, %v133
    %v135 = vmul.f32 %v130, %v134
    %vm136 = vweird.f32 %v129
    %vm137 = vweird.f32 %v130
    %vm138 = vmor %vm136, %vm137
    %v139 = vsel %vm138, %v130, %v135
    %v140 = vld [vmem:[%s2] sm:$0xff]
    %v141 = vsub.f32 %v68, %v124
    %v142 = vsub.f32 %v81, %v124
    %v143 = vsub.f32 %v94, %v124
    %v144 = vsub.f32 %v107, %v124
    %v145 = vmul.f32 %v139, %v140
    %147 = vset.pattern.permute.xlu0 0
    %148 = vperm.xlu0 %147, %v145
    %v149 = vpop.permute.xlu0 %148
    %v151 = vmul.f32 %v141, %v149
    %v152 = vmul.f32 %v142, %v149
    %v153 = vmul.f32 %v143, %v149
    %v154 = vmul.f32 %v144, %v149
    %156 = vset.pattern.permute.xlu0 1
    %157 = vperm.xlu0 %156, %v140
    %v158 = vpop.permute.xlu0 %157
    %v160 = vadd.f32 %v151, %v158
    %v161 = vadd.f32 %v152, %v158
    %v162 = vadd.f32 %v153, %v158
    %v163 = vadd.f32 %v154, %v158
    %v164 = vmax.f32 %v160, 0.0
    %v165 = vmax.f32 %v161, 0.0
    %v166 = vmax.f32 %v162, 0.0
    %v167 = vmax.f32 %v163, 0.0
    %v168 = vpack.c.bf16 %v165, %v164
    %v169 = vpack.c.bf16 %v167, %v166
    %170 = vst [vmem:[%s3] sm:$0xff] %v168
    %171 = vst [vmem:[%s3 + $0x8] sm:$0xff] %v169
    // Predicated region
    $region18: #{generator_forward.6} parent=1 // pred_check
      _
    $region19: #{generator_forward.6} parent=1 // pred_check_branch
      %173 = sbr.rel (0) target = $region21
    $region20: #{generator_forward.6} parent=1 // pred_region
      _
    $region21: #{generator_forward.6} parent=1 // pred_fallthru
      _
    // Predicated region
    $region22: #{generator_forward.6} parent=1 // pred_check
      _
    $region23: #{generator_forward.6} parent=1 // pred_check_branch
      %175 = sbr.rel (0) target = $region25
    $region24: #{generator_forward.6} parent=1 // pred_region
      _
    $region25: #{generator_forward.6} parent=1 // pred_fallthru
      _
    %176 = vsyncpa [#allocation3], 1

// kernel: generator_forward.7
$region0: #{generator_forward.7}
  #allocation0 [shape = 'u32[]', space=smem, size = 0x4, offset = 0x4, fixed_abs, tag = 'smem constant byte address 0x4 - core index']
  #allocation1 [shape = 'u32[72,128]{1,0:T(1,128)}', space=vmem, size = 0x9000, scoped, tag = 'internal scratch']
  %s0 = inlined_call_operand.vmem [shape: bf16[128,128], index: 0, kind: input, shape index: {}]
  %s1 = inlined_call_operand.vmem [shape: bf16[16,128], index: 1, kind: input, shape index: {}]
  %s2 = inlined_call_operand.vmem [shape: f32[16,2], index: 2, kind: input, shape index: {}]
  %s3 = inlined_call_operand.vmem [shape: bf16[16,128], index: 3, kind: output, shape index: {}]
  %s4 = sld [smem:[#allocation0]]
  $region22: #{generator_forward.7} parent=0
    _
  %s6 = ssub.s32 1, %s4
  %s7 = scalar_select 0, %s6, %s4
  // Predicated region
  $region2: #{generator_forward.7} parent=0 // pred_check
    _
  $region3: #{generator_forward.7} parent=0 // pred_check_branch
    %9 = sbr.rel (0) target = $region5
  $region4: #{generator_forward.7} parent=0 // pred_region
    _
  $region5: #{generator_forward.7} parent=0 // pred_fallthru
    _
  // Predicated region
  $region6: #{generator_forward.7} parent=0 // pred_check
    _
  $region7: #{generator_forward.7} parent=0 // pred_check_branch
    %11 = sbr.rel (0) target = $region9
  $region8: #{generator_forward.7} parent=0 // pred_region
    _
  $region9: #{generator_forward.7} parent=0 // pred_fallthru
    _
  // Predicated region
  $region10: #{generator_forward.7} parent=0 // pred_check
    _
  $region11: #{generator_forward.7} parent=0 // pred_check_branch
    %13 = sbr.rel (0) target = $region13
  $region12: #{generator_forward.7} parent=0 // pred_region
    _
  $region13: #{generator_forward.7} parent=0 // pred_fallthru
    _
  %v14 = vld [vmem:[%s1] sm:$0xf]
  %v15 = vld [vmem:[%s1 + $0x4] sm:$0xf]
  %v16 = vld [vmem:[%s0] sm:$0xf]
  %v17 = vld [vmem:[%s0 + $0x4] sm:$0xf]
  %v18 = vld [vmem:[%s0 + $0x8] sm:$0xf]
  %v19 = vld [vmem:[%s0 + $0xc] sm:$0xf]
  %v20 = vld [vmem:[%s0 + $0x10] sm:$0xf]
  %v21 = vld [vmem:[%s0 + $0x14] sm:$0xf]
  %v22 = vld [vmem:[%s0 + $0x18] sm:$0xf]
  %v23 = vld [vmem:[%s0 + $0x1c] sm:$0xf]
  %v24 = vld [vmem:[%s0 + $0x20] sm:$0xf]
  %v25 = vld [vmem:[%s0 + $0x24] sm:$0xf]
  %v26 = vld [vmem:[%s0 + $0x28] sm:$0xf]
  %v27 = vld [vmem:[%s0 + $0x2c] sm:$0xf]
  %v28 = vld [vmem:[%s0 + $0x30] sm:$0xf]
  %v29 = vld [vmem:[%s0 + $0x34] sm:$0xf]
  %v30 = vld [vmem:[%s0 + $0x38] sm:$0xf]
  %v31 = vld [vmem:[%s0 + $0x3c] sm:$0xf]
  %v34 = vunpack.c.l.b16 %v14
  %v35 = vunpack.c.l.b16 %v15
  %v36 = vpack.c.b16 %v35, %v34
  %v54 = vunpack.c.l.b16 %v16
  %v55 = vunpack.c.l.b16 %v17
  %v56 = vunpack.c.l.b16 %v18
  %v57 = vunpack.c.l.b16 %v19
  %v58 = vunpack.c.l.b16 %v20
  %v59 = vunpack.c.l.b16 %v21
  %v60 = vunpack.c.l.b16 %v22
  %v61 = vunpack.c.l.b16 %v23
  %v62 = vunpack.c.l.b16 %v24
  %v63 = vunpack.c.l.b16 %v25
  %v64 = vunpack.c.l.b16 %v26
  %v65 = vunpack.c.l.b16 %v27
  %v66 = vunpack.c.l.b16 %v28
  %v67 = vunpack.c.l.b16 %v29
  %v68 = vunpack.c.l.b16 %v30
  %v69 = vunpack.c.l.b16 %v31
  %v70 = vpack.c.b16 %v55, %v54
  %v71 = vpack.c.b16 %v57, %v56
  %v72 = vpack.c.b16 %v59, %v58
  %v73 = vpack.c.b16 %v61, %v60
  %v74 = vpack.c.b16 %v63, %v62
  %v75 = vpack.c.b16 %v65, %v64
  %v76 = vpack.c.b16 %v67, %v66
  %v77 = vpack.c.b16 %v69, %v68
  %86 = vmatpush.bf16.msra.mxu0 %v77
  %87 = vmatpush.bf16.msra.mxu0 %v76
  %88 = vmatpush.bf16.msra.mxu0 %v75
  %89 = vmatpush.bf16.msra.mxu0 %v74
  %90 = vmatpush.bf16.msra.mxu0 %v73
  %91 = vmatpush.bf16.msra.mxu0 %v72
  %92 = vmatpush.bf16.msra.mxu0 %v71
  %93 = vmatpush.bf16.msra.mxu0 %v70
  %94 = vmatmul.bf16.gmra.mxu0 %v36
  %v95 = vpop.f32.mrf.mxu0
  %v96 = vadd.f32 0.0, %v95
  %v97 = vpop.f32.mrf.mxu0
  %v98 = vadd.f32 0.0, %v97
  %99 = vdwg.mxu0
  %100 = vadd.xlane.f32.xlu0 %v96
  %v101 = vpop.xlane.xlu0 %100
  %102 = vadd.xlane.f32.xlu0 %v98
  %v103 = vpop.xlane.xlu0 %102
  %v104 = vmul.f32 %v96, %v96
  %v105 = vmul.f32 %v98, %v98
  %106 = vadd.xlane.f32.xlu0 %v104
  %v107 = vpop.xlane.xlu0 %106
  %108 = vadd.xlane.f32.xlu0 %v105
  %v109 = vpop.xlane.xlu0 %108
  %v110 = vmul.f32 %v101, 0.0078125
  %v111 = vmul.f32 %v103, 0.0078125
  %v112 = vmul.f32 %v107, 0.0078125
  %v113 = vmul.f32 %v109, 0.0078125
  %v114 = vmul.f32 %v110, %v110
  %v115 = vmul.f32 %v111, %v111
  %v116 = vsub.f32 %v112, %v114
  %v117 = vsub.f32 %v113, %v115
  %v118 = vmax.f32 %v116, 0.0
  %v119 = vmax.f32 %v117, 0.0
  %v120 = vadd.f32 %v118, 1e-05
  %v121 = vadd.f32 %v119, 1e-05
  %v122 = vrsqrt.pop %v120
  %v123 = vmul.f32 %v122, %v120
  %v124 = vmul.f32 %v123, %v122
  %v125 = vmul.f32 0.5, %v124
  %v126 = vsub.f32 1.5, %v125
  %v127 = vmul.f32 %v122, %v126
  %vm128 = vweird.f32 %v120
  %vm129 = vweird.f32 %v122
  %vm130 = vmor %vm128, %vm129
  %v131 = vsel %vm130, %v122, %v127
  %v132 = vrsqrt.pop %v121
  %v133 = vmul.f32 %v132, %v121
  %v134 = vmul.f32 %v133, %v132
  %v135 = vmul.f32 0.5, %v134
  %v136 = vsub.f32 1.5, %v135
  %v137 = vmul.f32 %v132, %v136
  %vm138 = vweird.f32 %v121
  %vm139 = vweird.f32 %v132
  %vm140 = vmor %vm138, %vm139
  %v141 = vsel %vm140, %v132, %v137
  %v142 = vld [vmem:[%s2] sm:$0xff]
  %v143 = vld [vmem:[%s2 + $0x8] sm:$0xff]
  %v144 = vsub.f32 %v96, %v110
  %v145 = vsub.f32 %v98, %v111
  %v146 = vmul.f32 %v131, %v142
  %v147 = vmul.f32 %v141, %v143
  %149 = vset.pattern.permute.xlu0 0
  %150 = vperm.xlu0 %149, %v146
  %v151 = vpop.permute.xlu0 %150
  %154 = vset.pattern.permute.xlu0 0
  %155 = vperm.xlu0 %154, %v147
  %v156 = vpop.permute.xlu0 %155
  %v158 = vmul.f32 %v144, %v151
  %v159 = vmul.f32 %v145, %v156
  %161 = vset.pattern.permute.xlu0 1
  %162 = vperm.xlu0 %161, %v142
  %v163 = vpop.permute.xlu0 %162
  %166 = vset.pattern.permute.xlu0 1
  %167 = vperm.xlu0 %166, %v143
  %v168 = vpop.permute.xlu0 %167
  %v170 = vadd.f32 %v158, %v163
  %v171 = vadd.f32 %v159, %v168
  %v172 = vmax.f32 %v170, 0.0
  %v173 = vmax.f32 %v171, 0.0
  %v174 = vpack.c.bf16 %v172, %v172
  %v175 = vpack.c.bf16 %v173, %v173
  %176 = vst [vmem:[%s3] sm:$0xf] %v174
  %177 = vst [vmem:[%s3 + $0x4] sm:$0xf] %v175
  // Predicated region
  $region14: #{generator_forward.7} parent=0 // pred_check
    _
  $region15: #{generator_forward.7} parent=0 // pred_check_branch
    %179 = sbr.rel (0) target = $region17
  $region16: #{generator_forward.7} parent=0 // pred_region
    _
  $region17: #{generator_forward.7} parent=0 // pred_fallthru
    _
  // Predicated region
  $region18: #{generator_forward.7} parent=0 // pred_check
    _
  $region19: #{generator_forward.7} parent=0 // pred_check_branch
    %181 = sbr.rel (0) target = $region21
  $region20: #{generator_forward.7} parent=0 // pred_region
    _
  $region21: #{generator_forward.7} parent=0 // pred_fallthru
    _

// kernel: generator_forward.8
$region0: #{generator_forward.8}
  #allocation0 [shape = 'u32[]', space=smem, size = 0x4, offset = 0x4, fixed_abs, tag = 'smem constant byte address 0x4 - core index']
  #allocation1 [shape = 'u32[72,128]{1,0:T(1,128)}', space=vmem, size = 0x9000, scoped, tag = 'internal scratch']
  %s0 = inlined_call_operand.vmem [shape: bf16[256,32], index: 0, kind: input, shape index: {}]
  %s1 = inlined_call_operand.vmem [shape: bf16[32,256], index: 1, kind: input, shape index: {}]
  %s2 = inlined_call_operand.vmem [shape: f32[32,2], index: 2, kind: input, shape index: {}]
  %s3 = inlined_call_operand.vmem [shape: bf16[32,32], index: 3, kind: output, shape index: {}]
  %s4 = sld [smem:[#allocation0]]
  $region22: #{generator_forward.8} parent=0
    _
  %s6 = ssub.s32 1, %s4
  %s7 = scalar_select 0, %s6, %s4
  // Predicated region
  $region2: #{generator_forward.8} parent=0 // pred_check
    _
  $region3: #{generator_forward.8} parent=0 // pred_check_branch
    %9 = sbr.rel (0) target = $region5
  $region4: #{generator_forward.8} parent=0 // pred_region
    _
  $region5: #{generator_forward.8} parent=0 // pred_fallthru
    _
  // Predicated region
  $region6: #{generator_forward.8} parent=0 // pred_check
    _
  $region7: #{generator_forward.8} parent=0 // pred_check_branch
    %11 = sbr.rel (0) target = $region9
  $region8: #{generator_forward.8} parent=0 // pred_region
    _
  $region9: #{generator_forward.8} parent=0 // pred_fallthru
    _
  // Predicated region
  $region10: #{generator_forward.8} parent=0 // pred_check
    _
  $region11: #{generator_forward.8} parent=0 // pred_check_branch
    %13 = sbr.rel (0) target = $region13
  $region12: #{generator_forward.8} parent=0 // pred_region
    _
  $region13: #{generator_forward.8} parent=0 // pred_fallthru
    _
  %v14 = vld [vmem:[%s1] sm:$0xff]
  %v15 = vld [vmem:[%s1 + $0x8] sm:$0xff]
  %v16 = vld [vmem:[%s1 + $0x10] sm:$0xff]
  %v17 = vld [vmem:[%s1 + $0x18] sm:$0xff]
  %v18 = vld [vmem:[%s0] sm:$0xf]
  %v19 = vld [vmem:[%s0 + $0x4] sm:$0xf]
  %v20 = vld [vmem:[%s0 + $0x8] sm:$0xf]
  %v21 = vld [vmem:[%s0 + $0xc] sm:$0xf]
  %v22 = vld [vmem:[%s0 + $0x10] sm:$0xf]
  %v23 = vld [vmem:[%s0 + $0x14] sm:$0xf]
  %v24 = vld [vmem:[%s0 + $0x18] sm:$0xf]
  %v25 = vld [vmem:[%s0 + $0x1c] sm:$0xf]
  %v26 = vld [vmem:[%s0 + $0x20] sm:$0xf]
  %v27 = vld [vmem:[%s0 + $0x24] sm:$0xf]
  %v28 = vld [vmem:[%s0 + $0x28] sm:$0xf]
  %v29 = vld [vmem:[%s0 + $0x2c] sm:$0xf]
  %v30 = vld [vmem:[%s0 + $0x30] sm:$0xf]
  %v31 = vld [vmem:[%s0 + $0x34] sm:$0xf]
  %v32 = vld [vmem:[%s0 + $0x38] sm:$0xf]
  %v33 = vld [vmem:[%s0 + $0x3c] sm:$0xf]
  %v34 = vld [vmem:[%s0 + $0x40] sm:$0xf]
  %v35 = vld [vmem:[%s0 + $0x44] sm:$0xf]
  %v36 = vld [vmem:[%s0 + $0x48] sm:$0xf]
  %v37 = vld [vmem:[%s0 + $0x4c] sm:$0xf]
  %v38 = vld [vmem:[%s0 + $0x50] sm:$0xf]
  %v39 = vld [vmem:[%s0 + $0x54] sm:$0xf]
  %v40 = vld [vmem:[%s0 + $0x58] sm:$0xf]
  %v41 = vld [vmem:[%s0 + $0x5c] sm:$0xf]
  %v42 = vld [vmem:[%s0 + $0x60] sm:$0xf]
  %v43 = vld [vmem:[%s0 + $0x64] sm:$0xf]
  %v44 = vld [vmem:[%s0 + $0x68] sm:$0xf]
  %v45 = vld [vmem:[%s0 + $0x6c] sm:$0xf]
  %v46 = vld [vmem:[%s0 + $0x70] sm:$0xf]
  %v47 = vld [vmem:[%s0 + $0x74] sm:$0xf]
  %v48 = vld [vmem:[%s0 + $0x78] sm:$0xf]
  %v49 = vld [vmem:[%s0 + $0x7c] sm:$0xf]
  %v54 = vunpack.c.l.b16 %v14
  %v55 = vunpack.c.h.b16 %v14
  %v56 = vunpack.c.l.b16 %v15
  %v57 = vunpack.c.h.b16 %v15
  %v58 = vunpack.c.l.b16 %v16
  %v59 = vunpack.c.h.b16 %v16
  %v60 = vunpack.c.l.b16 %v17
  %v61 = vunpack.c.h.b16 %v17
  %v62 = vpack.c.b16 %v56, %v54
  %v63 = vpack.c.b16 %v57, %v55
  %v64 = vpack.c.b16 %v60, %v58
  %v65 = vpack.c.b16 %v61, %v59
  %v102 = vunpack.c.l.b16 %v18
  %v103 = vunpack.c.l.b16 %v19
  %v104 = vunpack.c.l.b16 %v20
  %v105 = vunpack.c.l.b16 %v21
  %v106 = vunpack.c.l.b16 %v22
  %v107 = vunpack.c.l.b16 %v23
  %v108 = vunpack.c.l.b16 %v24
  %v109 = vunpack.c.l.b16 %v25
  %v110 = vunpack.c.l.b16 %v26
  %v111 = vunpack.c.l.b16 %v27
  %v112 = vunpack.c.l.b16 %v28
  %v113 = vunpack.c.l.b16 %v29
  %v114 = vunpack.c.l.b16 %v30
  %v115 = vunpack.c.l.b16 %v31
  %v116 = vunpack.c.l.b16 %v32
  %v117 = vunpack.c.l.b16 %v33
  %v118 = vunpack.c.l.b16 %v34
  %v119 = vunpack.c.l.b16 %v35
  %v120 = vunpack.c.l.b16 %v36
  %v121 = vunpack.c.l.b16 %v37
  %v122 = vunpack.c.l.b16 %v38
  %v123 = vunpack.c.l.b16 %v39
  %v124 = vunpack.c.l.b16 %v40
  %v125 = vunpack.c.l.b16 %v41
  %v126 = vunpack.c.l.b16 %v42
  %v127 = vunpack.c.l.b16 %v43
  %v128 = vunpack.c.l.b16 %v44
  %v129 = vunpack.c.l.b16 %v45
  %v130 = vunpack.c.l.b16 %v46
  %v131 = vunpack.c.l.b16 %v47
  %v132 = vunpack.c.l.b16 %v48
  %v133 = vunpack.c.l.b16 %v49
  %v134 = vpack.c.b16 %v103, %v102
  %v135 = vpack.c.b16 %v105, %v104
  %v136 = vpack.c.b16 %v107, %v106
  %v137 = vpack.c.b16 %v109, %v108
  %v138 = vpack.c.b16 %v111, %v110
  %v139 = vpack.c.b16 %v113, %v112
  %v140 = vpack.c.b16 %v115, %v114
  %v141 = vpack.c.b16 %v117, %v116
  %v142 = vpack.c.b16 %v119, %v118
  %v143 = vpack.c.b16 %v121, %v120
  %v144 = vpack.c.b16 %v123, %v122
  %v145 = vpack.c.b16 %v125, %v124
  %v146 = vpack.c.b16 %v127, %v126
  %v147 = vpack.c.b16 %v129, %v128
  %v148 = vpack.c.b16 %v131, %v130
  %v149 = vpack.c.b16 %v133, %v132
  %166 = vmatpush.bf16.msra.mxu0 %v141
  %167 = vmatpush.bf16.msra.mxu0 %v140
  %168 = vmatpush.bf16.msra.mxu0 %v139
  %169 = vmatpush.bf16.msra.mxu0 %v138
  %170 = vmatpush.bf16.msra.mxu0 %v137
  %171 = vmatpush.bf16.msra.mxu0 %v136
  %172 = vmatpush.bf16.msra.mxu0 %v135
  %173 = vmatpush.bf16.msra.mxu0 %v134
  %174 = vmatmul.bf16.gmra.mxu0 %v62
  %v175 = vpop.f32.mrf.mxu0
  %v176 = vadd.f32 0.0, %v175
  %v177 = vpop.f32.mrf.mxu0
  %v178 = vadd.f32 0.0, %v177
  %179 = vmatmul.bf16.gmra.mxu0 %v64
  %v180 = vpop.f32.mrf.mxu0
  %v181 = vadd.f32 0.0, %v180
  %v182 = vpop.f32.mrf.mxu0
  %v183 = vadd.f32 0.0, %v182
  %184 = vdwg.mxu0
  %185 = vmatpush.bf16.msra.mxu0 %v149
  %186 = vmatpush.bf16.msra.mxu0 %v148
  %187 = vmatpush.bf16.msra.mxu0 %v147
  %188 = vmatpush.bf16.msra.mxu0 %v146
  %189 = vmatpush.bf16.msra.mxu0 %v145
  %190 = vmatpush.bf16.msra.mxu0 %v144
  %191 = vmatpush.bf16.msra.mxu0 %v143
  %192 = vmatpush.bf16.msra.mxu0 %v142
  %193 = vmatmul.bf16.gmra.mxu0 %v63
  %v194 = vpop.f32.mrf.mxu0
  %v195 = vadd.f32 %v176, %v194
  %v196 = vpop.f32.mrf.mxu0
  %v197 = vadd.f32 %v178, %v196
  %198 = vmatmul.bf16.gmra.mxu0 %v65
  %v199 = vpop.f32.mrf.mxu0
  %v200 = vadd.f32 %v181, %v199
  %v201 = vpop.f32.mrf.mxu0
  %v202 = vadd.f32 %v183, %v201
  %203 = vdwg.mxu0
  %vm204 = vcmask 261120
  %v205 = vsel %vm204, %v195, 0.0
  %206 = vadd.xlane.f32.xlu0 %v205
  %v207 = vpop.xlane.xlu0 %206
  %v208 = vsel %vm204, %v197, 0.0
  %209 = vadd.xlane.f32.xlu0 %v208
  %v210 = vpop.xlane.xlu0 %209
  %v211 = vsel %vm204, %v200, 0.0
  %212 = vadd.xlane.f32.xlu0 %v211
  %v213 = vpop.xlane.xlu0 %212
  %v214 = vsel %vm204, %v202, 0.0
  %215 = vadd.xlane.f32.xlu0 %v214
  %v216 = vpop.xlane.xlu0 %215
  %v217 = vmul.f32 %v195, %v195
  %v218 = vmul.f32 %v197, %v197
  %v219 = vmul.f32 %v200, %v200
  %v220 = vmul.f32 %v202, %v202
  %v221 = vsel %vm204, %v217, 0.0
  %222 = vadd.xlane.f32.xlu0 %v221
  %v223 = vpop.xlane.xlu0 %222
  %v224 = vsel %vm204, %v218, 0.0
  %225 = vadd.xlane.f32.xlu0 %v224
  %v226 = vpop.xlane.xlu0 %225
  %v227 = vsel %vm204, %v219, 0.0
  %228 = vadd.xlane.f32.xlu0 %v227
  %v229 = vpop.xlane.xlu0 %228
  %v230 = vsel %vm204, %v220, 0.0
  %231 = vadd.xlane.f32.xlu0 %v230
  %v232 = vpop.xlane.xlu0 %231
  %v233 = vmul.f32 %v207, 0.03125
  %v234 = vmul.f32 %v210, 0.03125
  %v235 = vmul.f32 %v213, 0.03125
  %v236 = vmul.f32 %v216, 0.03125
  %v237 = vmul.f32 %v223, 0.03125
  %v238 = vmul.f32 %v226, 0.03125
  %v239 = vmul.f32 %v229, 0.03125
  %v240 = vmul.f32 %v232, 0.03125
  %v241 = vmul.f32 %v233, %v233
  %v242 = vmul.f32 %v234, %v234
  %v243 = vmul.f32 %v235, %v235
  %v244 = vmul.f32 %v236, %v236
  %v245 = vsub.f32 %v237, %v241
  %v246 = vsub.f32 %v238, %v242
  %v247 = vsub.f32 %v239, %v243
  %v248 = vsub.f32 %v240, %v244
  %v249 = vmax.f32 %v245, 0.0
  %v250 = vmax.f32 %v246, 0.0
  %v251 = vmax.f32 %v247, 0.0
  %v252 = vmax.f32 %v248, 0.0
  %v253 = vadd.f32 %v249, 1e-05
  %v254 = vadd.f32 %v250, 1e-05
  %v255 = vadd.f32 %v251, 1e-05
  %v256 = vadd.f32 %v252, 1e-05
  %v257 = vrsqrt.pop %v253
  %v258 = vmul.f32 %v257, %v253
  %v259 = vmul.f32 %v258, %v257
  %v260 = vmul.f32 0.5, %v259
  %v261 = vsub.f32 1.5, %v260
  %v262 = vmul.f32 %v257, %v261
  %vm263 = vweird.f32 %v253
  %vm264 = vweird.f32 %v257
  %vm265 = vmor %vm263, %vm264
  %v266 = vsel %vm265, %v257, %v262
  %v267 = vrsqrt.pop %v254
  %v268 = vmul.f32 %v267, %v254
  %v269 = vmul.f32 %v268, %v267
  %v270 = vmul.f32 0.5, %v269
  %v271 = vsub.f32 1.5, %v270
  %v272 = vmul.f32 %v267, %v271
  %vm273 = vweird.f32 %v254
  %vm274 = vweird.f32 %v267
  %vm275 = vmor %vm273, %vm274
  %v276 = vsel %vm275, %v267, %v272
  %v277 = vrsqrt.pop %v255
  %v278 = vmul.f32 %v277, %v255
  %v279 = vmul.f32 %v278, %v277
  %v280 = vmul.f32 0.5, %v279
  %v281 = vsub.f32 1.5, %v280
  %v282 = vmul.f32 %v277, %v281
  %vm283 = vweird.f32 %v255
  %vm284 = vweird.f32 %v277
  %vm285 = vmor %vm283, %vm284
  %v286 = vsel %vm285, %v277, %v282
  %v287 = vrsqrt.pop %v256
  %v288 = vmul.f32 %v287, %v256
  %v289 = vmul.f32 %v288, %v287
  %v290 = vmul.f32 0.5, %v289
  %v291 = vsub.f32 1.5, %v290
  %v292 = vmul.f32 %v287, %v291
  %vm293 = vweird.f32 %v256
  %vm294 = vweird.f32 %v287
  %vm295 = vmor %vm293, %vm294
  %v296 = vsel %vm295, %v287, %v292
  %v297 = vld [vmem:[%s2] sm:$0xff]
  %v298 = vld [vmem:[%s2 + $0x8] sm:$0xff]
  %v299 = vld [vmem:[%s2 + $0x10] sm:$0xff]
  %v300 = vld [vmem:[%s2 + $0x18] sm:$0xff]
  %v301 = vsub.f32 %v195, %v233
  %v302 = vsub.f32 %v197, %v234
  %v303 = vsub.f32 %v200, %v235
  %v304 = vsub.f32 %v202, %v236
  %v305 = vmul.f32 %v266, %v297
  %v306 = vmul.f32 %v276, %v298
  %v307 = vmul.f32 %v286, %v299
  %v308 = vmul.f32 %v296, %v300
  %310 = vset.pattern.permute.xlu0 0
  %311 = vperm.xlu0 %310, %v305
  %v312 = vpop.permute.xlu0 %311
  %315 = vset.pattern.permute.xlu0 0
  %316 = vperm.xlu0 %315, %v306
  %v317 = vpop.permute.xlu0 %316
  %320 = vset.pattern.permute.xlu0 0
  %321 = vperm.xlu0 %320, %v307
  %v322 = vpop.permute.xlu0 %321
  %325 = vset.pattern.permute.xlu0 0
  %326 = vperm.xlu0 %325, %v308
  %v327 = vpop.permute.xlu0 %326
  %v329 = vmul.f32 %v301, %v312
  %v330 = vmul.f32 %v302, %v317
  %v331 = vmul.f32 %v303, %v322
  %v332 = vmul.f32 %v304, %v327
  %334 = vset.pattern.permute.xlu0 1
  %335 = vperm.xlu0 %334, %v297
  %v336 = vpop.permute.xlu0 %335
  %339 = vset.pattern.permute.xlu0 1
  %340 = vperm.xlu0 %339, %v298
  %v341 = vpop.permute.xlu0 %340
  %344 = vset.pattern.permute.xlu0 1
  %345 = vperm.xlu0 %344, %v299
  %v346 = vpop.permute.xlu0 %345
  %349 = vset.pattern.permute.xlu0 1
  %350 = vperm.xlu0 %349, %v300
  %v351 = vpop.permute.xlu0 %350
  %v353 = vadd.f32 %v329, %v336
  %v354 = vadd.f32 %v330, %v341
  %v355 = vadd.f32 %v331, %v346
  %v356 = vadd.f32 %v332, %v351
  %v357 = vmax.f32 %v353, 0.0
  %v358 = vmax.f32 %v354, 0.0
  %v359 = vmax.f32 %v355, 0.0
  %v360 = vmax.f32 %v356, 0.0
  %v361 = vpack.c.bf16 %v357, %v357
  %v362 = vpack.c.bf16 %v358, %v358
  %v363 = vpack.c.bf16 %v359, %v359
  %v364 = vpack.c.bf16 %v360, %v360
  %vm365 = vcmask 257024
  %366 = vst.msk [vmem:[%s3] sm:$0xf] %vm365, %v361
  %367 = vst.msk [vmem:[%s3 + $0x4] sm:$0xf] %vm365, %v362
  %368 = vst.msk [vmem:[%s3 + $0x8] sm:$0xf] %vm365, %v363
  %369 = vst.msk [vmem:[%s3 + $0xc] sm:$0xf] %vm365, %v364
  // Predicated region
  $region14: #{generator_forward.8} parent=0 // pred_check
    _
  $region15: #{generator_forward.8} parent=0 // pred_check_branch
    %371 = sbr.rel (0) target = $region17
  $region16: #{generator_forward.8} parent=0 // pred_region
    _
  $region17: #{generator_forward.8} parent=0 // pred_fallthru
    _
  // Predicated region
  $region18: #{generator_forward.8} parent=0 // pred_check
    _
  $region19: #{generator_forward.8} parent=0 // pred_check_branch
    %373 = sbr.rel (0) target = $region21
  $region20: #{generator_forward.8} parent=0 // pred_region
    _
  $region21: #{generator_forward.8} parent=0 // pred_fallthru
    _

// kernel: generator_forward.9
$region0: #{generator_forward.9}
  #allocation0 [shape = 'u32[]', space=smem, size = 0x4, offset = 0x4, fixed_abs, tag = 'smem constant byte address 0x4 - core index']
  #allocation1 [shape = 'u32[72,128]{1,0:T(1,128)}', space=vmem, size = 0x9000, scoped, tag = 'internal scratch']
  %s0 = inlined_call_operand.vmem [shape: bf16[288,128], index: 0, kind: input, shape index: {}]
  %s1 = inlined_call_operand.vmem [shape: bf16[16,288], index: 1, kind: input, shape index: {}]
  %s2 = inlined_call_operand.vmem [shape: f32[16,2], index: 2, kind: input, shape index: {}]
  %s3 = inlined_call_operand.vmem [shape: bf16[16,128], index: 3, kind: output, shape index: {}]
  %s4 = sld [smem:[#allocation0]]
  $region22: #{generator_forward.9} parent=0
    _
  %s6 = ssub.s32 1, %s4
  %s7 = scalar_select 0, %s6, %s4
  // Predicated region
  $region2: #{generator_forward.9} parent=0 // pred_check
    _
  $region3: #{generator_forward.9} parent=0 // pred_check_branch
    %9 = sbr.rel (0) target = $region5
  $region4: #{generator_forward.9} parent=0 // pred_region
    _
  $region5: #{generator_forward.9} parent=0 // pred_fallthru
    _
  // Predicated region
  $region6: #{generator_forward.9} parent=0 // pred_check
    _
  $region7: #{generator_forward.9} parent=0 // pred_check_branch
    %11 = sbr.rel (0) target = $region9
  $region8: #{generator_forward.9} parent=0 // pred_region
    _
  $region9: #{generator_forward.9} parent=0 // pred_fallthru
    _
  // Predicated region
  $region10: #{generator_forward.9} parent=0 // pred_check
    _
  $region11: #{generator_forward.9} parent=0 // pred_check_branch
    %13 = sbr.rel (0) target = $region13
  $region12: #{generator_forward.9} parent=0 // pred_region
    _
  $region13: #{generator_forward.9} parent=0 // pred_fallthru
    _
  %v15 = vld [vmem:[%s1] sm:$0xff]
  %v16 = vld [vmem:[%s1 + $0x8] sm:$0xf]
  %v17 = vld [vmem:[%s1 + $0xc] sm:$0xff]
  %v18 = vld [vmem:[%s1 + $0x14] sm:$0xf]
  %v19 = vld [vmem:[%s0] sm:$0xf]
  %v20 = vld [vmem:[%s0 + $0x4] sm:$0xf]
  %v21 = vld [vmem:[%s0 + $0x8] sm:$0xf]
  %v22 = vld [vmem:[%s0 + $0xc] sm:$0xf]
  %v23 = vld [vmem:[%s0 + $0x10] sm:$0xf]
  %v24 = vld [vmem:[%s0 + $0x14] sm:$0xf]
  %v25 = vld [vmem:[%s0 + $0x18] sm:$0xf]
  %v26 = vld [vmem:[%s0 + $0x1c] sm:$0xf]
  %v27 = vld [vmem:[%s0 + $0x20] sm:$0xf]
  %v28 = vld [vmem:[%s0 + $0x24] sm:$0xf]
  %v29 = vld [vmem:[%s0 + $0x28] sm:$0xf]
  %v30 = vld [vmem:[%s0 + $0x2c] sm:$0xf]
  %v31 = vld [vmem:[%s0 + $0x30] sm:$0xf]
  %v32 = vld [vmem:[%s0 + $0x34] sm:$0xf]
  %v33 = vld [vmem:[%s0 + $0x38] sm:$0xf]
  %v34 = vld [vmem:[%s0 + $0x3c] sm:$0xf]
  %v35 = vld [vmem:[%s0 + $0x40] sm:$0xf]
  %v36 = vld [vmem:[%s0 + $0x44] sm:$0xf]
  %v37 = vld [vmem:[%s0 + $0x48] sm:$0xf]
  %v38 = vld [vmem:[%s0 + $0x4c] sm:$0xf]
  %v39 = vld [vmem:[%s0 + $0x50] sm:$0xf]
  %v40 = vld [vmem:[%s0 + $0x54] sm:$0xf]
  %v41 = vld [vmem:[%s0 + $0x58] sm:$0xf]
  %v42 = vld [vmem:[%s0 + $0x5c] sm:$0xf]
  %v43 = vld [vmem:[%s0 + $0x60] sm:$0xf]
  %v44 = vld [vmem:[%s0 + $0x64] sm:$0xf]
  %v45 = vld [vmem:[%s0 + $0x68] sm:$0xf]
  %v46 = vld [vmem:[%s0 + $0x6c] sm:$0xf]
  %v47 = vld [vmem:[%s0 + $0x70] sm:$0xf]
  %v48 = vld [vmem:[%s0 + $0x74] sm:$0xf]
  %v49 = vld [vmem:[%s0 + $0x78] sm:$0xf]
  %v50 = vld [vmem:[%s0 + $0x7c] sm:$0xf]
  %v51 = vld [vmem:[%s0 + $0x80] sm:$0xf]
  %v52 = vld [vmem:[%s0 + $0x84] sm:$0xf]
  %v53 = vld [vmem:[%s0 + $0x88] sm:$0xf]
  %v54 = vld [vmem:[%s0 + $0x8c] sm:$0xf]
  %v59 = vunpack.c.l.b16 %v15
  %v60 = vunpack.c.h.b16 %v15
  %v61 = vunpack.c.l.b16 %v16
  %v62 = vunpack.c.l.b16 %v17
  %v63 = vunpack.c.h.b16 %v17
  %v64 = vunpack.c.l.b16 %v18
  %v65 = vpack.c.b16 %v62, %v59
  %v66 = vpack.c.b16 %v63, %v60
  %v67 = vpack.c.b16 %v64, %v61
  %v106 = vunpack.c.l.b16 %v19
  %v107 = vunpack.c.l.b16 %v20
  %v108 = vunpack.c.l.b16 %v21
  %v109 = vunpack.c.l.b16 %v22
  %v110 = vunpack.c.l.b16 %v23
  %v111 = vunpack.c.l.b16 %v24
  %v112 = vunpack.c.l.b16 %v25
  %v113 = vunpack.c.l.b16 %v26
  %v114 = vunpack.c.l.b16 %v27
  %v115 = vunpack.c.l.b16 %v28
  %v116 = vunpack.c.l.b16 %v29
  %v117 = vunpack.c.l.b16 %v30
  %v118 = vunpack.c.l.b16 %v31
  %v119 = vunpack.c.l.b16 %v32
  %v120 = vunpack.c.l.b16 %v33
  %v121 = vunpack.c.l.b16 %v34
  %v122 = vunpack.c.l.b16 %v35
  %v123 = vunpack.c.l.b16 %v36
  %v124 = vunpack.c.l.b16 %v37
  %v125 = vunpack.c.l.b16 %v38
  %v126 = vunpack.c.l.b16 %v39
  %v127 = vunpack.c.l.b16 %v40
  %v128 = vunpack.c.l.b16 %v41
  %v129 = vunpack.c.l.b16 %v42
  %v130 = vunpack.c.l.b16 %v43
  %v131 = vunpack.c.l.b16 %v44
  %v132 = vunpack.c.l.b16 %v45
  %v133 = vunpack.c.l.b16 %v46
  %v134 = vunpack.c.l.b16 %v47
  %v135 = vunpack.c.l.b16 %v48
  %v136 = vunpack.c.l.b16 %v49
  %v137 = vunpack.c.l.b16 %v50
  %v138 = vunpack.c.l.b16 %v51
  %v139 = vunpack.c.l.b16 %v52
  %v140 = vunpack.c.l.b16 %v53
  %v141 = vunpack.c.l.b16 %v54
  %v142 = vpack.c.b16 %v107, %v106
  %v143 = vpack.c.b16 %v109, %v108
  %v144 = vpack.c.b16 %v111, %v110
  %v145 = vpack.c.b16 %v113, %v112
  %v146 = vpack.c.b16 %v115, %v114
  %v147 = vpack.c.b16 %v117, %v116
  %v148 = vpack.c.b16 %v119, %v118
  %v149 = vpack.c.b16 %v121, %v120
  %v150 = vpack.c.b16 %v123, %v122
  %v151 = vpack.c.b16 %v125, %v124
  %v152 = vpack.c.b16 %v127, %v126
  %v153 = vpack.c.b16 %v129, %v128
  %v154 = vpack.c.b16 %v131, %v130
  %v155 = vpack.c.b16 %v133, %v132
  %v156 = vpack.c.b16 %v135, %v134
  %v157 = vpack.c.b16 %v137, %v136
  %v158 = vpack.c.b16 %v139, %v138
  %v159 = vpack.c.b16 %v141, %v140
  %vm178 = vcmask 261120
  %v180 = vsel %vm178, %v67, 0
  %182 = vmatpush.bf16.msra.mxu0 %v149
  %183 = vmatpush.bf16.msra.mxu0 %v148
  %184 = vmatpush.bf16.msra.mxu0 %v147
  %185 = vmatpush.bf16.msra.mxu0 %v146
  %186 = vmatpush.bf16.msra.mxu0 %v145
  %187 = vmatpush.bf16.msra.mxu0 %v144
  %188 = vmatpush.bf16.msra.mxu0 %v143
  %189 = vmatpush.bf16.msra.mxu0 %v142
  %190 = vmatmul.bf16.gmra.mxu0 %v65
  %v191 = vpop.f32.mrf.mxu0
  %v192 = vadd.f32 0.0, %v191
  %v193 = vpop.f32.mrf.mxu0
  %v194 = vadd.f32 0.0, %v193
  %195 = vdwg.mxu0
  %196 = vmatpush.bf16.msra.mxu0 %v157
  %197 = vmatpush.bf16.msra.mxu0 %v156
  %198 = vmatpush.bf16.msra.mxu0 %v155
  %199 = vmatpush.bf16.msra.mxu0 %v154
  %200 = vmatpush.bf16.msra.mxu0 %v153
  %201 = vmatpush.bf16.msra.mxu0 %v152
  %202 = vmatpush.bf16.msra.mxu0 %v151
  %203 = vmatpush.bf16.msra.mxu0 %v150
  %204 = vmatmul.bf16.gmra.mxu0 %v66
  %v205 = vpop.f32.mrf.mxu0
  %v206 = vadd.f32 %v192, %v205
  %v207 = vpop.f32.mrf.mxu0
  %v208 = vadd.f32 %v194, %v207
  %209 = vdwg.mxu0
  %210 = vmatpush.bf16.msra.mxu0 0
  %211 = vmatpush.bf16.msra.mxu0 0
  %212 = vmatpush.bf16.msra.mxu0 0
  %213 = vmatpush.bf16.msra.mxu0 0
  %214 = vmatpush.bf16.msra.mxu0 0
  %215 = vmatpush.bf16.msra.mxu0 0
  %216 = vmatpush.bf16.msra.mxu0 %v159
  %217 = vmatpush.bf16.msra.mxu0 %v158
  %218 = vmatmul.bf16.gmra.mxu0 %v180
  %v219 = vpop.f32.mrf.mxu0
  %v220 = vadd.f32 %v206, %v219
  %v221 = vpop.f32.mrf.mxu0
  %v222 = vadd.f32 %v208, %v221
  %223 = vdwg.mxu0
  %224 = vadd.xlane.f32.xlu0 %v220
  %v225 = vpop.xlane.xlu0 %224
  %226 = vadd.xlane.f32.xlu0 %v222
  %v227 = vpop.xlane.xlu0 %226
  %v228 = vmul.f32 %v220, %v220
  %v229 = vmul.f32 %v222, %v222
  %230 = vadd.xlane.f32.xlu0 %v228
  %v231 = vpop.xlane.xlu0 %230
  %232 = vadd.xlane.f32.xlu0 %v229
  %v233 = vpop.xlane.xlu0 %232
  %v234 = vmul.f32 %v225, 0.0078125
  %v235 = vmul.f32 %v227, 0.0078125
  %v236 = vmul.f32 %v231, 0.0078125
  %v237 = vmul.f32 %v233, 0.0078125
  %v238 = vmul.f32 %v234, %v234
  %v239 = vmul.f32 %v235, %v235
  %v240 = vsub.f32 %v236, %v238
  %v241 = vsub.f32 %v237, %v239
  %v242 = vmax.f32 %v240, 0.0
  %v243 = vmax.f32 %v241, 0.0
  %v244 = vadd.f32 %v242, 1e-05
  %v245 = vadd.f32 %v243, 1e-05
  %v246 = vrsqrt.pop %v244
  %v247 = vmul.f32 %v246, %v244
  %v248 = vmul.f32 %v247, %v246
  %v249 = vmul.f32 0.5, %v248
  %v250 = vsub.f32 1.5, %v249
  %v251 = vmul.f32 %v246, %v250
  %vm252 = vweird.f32 %v244
  %vm253 = vweird.f32 %v246
  %vm254 = vmor %vm252, %vm253
  %v255 = vsel %vm254, %v246, %v251
  %v256 = vrsqrt.pop %v245
  %v257 = vmul.f32 %v256, %v245
  %v258 = vmul.f32 %v257, %v256
  %v259 = vmul.f32 0.5, %v258
  %v260 = vsub.f32 1.5, %v259
  %v261 = vmul.f32 %v256, %v260
  %vm262 = vweird.f32 %v245
  %vm263 = vweird.f32 %v256
  %vm264 = vmor %vm262, %vm263
  %v265 = vsel %vm264, %v256, %v261
  %v266 = vld [vmem:[%s2] sm:$0xff]
  %v267 = vld [vmem:[%s2 + $0x8] sm:$0xff]
  %v268 = vsub.f32 %v220, %v234
  %v269 = vsub.f32 %v222, %v235
  %v270 = vmul.f32 %v255, %v266
  %v271 = vmul.f32 %v265, %v267
  %273 = vset.pattern.permute.xlu0 0
  %274 = vperm.xlu0 %273, %v270
  %v275 = vpop.permute.xlu0 %274
  %278 = vset.pattern.permute.xlu0 0
  %279 = vperm.xlu0 %278, %v271
  %v280 = vpop.permute.xlu0 %279
  %v282 = vmul.f32 %v268, %v275
  %v283 = vmul.f32 %v269, %v280
  %285 = vset.pattern.permute.xlu0 1
  %286 = vperm.xlu0 %285, %v266
  %v287 = vpop.permute.xlu0 %286
  %290 = vset.pattern.permute.xlu0 1
  %291 = vperm.xlu0 %290, %v267
  %v292 = vpop.permute.xlu0 %291
  %v294 = vadd.f32 %v282, %v287
  %v295 = vadd.f32 %v283, %v292
  %v296 = vmax.f32 %v294, 0.0
  %v297 = vmax.f32 %v295, 0.0
  %v298 = vpack.c.bf16 %v296, %v296
  %v299 = vpack.c.bf16 %v297, %v297
  %300 = vst [vmem:[%s3] sm:$0xf] %v298
  %301 = vst [vmem:[%s3 + $0x4] sm:$0xf] %v299
  // Predicated region
  $region14: #{generator_forward.9} parent=0 // pred_check
    _
  $region15: #{generator_forward.9} parent=0 // pred_check_branch
    %303 = sbr.rel (0) target = $region17
  $region16: #{generator_forward.9} parent=0 // pred_region
    _
  $region17: #{generator_forward.9} parent=0 // pred_fallthru
    _
  // Predicated region
  $region18: #{generator_forward.9} parent=0 // pred_check
    _
  $region19: #{generator_forward.9} parent=0 // pred_check_branch
    %305 = sbr.rel (0) target = $region21
  $region20: #{generator_forward.9} parent=0 // pred_region
    _
  $region21: #{generator_forward.9} parent=0 // pred_fallthru
    _

// kernel: generator_forward.10
$region0: #{generator_forward.10}
  #allocation0 [shape = 'u32[]', space=smem, size = 0x4, offset = 0x4, fixed_abs, tag = 'smem constant byte address 0x4 - core index']
  #allocation1 [shape = 'u32[72,128]{1,0:T(1,128)}', space=vmem, size = 0x9000, scoped, tag = 'internal scratch']
  %s0 = inlined_call_operand.vmem [shape: bf16[144,512], index: 0, kind: input, shape index: {}]
  %s1 = inlined_call_operand.vmem [shape: bf16[144,512], index: 1, kind: input, shape index: {}]
  %s2 = inlined_call_operand.vmem [shape: bf16[8,144], index: 2, kind: input, shape index: {}]
  %s3 = inlined_call_operand.vmem [shape: bf16[8,144], index: 3, kind: input, shape index: {}]
  %s4 = inlined_call_operand.vmem [shape: f32[8,2], index: 4, kind: input, shape index: {}]
  %s5 = inlined_call_operand.vmem [shape: bf16[8,512], index: 5, kind: output, shape index: {}]
  %s6 = sld [smem:[#allocation0]]
  $region30: #{generator_forward.10} parent=0
    _
  %s8 = ssub.s32 1, %s6
  %s9 = scalar_select 0, %s8, %s6
  // Predicated region
  $region2: #{generator_forward.10} parent=0 // pred_check
    _
  $region3: #{generator_forward.10} parent=0 // pred_check_branch
    %11 = sbr.rel (0) target = $region5
  $region4: #{generator_forward.10} parent=0 // pred_region
    _
  $region5: #{generator_forward.10} parent=0 // pred_fallthru
    _
  // Predicated region
  $region6: #{generator_forward.10} parent=0 // pred_check
    _
  $region7: #{generator_forward.10} parent=0 // pred_check_branch
    %13 = sbr.rel (0) target = $region9
  $region8: #{generator_forward.10} parent=0 // pred_region
    _
  $region9: #{generator_forward.10} parent=0 // pred_fallthru
    _
  // Predicated region
  $region10: #{generator_forward.10} parent=0 // pred_check
    _
  $region11: #{generator_forward.10} parent=0 // pred_check_branch
    %15 = sbr.rel (0) target = $region13
  $region12: #{generator_forward.10} parent=0 // pred_region
    _
  $region13: #{generator_forward.10} parent=0 // pred_fallthru
    _
  // Predicated region
  $region14: #{generator_forward.10} parent=0 // pred_check
    _
  $region15: #{generator_forward.10} parent=0 // pred_check_branch
    %17 = sbr.rel (0) target = $region17
  $region16: #{generator_forward.10} parent=0 // pred_region
    _
  $region17: #{generator_forward.10} parent=0 // pred_fallthru
    _
  // Predicated region
  $region18: #{generator_forward.10} parent=0 // pred_check
    _
  $region19: #{generator_forward.10} parent=0 // pred_check_branch
    %19 = sbr.rel (0) target = $region21
  $region20: #{generator_forward.10} parent=0 // pred_region
    _
  $region21: #{generator_forward.10} parent=0 // pred_fallthru
    _
  %v21 = vld [vmem:[%s2] sm:$0xff]
  %v22 = vld [vmem:[%s0] sm:$0xff]
  %v23 = vld [vmem:[%s0 + $0x8] sm:$0xff]
  %v24 = vld [vmem:[%s0 + $0x10] sm:$0xff]
  %v25 = vld [vmem:[%s0 + $0x18] sm:$0xff]
  %v26 = vld [vmem:[%s0 + $0x20] sm:$0xff]
  %v27 = vld [vmem:[%s0 + $0x28] sm:$0xff]
  %v28 = vld [vmem:[%s0 + $0x30] sm:$0xff]
  %v29 = vld [vmem:[%s0 + $0x38] sm:$0xff]
  %v30 = vld [vmem:[%s0 + $0x40] sm:$0xff]
  %v31 = vld [vmem:[%s0 + $0x48] sm:$0xff]
  %v32 = vld [vmem:[%s0 + $0x50] sm:$0xff]
  %v33 = vld [vmem:[%s0 + $0x58] sm:$0xff]
  %v34 = vld [vmem:[%s0 + $0x60] sm:$0xff]
  %v35 = vld [vmem:[%s0 + $0x68] sm:$0xff]
  %v36 = vld [vmem:[%s0 + $0x70] sm:$0xff]
  %v37 = vld [vmem:[%s0 + $0x78] sm:$0xff]
  %v38 = vld [vmem:[%s0 + $0x80] sm:$0xff]
  %v39 = vld [vmem:[%s0 + $0x88] sm:$0xff]
  %v40 = vld [vmem:[%s0 + $0x90] sm:$0xff]
  %v41 = vld [vmem:[%s0 + $0x98] sm:$0xff]
  %v42 = vld [vmem:[%s0 + $0xa0] sm:$0xff]
  %v43 = vld [vmem:[%s0 + $0xa8] sm:$0xff]
  %v44 = vld [vmem:[%s0 + $0xb0] sm:$0xff]
  %v45 = vld [vmem:[%s0 + $0xb8] sm:$0xff]
  %v46 = vld [vmem:[%s0 + $0xc0] sm:$0xff]
  %v47 = vld [vmem:[%s0 + $0xc8] sm:$0xff]
  %v48 = vld [vmem:[%s0 + $0xd0] sm:$0xff]
  %v49 = vld [vmem:[%s0 + $0xd8] sm:$0xff]
  %v50 = vld [vmem:[%s0 + $0xe0] sm:$0xff]
  %v51 = vld [vmem:[%s0 + $0xe8] sm:$0xff]
  %v52 = vld [vmem:[%s0 + $0xf0] sm:$0xff]
  %v53 = vld [vmem:[%s0 + $0xf8] sm:$0xff]
  %v54 = vld [vmem:[%s0 + $0x100] sm:$0xff]
  %v55 = vld [vmem:[%s0 + $0x108] sm:$0xff]
  %v56 = vld [vmem:[%s0 + $0x110] sm:$0xff]
  %v57 = vld [vmem:[%s0 + $0x118] sm:$0xff]
  %v58 = vld [vmem:[%s3] sm:$0xff]
  %v59 = vld [vmem:[%s1] sm:$0xff]
  %v60 = vld [vmem:[%s1 + $0x8] sm:$0xff]
  %v61 = vld [vmem:[%s1 + $0x10] sm:$0xff]
  %v62 = vld [vmem:[%s1 + $0x18] sm:$0xff]
  %v63 = vld [vmem:[%s1 + $0x20] sm:$0xff]
  %v64 = vld [vmem:[%s1 + $0x28] sm:$0xff]
  %v65 = vld [vmem:[%s1 + $0x30] sm:$0xff]
  %v66 = vld [vmem:[%s1 + $0x38] sm:$0xff]
  %v67 = vld [vmem:[%s1 + $0x40] sm:$0xff]
  %v68 = vld [vmem:[%s1 + $0x48] sm:$0xff]
  %v69 = vld [vmem:[%s1 + $0x50] sm:$0xff]
  %v70 = vld [vmem:[%s1 + $0x58] sm:$0xff]
  %v71 = vld [vmem:[%s1 + $0x60] sm:$0xff]
  %v72 = vld [vmem:[%s1 + $0x68] sm:$0xff]
  %v73 = vld [vmem:[%s1 + $0x70] sm:$0xff]
  %v74 = vld [vmem:[%s1 + $0x78] sm:$0xff]
  %v75 = vld [vmem:[%s1 + $0x80] sm:$0xff]
  %v76 = vld [vmem:[%s1 + $0x88] sm:$0xff]
  %v77 = vld [vmem:[%s1 + $0x90] sm:$0xff]
  %v78 = vld [vmem:[%s1 + $0x98] sm:$0xff]
  %v79 = vld [vmem:[%s1 + $0xa0] sm:$0xff]
  %v80 = vld [vmem:[%s1 + $0xa8] sm:$0xff]
  %v81 = vld [vmem:[%s1 + $0xb0] sm:$0xff]
  %v82 = vld [vmem:[%s1 + $0xb8] sm:$0xff]
  %v83 = vld [vmem:[%s1 + $0xc0] sm:$0xff]
  %v84 = vld [vmem:[%s1 + $0xc8] sm:$0xff]
  %v85 = vld [vmem:[%s1 + $0xd0] sm:$0xff]
  %v86 = vld [vmem:[%s1 + $0xd8] sm:$0xff]
  %v87 = vld [vmem:[%s1 + $0xe0] sm:$0xff]
  %v88 = vld [vmem:[%s1 + $0xe8] sm:$0xff]
  %v89 = vld [vmem:[%s1 + $0xf0] sm:$0xff]
  %v90 = vld [vmem:[%s1 + $0xf8] sm:$0xff]
  %v91 = vld [vmem:[%s1 + $0x100] sm:$0xff]
  %v92 = vld [vmem:[%s1 + $0x108] sm:$0xff]
  %v93 = vld [vmem:[%s1 + $0x110] sm:$0xff]
  %v94 = vld [vmem:[%s1 + $0x118] sm:$0xff]
  %v96 = vunpack.c.l.b16 %v58
  %v97 = vunpack.c.h.b16 %v58
  %v98 = vpack.c.b16 %v96, %v96
  %v99 = vpack.c.b16 %v97, %v97
  %v137 = vunpack.c.l.b16 %v59
  %v138 = vunpack.c.h.b16 %v59
  %v139 = vunpack.c.l.b16 %v60
  %v140 = vunpack.c.h.b16 %v60
  %v141 = vunpack.c.l.b16 %v61
  %v142 = vunpack.c.h.b16 %v61
  %v143 = vunpack.c.l.b16 %v62
  %v144 = vunpack.c.h.b16 %v62
  %v145 = vunpack.c.l.b16 %v63
  %v146 = vunpack.c.h.b16 %v63
  %v147 = vunpack.c.l.b16 %v64
  %v148 = vunpack.c.h.b16 %v64
  %v149 = vunpack.c.l.b16 %v65
  %v150 = vunpack.c.h.b16 %v65
  %v151 = vunpack.c.l.b16 %v66
  %v152 = vunpack.c.h.b16 %v66
  %v153 = vunpack.c.l.b16 %v67
  %v154 = vunpack.c.h.b16 %v67
  %v155 = vunpack.c.l.b16 %v68
  %v156 = vunpack.c.h.b16 %v68
  %v157 = vunpack.c.l.b16 %v69
  %v158 = vunpack.c.h.b16 %v69
  %v159 = vunpack.c.l.b16 %v70
  %v160 = vunpack.c.h.b16 %v70
  %v161 = vunpack.c.l.b16 %v71
  %v162 = vunpack.c.h.b16 %v71
  %v163 = vunpack.c.l.b16 %v72
  %v164 = vunpack.c.h.b16 %v72
  %v165 = vunpack.c.l.b16 %v73
  %v166 = vunpack.c.h.b16 %v73
  %v167 = vunpack.c.l.b16 %v74
  %v168 = vunpack.c.h.b16 %v74
  %v169 = vunpack.c.l.b16 %v75
  %v170 = vunpack.c.h.b16 %v75
  %v171 = vunpack.c.l.b16 %v76
  %v172 = vunpack.c.h.b16 %v76
  %v173 = vunpack.c.l.b16 %v77
  %v174 = vunpack.c.h.b16 %v77
  %v175 = vunpack.c.l.b16 %v78
  %v176 = vunpack.c.h.b16 %v78
  %v177 = vunpack.c.l.b16 %v79
  %v178 = vunpack.c.h.b16 %v79
  %v179 = vunpack.c.l.b16 %v80
  %v180 = vunpack.c.h.b16 %v80
  %v181 = vunpack.c.l.b16 %v81
  %v182 = vunpack.c.h.b16 %v81
  %v183 = vunpack.c.l.b16 %v82
  %v184 = vunpack.c.h.b16 %v82
  %v185 = vunpack.c.l.b16 %v83
  %v186 = vunpack.c.h.b16 %v83
  %v187 = vunpack.c.l.b16 %v84
  %v188 = vunpack.c.h.b16 %v84
  %v189 = vunpack.c.l.b16 %v85
  %v190 = vunpack.c.h.b16 %v85
  %v191 = vunpack.c.l.b16 %v86
  %v192 = vunpack.c.h.b16 %v86
  %v193 = vunpack.c.l.b16 %v87
  %v194 = vunpack.c.h.b16 %v87
  %v195 = vunpack.c.l.b16 %v88
  %v196 = vunpack.c.h.b16 %v88
  %v197 = vunpack.c.l.b16 %v89
  %v198 = vunpack.c.h.b16 %v89
  %v199 = vunpack.c.l.b16 %v90
  %v200 = vunpack.c.h.b16 %v90
  %v201 = vunpack.c.l.b16 %v91
  %v202 = vunpack.c.h.b16 %v91
  %v203 = vunpack.c.l.b16 %v92
  %v204 = vunpack.c.h.b16 %v92
  %v205 = vunpack.c.l.b16 %v93
  %v206 = vunpack.c.h.b16 %v93
  %v207 = vunpack.c.l.b16 %v94
  %v208 = vunpack.c.h.b16 %v94
  %v209 = vpack.c.b16 %v141, %v137
  %v210 = vpack.c.b16 %v142, %v138
  %v211 = vpack.c.b16 %v143, %v139
  %v212 = vpack.c.b16 %v144, %v140
  %v213 = vpack.c.b16 %v149, %v145
  %v214 = vpack.c.b16 %v150, %v146
  %v215 = vpack.c.b16 %v151, %v147
  %v216 = vpack.c.b16 %v152, %v148
  %v217 = vpack.c.b16 %v157, %v153
  %v218 = vpack.c.b16 %v158, %v154
  %v219 = vpack.c.b16 %v159, %v155
  %v220 = vpack.c.b16 %v160, %v156
  %v221 = vpack.c.b16 %v165, %v161
  %v222 = vpack.c.b16 %v166, %v162
  %v223 = vpack.c.b16 %v167, %v163
  %v224 = vpack.c.b16 %v168, %v164
  %v225 = vpack.c.b16 %v173, %v169
  %v226 = vpack.c.b16 %v174, %v170
  %v227 = vpack.c.b16 %v175, %v171
  %v228 = vpack.c.b16 %v176, %v172
  %v229 = vpack.c.b16 %v181, %v177
  %v230 = vpack.c.b16 %v182, %v178
  %v231 = vpack.c.b16 %v183, %v179
  %v232 = vpack.c.b16 %v184, %v180
  %v233 = vpack.c.b16 %v189, %v185
  %v234 = vpack.c.b16 %v190, %v186
  %v235 = vpack.c.b16 %v191, %v187
  %v236 = vpack.c.b16 %v192, %v188
  %v237 = vpack.c.b16 %v197, %v193
  %v238 = vpack.c.b16 %v198, %v194
  %v239 = vpack.c.b16 %v199, %v195
  %v240 = vpack.c.b16 %v200, %v196
  %v241 = vpack.c.b16 %v205, %v201
  %v242 = vpack.c.b16 %v206, %v202
  %v243 = vpack.c.b16 %v207, %v203
  %v244 = vpack.c.b16 %v208, %v204
  %vm281 = vcmask 130048
  %v283 = vsel %vm281, %v99, 0
  %285 = vmatpush.bf16.msra.mxu0 %v237
  %286 = vmatpush.bf16.msra.mxu0 %v233
  %287 = vmatpush.bf16.msra.mxu0 %v229
  %288 = vmatpush.bf16.msra.mxu0 %v225
  %289 = vmatpush.bf16.msra.mxu0 %v221
  %290 = vmatpush.bf16.msra.mxu0 %v217
  %291 = vmatpush.bf16.msra.mxu0 %v213
  %292 = vmatpush.bf16.msra.mxu0 %v209
  %293 = vmatmul.bf16.gmra.mxu0 %v98
  %v294 = vpop.f32.mrf.mxu0
  %v295 = vadd.f32 0.0, %v294
  %v296 = vpop.f32.mrf.mxu0
  %297 = vdwg.mxu0
  %298 = vmatpush.bf16.msra.mxu0 0
  %299 = vmatpush.bf16.msra.mxu0 0
  %300 = vmatpush.bf16.msra.mxu0 0
  %301 = vmatpush.bf16.msra.mxu0 0
  %302 = vmatpush.bf16.msra.mxu0 0
  %303 = vmatpush.bf16.msra.mxu0 0
  %304 = vmatpush.bf16.msra.mxu0 0
  %305 = vmatpush.bf16.msra.mxu0 %v241
  %306 = vmatmul.bf16.gmra.mxu0 %v283
  %v307 = vpop.f32.mrf.mxu0
  %v308 = vadd.f32 %v295, %v307
  %v309 = vpop.f32.mrf.mxu0
  %310 = vdwg.mxu0
  %311 = vmatpush.bf16.msra.mxu0 %v238
  %312 = vmatpush.bf16.msra.mxu0 %v234
  %313 = vmatpush.bf16.msra.mxu0 %v230
  %314 = vmatpush.bf16.msra.mxu0 %v226
  %315 = vmatpush.bf16.msra.mxu0 %v222
  %316 = vmatpush.bf16.msra.mxu0 %v218
  %317 = vmatpush.bf16.msra.mxu0 %v214
  %318 = vmatpush.bf16.msra.mxu0 %v210
  %319 = vmatmul.bf16.gmra.mxu0 %v98
  %v320 = vpop.f32.mrf.mxu0
  %v321 = vadd.f32 0.0, %v320
  %v322 = vpop.f32.mrf.mxu0
  %323 = vdwg.mxu0
  %324 = vmatpush.bf16.msra.mxu0 0
  %325 = vmatpush.bf16.msra.mxu0 0
  %326 = vmatpush.bf16.msra.mxu0 0
  %327 = vmatpush.bf16.msra.mxu0 0
  %328 = vmatpush.bf16.msra.mxu0 0
  %329 = vmatpush.bf16.msra.mxu0 0
  %330 = vmatpush.bf16.msra.mxu0 0
  %331 = vmatpush.bf16.msra.mxu0 %v242
  %332 = vmatmul.bf16.gmra.mxu0 %v283
  %v333 = vpop.f32.mrf.mxu0
  %v334 = vadd.f32 %v321, %v333
  %v335 = vpop.f32.mrf.mxu0
  %336 = vdwg.mxu0
  %337 = vmatpush.bf16.msra.mxu0 %v239
  %338 = vmatpush.bf16.msra.mxu0 %v235
  %339 = vmatpush.bf16.msra.mxu0 %v231
  %340 = vmatpush.bf16.msra.mxu0 %v227
  %341 = vmatpush.bf16.msra.mxu0 %v223
  %342 = vmatpush.bf16.msra.mxu0 %v219
  %343 = vmatpush.bf16.msra.mxu0 %v215
  %344 = vmatpush.bf16.msra.mxu0 %v211
  %345 = vmatmul.bf16.gmra.mxu0 %v98
  %v346 = vpop.f32.mrf.mxu0
  %v347 = vadd.f32 0.0, %v346
  %v348 = vpop.f32.mrf.mxu0
  %349 = vdwg.mxu0
  %350 = vmatpush.bf16.msra.mxu0 0
  %351 = vmatpush.bf16.msra.mxu0 0
  %352 = vmatpush.bf16.msra.mxu0 0
  %353 = vmatpush.bf16.msra.mxu0 0
  %354 = vmatpush.bf16.msra.mxu0 0
  %355 = vmatpush.bf16.msra.mxu0 0
  %356 = vmatpush.bf16.msra.mxu0 0
  %357 = vmatpush.bf16.msra.mxu0 %v243
  %358 = vmatmul.bf16.gmra.mxu0 %v283
  %v359 = vpop.f32.mrf.mxu0
  %v360 = vadd.f32 %v347, %v359
  %v361 = vpop.f32.mrf.mxu0
  %362 = vdwg.mxu0
  %363 = vmatpush.bf16.msra.mxu0 %v240
  %364 = vmatpush.bf16.msra.mxu0 %v236
  %365 = vmatpush.bf16.msra.mxu0 %v232
  %366 = vmatpush.bf16.msra.mxu0 %v228
  %367 = vmatpush.bf16.msra.mxu0 %v224
  %368 = vmatpush.bf16.msra.mxu0 %v220
  %369 = vmatpush.bf16.msra.mxu0 %v216
  %370 = vmatpush.bf16.msra.mxu0 %v212
  %371 = vmatmul.bf16.gmra.mxu0 %v98
  %v372 = vpop.f32.mrf.mxu0
  %v373 = vadd.f32 0.0, %v372
  %v374 = vpop.f32.mrf.mxu0
  %375 = vdwg.mxu0
  %376 = vmatpush.bf16.msra.mxu0 0
  %377 = vmatpush.bf16.msra.mxu0 0
  %378 = vmatpush.bf16.msra.mxu0 0
  %379 = vmatpush.bf16.msra.mxu0 0
  %380 = vmatpush.bf16.msra.mxu0 0
  %381 = vmatpush.bf16.msra.mxu0 0
  %382 = vmatpush.bf16.msra.mxu0 0
  %383 = vmatpush.bf16.msra.mxu0 %v244
  %384 = vmatmul.bf16.gmra.mxu0 %v283
  %v385 = vpop.f32.mrf.mxu0
  %v386 = vadd.f32 %v373, %v385
  %v387 = vpop.f32.mrf.mxu0
  %388 = vdwg.mxu0
  %v390 = vunpack.c.l.b16 %v21
  %v391 = vunpack.c.h.b16 %v21
  %v392 = vpack.c.b16 %v390, %v390
  %v393 = vpack.c.b16 %v391, %v391
  %v431 = vunpack.c.l.b16 %v22
  %v432 = vunpack.c.h.b16 %v22
  %v433 = vunpack.c.l.b16 %v23
  %v434 = vunpack.c.h.b16 %v23
  %v435 = vunpack.c.l.b16 %v24
  %v436 = vunpack.c.h.b16 %v24
  %v437 = vunpack.c.l.b16 %v25
  %v438 = vunpack.c.h.b16 %v25
  %v439 = vunpack.c.l.b16 %v26
  %v440 = vunpack.c.h.b16 %v26
  %v441 = vunpack.c.l.b16 %v27
  %v442 = vunpack.c.h.b16 %v27
  %v443 = vunpack.c.l.b16 %v28
  %v444 = vunpack.c.h.b16 %v28
  %v445 = vunpack.c.l.b16 %v29
  %v446 = vunpack.c.h.b16 %v29
  %v447 = vunpack.c.l.b16 %v30
  %v448 = vunpack.c.h.b16 %v30
  %v449 = vunpack.c.l.b16 %v31
  %v450 = vunpack.c.h.b16 %v31
  %v451 = vunpack.c.l.b16 %v32
  %v452 = vunpack.c.h.b16 %v32
  %v453 = vunpack.c.l.b16 %v33
  %v454 = vunpack.c.h.b16 %v33
  %v455 = vunpack.c.l.b16 %v34
  %v456 = vunpack.c.h.b16 %v34
  %v457 = vunpack.c.l.b16 %v35
  %v458 = vunpack.c.h.b16 %v35
  %v459 = vunpack.c.l.b16 %v36
  %v460 = vunpack.c.h.b16 %v36
  %v461 = vunpack.c.l.b16 %v37
  %v462 = vunpack.c.h.b16 %v37
  %v463 = vunpack.c.l.b16 %v38
  %v464 = vunpack.c.h.b16 %v38
  %v465 = vunpack.c.l.b16 %v39
  %v466 = vunpack.c.h.b16 %v39
  %v467 = vunpack.c.l.b16 %v40
  %v468 = vunpack.c.h.b16 %v40
  %v469 = vunpack.c.l.b16 %v41
  %v470 = vunpack.c.h.b16 %v41
  %v471 = vunpack.c.l.b16 %v42
  %v472 = vunpack.c.h.b16 %v42
  %v473 = vunpack.c.l.b16 %v43
  %v474 = vunpack.c.h.b16 %v43
  %v475 = vunpack.c.l.b16 %v44
  %v476 = vunpack.c.h.b16 %v44
  %v477 = vunpack.c.l.b16 %v45
  %v478 = vunpack.c.h.b16 %v45
  %v479 = vunpack.c.l.b16 %v46
  %v480 = vunpack.c.h.b16 %v46
  %v481 = vunpack.c.l.b16 %v47
  %v482 = vunpack.c.h.b16 %v47
  %v483 = vunpack.c.l.b16 %v48
  %v484 = vunpack.c.h.b16 %v48
  %v485 = vunpack.c.l.b16 %v49
  %v486 = vunpack.c.h.b16 %v49
  %v487 = vunpack.c.l.b16 %v50
  %v488 = vunpack.c.h.b16 %v50
  %v489 = vunpack.c.l.b16 %v51
  %v490 = vunpack.c.h.b16 %v51
  %v491 = vunpack.c.l.b16 %v52
  %v492 = vunpack.c.h.b16 %v52
  %v493 = vunpack.c.l.b16 %v53
  %v494 = vunpack.c.h.b16 %v53
  %v495 = vunpack.c.l.b16 %v54
  %v496 = vunpack.c.h.b16 %v54
  %v497 = vunpack.c.l.b16 %v55
  %v498 = vunpack.c.h.b16 %v55
  %v499 = vunpack.c.l.b16 %v56
  %v500 = vunpack.c.h.b16 %v56
  %v501 = vunpack.c.l.b16 %v57
  %v502 = vunpack.c.h.b16 %v57
  %v503 = vpack.c.b16 %v435, %v431
  %v504 = vpack.c.b16 %v436, %v432
  %v505 = vpack.c.b16 %v437, %v433
  %v506 = vpack.c.b16 %v438, %v434
  %v507 = vpack.c.b16 %v443, %v439
  %v508 = vpack.c.b16 %v444, %v440
  %v509 = vpack.c.b16 %v445, %v441
  %v510 = vpack.c.b16 %v446, %v442
  %v511 = vpack.c.b16 %v451, %v447
  %v512 = vpack.c.b16 %v452, %v448
  %v513 = vpack.c.b16 %v453, %v449
  %v514 = vpack.c.b16 %v454, %v450
  %v515 = vpack.c.b16 %v459, %v455
  %v516 = vpack.c.b16 %v460, %v456
  %v517 = vpack.c.b16 %v461, %v457
  %v518 = vpack.c.b16 %v462, %v458
  %v519 = vpack.c.b16 %v467, %v463
  %v520 = vpack.c.b16 %v468, %v464
  %v521 = vpack.c.b16 %v469, %v465
  %v522 = vpack.c.b16 %v470, %v466
  %v523 = vpack.c.b16 %v475, %v471
  %v524 = vpack.c.b16 %v476, %v472
  %v525 = vpack.c.b16 %v477, %v473
  %v526 = vpack.c.b16 %v478, %v474
  %v527 = vpack.c.b16 %v483, %v479
  %v528 = vpack.c.b16 %v484, %v480
  %v529 = vpack.c.b16 %v485, %v481
  %v530 = vpack.c.b16 %v486, %v482
  %v531 = vpack.c.b16 %v491, %v487
  %v532 = vpack.c.b16 %v492, %v488
  %v533 = vpack.c.b16 %v493, %v489
  %v534 = vpack.c.b16 %v494, %v490
  %v535 = vpack.c.b16 %v499, %v495
  %v536 = vpack.c.b16 %v500, %v496
  %v537 = vpack.c.b16 %v501, %v497
  %v538 = vpack.c.b16 %v502, %v498
  %v576 = vsel %vm281, %v393, 0
  %578 = vmatpush.bf16.msra.mxu0 %v531
  %579 = vmatpush.bf16.msra.mxu0 %v527
  %580 = vmatpush.bf16.msra.mxu0 %v523
  %581 = vmatpush.bf16.msra.mxu0 %v519
  %582 = vmatpush.bf16.msra.mxu0 %v515
  %583 = vmatpush.bf16.msra.mxu0 %v511
  %584 = vmatpush.bf16.msra.mxu0 %v507
  %585 = vmatpush.bf16.msra.mxu0 %v503
  %586 = vmatmul.bf16.gmra.mxu0 %v392
  %v587 = vpop.f32.mrf.mxu0
  %v588 = vadd.f32 %v308, %v587
  %v589 = vpop.f32.mrf.mxu0
  %590 = vdwg.mxu0
  %591 = vmatpush.bf16.msra.mxu0 0
  %592 = vmatpush.bf16.msra.mxu0 0
  %593 = vmatpush.bf16.msra.mxu0 0
  %594 = vmatpush.bf16.msra.mxu0 0
  %595 = vmatpush.bf16.msra.mxu0 0
  %596 = vmatpush.bf16.msra.mxu0 0
  %597 = vmatpush.bf16.msra.mxu0 0
  %598 = vmatpush.bf16.msra.mxu0 %v535
  %599 = vmatmul.bf16.gmra.mxu0 %v576
  %v600 = vpop.f32.mrf.mxu0
  %v601 = vadd.f32 %v588, %v600
  %v602 = vpop.f32.mrf.mxu0
  %603 = vdwg.mxu0
  %604 = vmatpush.bf16.msra.mxu0 %v532
  %605 = vmatpush.bf16.msra.mxu0 %v528
  %606 = vmatpush.bf16.msra.mxu0 %v524
  %607 = vmatpush.bf16.msra.mxu0 %v520
  %608 = vmatpush.bf16.msra.mxu0 %v516
  %609 = vmatpush.bf16.msra.mxu0 %v512
  %610 = vmatpush.bf16.msra.mxu0 %v508
  %611 = vmatpush.bf16.msra.mxu0 %v504
  %612 = vmatmul.bf16.gmra.mxu0 %v392
  %v613 = vpop.f32.mrf.mxu0
  %v614 = vadd.f32 %v334, %v613
  %v615 = vpop.f32.mrf.mxu0
  %616 = vdwg.mxu0
  %617 = vmatpush.bf16.msra.mxu0 0
  %618 = vmatpush.bf16.msra.mxu0 0
  %619 = vmatpush.bf16.msra.mxu0 0
  %620 = vmatpush.bf16.msra.mxu0 0
  %621 = vmatpush.bf16.msra.mxu0 0
  %622 = vmatpush.bf16.msra.mxu0 0
  %623 = vmatpush.bf16.msra.mxu0 0
  %624 = vmatpush.bf16.msra.mxu0 %v536
  %625 = vmatmul.bf16.gmra.mxu0 %v576
  %v626 = vpop.f32.mrf.mxu0
  %v627 = vadd.f32 %v614, %v626
  %v628 = vpop.f32.mrf.mxu0
  %629 = vdwg.mxu0
  %630 = vmatpush.bf16.msra.mxu0 %v533
  %631 = vmatpush.bf16.msra.mxu0 %v529
  %632 = vmatpush.bf16.msra.mxu0 %v525
  %633 = vmatpush.bf16.msra.mxu0 %v521
  %634 = vmatpush.bf16.msra.mxu0 %v517
  %635 = vmatpush.bf16.msra.mxu0 %v513
  %636 = vmatpush.bf16.msra.mxu0 %v509
  %637 = vmatpush.bf16.msra.mxu0 %v505
  %638 = vmatmul.bf16.gmra.mxu0 %v392
  %v639 = vpop.f32.mrf.mxu0
  %v640 = vadd.f32 %v360, %v639
  %v641 = vpop.f32.mrf.mxu0
  %642 = vdwg.mxu0
  %643 = vmatpush.bf16.msra.mxu0 0
  %644 = vmatpush.bf16.msra.mxu0 0
  %645 = vmatpush.bf16.msra.mxu0 0
  %646 = vmatpush.bf16.msra.mxu0 0
  %647 = vmatpush.bf16.msra.mxu0 0
  %648 = vmatpush.bf16.msra.mxu0 0
  %649 = vmatpush.bf16.msra.mxu0 0
  %650 = vmatpush.bf16.msra.mxu0 %v537
  %651 = vmatmul.bf16.gmra.mxu0 %v576
  %v652 = vpop.f32.mrf.mxu0
  %v653 = vadd.f32 %v640, %v652
  %v654 = vpop.f32.mrf.mxu0
  %655 = vdwg.mxu0
  %656 = vmatpush.bf16.msra.mxu0 %v534
  %657 = vmatpush.bf16.msra.mxu0 %v530
  %658 = vmatpush.bf16.msra.mxu0 %v526
  %659 = vmatpush.bf16.msra.mxu0 %v522
  %660 = vmatpush.bf16.msra.mxu0 %v518
  %661 = vmatpush.bf16.msra.mxu0 %v514
  %662 = vmatpush.bf16.msra.mxu0 %v510
  %663 = vmatpush.bf16.msra.mxu0 %v506
  %664 = vmatmul.bf16.gmra.mxu0 %v392
  %v665 = vpop.f32.mrf.mxu0
  %v666 = vadd.f32 %v386, %v665
  %v667 = vpop.f32.mrf.mxu0
  %668 = vdwg.mxu0
  %669 = vmatpush.bf16.msra.mxu0 0
  %670 = vmatpush.bf16.msra.mxu0 0
  %671 = vmatpush.bf16.msra.mxu0 0
  %672 = vmatpush.bf16.msra.mxu0 0
  %673 = vmatpush.bf16.msra.mxu0 0
  %674 = vmatpush.bf16.msra.mxu0 0
  %675 = vmatpush.bf16.msra.mxu0 0
  %676 = vmatpush.bf16.msra.mxu0 %v538
  %677 = vmatmul.bf16.gmra.mxu0 %v576
  %v678 = vpop.f32.mrf.mxu0
  %v679 = vadd.f32 %v666, %v678
  %v680 = vpop.f32.mrf.mxu0
  %681 = vdwg.mxu0
  %v682 = vadd.f32 %v601, %v627
  %v683 = vadd.f32 %v682, %v653
  %v684 = vadd.f32 %v683, %v679
  %685 = vadd.xlane.f32.xlu0 %v684
  %v686 = vpop.xlane.xlu0 %685
  %v687 = vmul.f32 %v601, %v601
  %v688 = vmul.f32 %v627, %v627
  %v689 = vmul.f32 %v653, %v653
  %v690 = vmul.f32 %v679, %v679
  %v691 = vadd.f32 %v687, %v688
  %v692 = vadd.f32 %v691, %v689
  %v693 = vadd.f32 %v692, %v690
  %694 = vadd.xlane.f32.xlu0 %v693
  %v695 = vpop.xlane.xlu0 %694
  %v696 = vmul.f32 %v686, 0.001953125
  %v697 = vmul.f32 %v695, 0.001953125
  %v698 = vmul.f32 %v696, %v696
  %v699 = vsub.f32 %v697, %v698
  %v700 = vmax.f32 %v699, 0.0
  %v701 = vadd.f32 %v700, 1e-05
  %v702 = vrsqrt.pop %v701
  %v703 = vmul.f32 %v702, %v701
  %v704 = vmul.f32 %v703, %v702
  %v705 = vmul.f32 0.5, %v704
  %v706 = vsub.f32 1.5, %v705
  %v707 = vmul.f32 %v702, %v706
  %vm708 = vweird.f32 %v701
  %vm709 = vweird.f32 %v702
  %vm710 = vmor %vm708, %vm709
  %v711 = vsel %vm710, %v702, %v707
  %v712 = vld [vmem:[%s4] sm:$0xff]
  %v713 = vsub.f32 %v601, %v696
  %v714 = vsub.f32 %v627, %v696
  %v715 = vsub.f32 %v653, %v696
  %v716 = vsub.f32 %v679, %v696
  %v717 = vmul.f32 %v711, %v712
  %719 = vset.pattern.permute.xlu0 0
  %720 = vperm.xlu0 %719, %v717
  %v721 = vpop.permute.xlu0 %720
  %v723 = vmul.f32 %v713, %v721
  %v724 = vmul.f32 %v714, %v721
  %v725 = vmul.f32 %v715, %v721
  %v726 = vmul.f32 %v716, %v721
  %728 = vset.pattern.permute.xlu0 1
  %729 = vperm.xlu0 %728, %v712
  %v730 = vpop.permute.xlu0 %729
  %v732 = vadd.f32 %v723, %v730
  %v733 = vadd.f32 %v724, %v730
  %v734 = vadd.f32 %v725, %v730
  %v735 = vadd.f32 %v726, %v730
  %v736 = vmax.f32 %v732, 0.0
  %v737 = vmax.f32 %v733, 0.0
  %v738 = vmax.f32 %v734, 0.0
  %v739 = vmax.f32 %v735, 0.0
  %v740 = vpack.c.bf16 %v737, %v736
  %v741 = vpack.c.bf16 %v739, %v738
  %742 = vst [vmem:[%s5] sm:$0xff] %v740
  %743 = vst [vmem:[%s5 + $0x8] sm:$0xff] %v741
  // Predicated region
  $region22: #{generator_forward.10} parent=0 // pred_check
    _
  $region23: #{generator_forward.10} parent=0 // pred_check_branch
    %745 = sbr.rel (0) target = $region25
  $region24: #{generator_forward.10} parent=0 // pred_region
    _
  $region25: #{generator_forward.10} parent=0 // pred_fallthru
    _
  // Predicated region
  $region26: #{generator_forward.10} parent=0 // pred_check
    _
  $region27: #{generator_forward.10} parent=0 // pred_check_branch
    %747 = sbr.rel (0) target = $region29
  $region28: #{generator_forward.10} parent=0 // pred_region
    _
  $region29: #{generator_forward.10} parent=0 // pred_fallthru
    _

// kernel: generator_forward.11
$region0: #{generator_forward.11}
  #allocation0 [shape = 'u32[]', space=smem, size = 0x4, offset = 0x4, fixed_abs, tag = 'smem constant byte address 0x4 - core index']
  #allocation1 [shape = 'u32[72,128]{1,0:T(1,128)}', space=vmem, size = 0x9000, scoped, tag = 'internal scratch']
  #allocation2 [shape = 'f32[1,1]{1,0:T(1,128)S(1)}', space=vmem, size = 0x200, scoped, tag = 'scoped memory for generator_forward.11']
  %s0 = inlined_call_operand.vmem [shape: bf16[72,2048], index: 0, kind: input, shape index: {}]
  %s1 = inlined_call_operand.vmem [shape: bf16[72,2048], index: 1, kind: input, shape index: {}]
  %s2 = inlined_call_operand.vmem [shape: bf16[1,72], index: 2, kind: input, shape index: {}]
  %s3 = inlined_call_operand.vmem [shape: bf16[1,72], index: 3, kind: input, shape index: {}]
  %s4 = inlined_call_operand.<no memory space> [shape: f32[1,1], index: 4, kind: input, shape index: {}]
  %s5 = inlined_call_operand.vmem [shape: f32[1,2048], index: 5, kind: output, shape index: {}]
  %s6 = sld [smem:[#allocation0]]
  $region30: #{generator_forward.11} parent=0
    _
  %s8 = ssub.s32 1, %s6
  %s9 = scalar_select 0, %s8, %s6
  %v10 = vstv %s4
  %11 = vst [vmem:[#allocation2] sm:$0x1] %v10
  // Predicated region
  $region2: #{generator_forward.11} parent=0 // pred_check
    _
  $region3: #{generator_forward.11} parent=0 // pred_check_branch
    %13 = sbr.rel (0) target = $region5
  $region4: #{generator_forward.11} parent=0 // pred_region
    _
  $region5: #{generator_forward.11} parent=0 // pred_fallthru
    _
  // Predicated region
  $region6: #{generator_forward.11} parent=0 // pred_check
    _
  $region7: #{generator_forward.11} parent=0 // pred_check_branch
    %15 = sbr.rel (0) target = $region9
  $region8: #{generator_forward.11} parent=0 // pred_region
    _
  $region9: #{generator_forward.11} parent=0 // pred_fallthru
    _
  // Predicated region
  $region10: #{generator_forward.11} parent=0 // pred_check
    _
  $region11: #{generator_forward.11} parent=0 // pred_check_branch
    %17 = sbr.rel (0) target = $region13
  $region12: #{generator_forward.11} parent=0 // pred_region
    _
  $region13: #{generator_forward.11} parent=0 // pred_fallthru
    _
  // Predicated region
  $region14: #{generator_forward.11} parent=0 // pred_check
    _
  $region15: #{generator_forward.11} parent=0 // pred_check_branch
    %19 = sbr.rel (0) target = $region17
  $region16: #{generator_forward.11} parent=0 // pred_region
    _
  $region17: #{generator_forward.11} parent=0 // pred_fallthru
    _
  // Predicated region
  $region18: #{generator_forward.11} parent=0 // pred_check
    _
  $region19: #{generator_forward.11} parent=0 // pred_check_branch
    %21 = sbr.rel (0) target = $region21
  $region20: #{generator_forward.11} parent=0 // pred_region
    _
  $region21: #{generator_forward.11} parent=0 // pred_fallthru
    _
  %v23 = vld [vmem:[%s2] sm:$0x1]
  %v24 = vld [vmem:[%s0] sm:$0xff]
  %v25 = vld [vmem:[%s0 + $0x8] sm:$0xff]
  %v26 = vld [vmem:[%s0 + $0x10] sm:$0xff]
  %v27 = vld [vmem:[%s0 + $0x18] sm:$0xff]
  %v28 = vld [vmem:[%s0 + $0x20] sm:$0xff]
  %v29 = vld [vmem:[%s0 + $0x28] sm:$0xff]
  %v30 = vld [vmem:[%s0 + $0x30] sm:$0xff]
  %v31 = vld [vmem:[%s0 + $0x38] sm:$0xff]
  %v32 = vld [vmem:[%s0 + $0x40] sm:$0xff]
  %v33 = vld [vmem:[%s0 + $0x48] sm:$0xff]
  %v34 = vld [vmem:[%s0 + $0x50] sm:$0xff]
  %v35 = vld [vmem:[%s0 + $0x58] sm:$0xff]
  %v36 = vld [vmem:[%s0 + $0x60] sm:$0xff]
  %v37 = vld [vmem:[%s0 + $0x68] sm:$0xff]
  %v38 = vld [vmem:[%s0 + $0x70] sm:$0xff]
  %v39 = vld [vmem:[%s0 + $0x78] sm:$0xff]
  %v40 = vld [vmem:[%s0 + $0x80] sm:$0xff]
  %v41 = vld [vmem:[%s0 + $0x88] sm:$0xff]
  %v42 = vld [vmem:[%s0 + $0x90] sm:$0xff]
  %v43 = vld [vmem:[%s0 + $0x98] sm:$0xff]
  %v44 = vld [vmem:[%s0 + $0xa0] sm:$0xff]
  %v45 = vld [vmem:[%s0 + $0xa8] sm:$0xff]
  %v46 = vld [vmem:[%s0 + $0xb0] sm:$0xff]
  %v47 = vld [vmem:[%s0 + $0xb8] sm:$0xff]
  %v48 = vld [vmem:[%s0 + $0xc0] sm:$0xff]
  %v49 = vld [vmem:[%s0 + $0xc8] sm:$0xff]
  %v50 = vld [vmem:[%s0 + $0xd0] sm:$0xff]
  %v51 = vld [vmem:[%s0 + $0xd8] sm:$0xff]
  %v52 = vld [vmem:[%s0 + $0xe0] sm:$0xff]
  %v53 = vld [vmem:[%s0 + $0xe8] sm:$0xff]
  %v54 = vld [vmem:[%s0 + $0xf0] sm:$0xff]
  %v55 = vld [vmem:[%s0 + $0xf8] sm:$0xff]
  %v56 = vld [vmem:[%s0 + $0x100] sm:$0xff]
  %v57 = vld [vmem:[%s0 + $0x108] sm:$0xff]
  %v58 = vld [vmem:[%s0 + $0x110] sm:$0xff]
  %v59 = vld [vmem:[%s0 + $0x118] sm:$0xff]
  %v60 = vld [vmem:[%s0 + $0x120] sm:$0xff]
  %v61 = vld [vmem:[%s0 + $0x128] sm:$0xff]
  %v62 = vld [vmem:[%s0 + $0x130] sm:$0xff]
  %v63 = vld [vmem:[%s0 + $0x138] sm:$0xff]
  %v64 = vld [vmem:[%s0 + $0x140] sm:$0xff]
  %v65 = vld [vmem:[%s0 + $0x148] sm:$0xff]
  %v66 = vld [vmem:[%s0 + $0x150] sm:$0xff]
  %v67 = vld [vmem:[%s0 + $0x158] sm:$0xff]
  %v68 = vld [vmem:[%s0 + $0x160] sm:$0xff]
  %v69 = vld [vmem:[%s0 + $0x168] sm:$0xff]
  %v70 = vld [vmem:[%s0 + $0x170] sm:$0xff]
  %v71 = vld [vmem:[%s0 + $0x178] sm:$0xff]
  %v72 = vld [vmem:[%s0 + $0x180] sm:$0xff]
  %v73 = vld [vmem:[%s0 + $0x188] sm:$0xff]
  %v74 = vld [vmem:[%s0 + $0x190] sm:$0xff]
  %v75 = vld [vmem:[%s0 + $0x198] sm:$0xff]
  %v76 = vld [vmem:[%s0 + $0x1a0] sm:$0xff]
  %v77 = vld [vmem:[%s0 + $0x1a8] sm:$0xff]
  %v78 = vld [vmem:[%s0 + $0x1b0] sm:$0xff]
  %v79 = vld [vmem:[%s0 + $0x1b8] sm:$0xff]
  %v80 = vld [vmem:[%s0 + $0x1c0] sm:$0xff]
  %v81 = vld [vmem:[%s0 + $0x1c8] sm:$0xff]
  %v82 = vld [vmem:[%s0 + $0x1d0] sm:$0xff]
  %v83 = vld [vmem:[%s0 + $0x1d8] sm:$0xff]
  %v84 = vld [vmem:[%s0 + $0x1e0] sm:$0xff]
  %v85 = vld [vmem:[%s0 + $0x1e8] sm:$0xff]
  %v86 = vld [vmem:[%s0 + $0x1f0] sm:$0xff]
  %v87 = vld [vmem:[%s0 + $0x1f8] sm:$0xff]
  %v88 = vld [vmem:[%s0 + $0x200] sm:$0xff]
  %v89 = vld [vmem:[%s0 + $0x208] sm:$0xff]
  %v90 = vld [vmem:[%s0 + $0x210] sm:$0xff]
  %v91 = vld [vmem:[%s0 + $0x218] sm:$0xff]
  %v92 = vld [vmem:[%s0 + $0x220] sm:$0xff]
  %v93 = vld [vmem:[%s0 + $0x228] sm:$0xff]
  %v94 = vld [vmem:[%s0 + $0x230] sm:$0xff]
  %v95 = vld [vmem:[%s0 + $0x238] sm:$0xff]
  %v96 = vld [vmem:[%s3] sm:$0x1]
  %v97 = vld [vmem:[%s1] sm:$0xff]
  %v98 = vld [vmem:[%s1 + $0x8] sm:$0xff]
  %v99 = vld [vmem:[%s1 + $0x10] sm:$0xff]
  %v100 = vld [vmem:[%s1 + $0x18] sm:$0xff]
  %v101 = vld [vmem:[%s1 + $0x20] sm:$0xff]
  %v102 = vld [vmem:[%s1 + $0x28] sm:$0xff]
  %v103 = vld [vmem:[%s1 + $0x30] sm:$0xff]
  %v104 = vld [vmem:[%s1 + $0x38] sm:$0xff]
  %v105 = vld [vmem:[%s1 + $0x40] sm:$0xff]
  %v106 = vld [vmem:[%s1 + $0x48] sm:$0xff]
  %v107 = vld [vmem:[%s1 + $0x50] sm:$0xff]
  %v108 = vld [vmem:[%s1 + $0x58] sm:$0xff]
  %v109 = vld [vmem:[%s1 + $0x60] sm:$0xff]
  %v110 = vld [vmem:[%s1 + $0x68] sm:$0xff]
  %v111 = vld [vmem:[%s1 + $0x70] sm:$0xff]
  %v112 = vld [vmem:[%s1 + $0x78] sm:$0xff]
  %v113 = vld [vmem:[%s1 + $0x80] sm:$0xff]
  %v114 = vld [vmem:[%s1 + $0x88] sm:$0xff]
  %v115 = vld [vmem:[%s1 + $0x90] sm:$0xff]
  %v116 = vld [vmem:[%s1 + $0x98] sm:$0xff]
  %v117 = vld [vmem:[%s1 + $0xa0] sm:$0xff]
  %v118 = vld [vmem:[%s1 + $0xa8] sm:$0xff]
  %v119 = vld [vmem:[%s1 + $0xb0] sm:$0xff]
  %v120 = vld [vmem:[%s1 + $0xb8] sm:$0xff]
  %v121 = vld [vmem:[%s1 + $0xc0] sm:$0xff]
  %v122 = vld [vmem:[%s1 + $0xc8] sm:$0xff]
  %v123 = vld [vmem:[%s1 + $0xd0] sm:$0xff]
  %v124 = vld [vmem:[%s1 + $0xd8] sm:$0xff]
  %v125 = vld [vmem:[%s1 + $0xe0] sm:$0xff]
  %v126 = vld [vmem:[%s1 + $0xe8] sm:$0xff]
  %v127 = vld [vmem:[%s1 + $0xf0] sm:$0xff]
  %v128 = vld [vmem:[%s1 + $0xf8] sm:$0xff]
  %v129 = vld [vmem:[%s1 + $0x100] sm:$0xff]
  %v130 = vld [vmem:[%s1 + $0x108] sm:$0xff]
  %v131 = vld [vmem:[%s1 + $0x110] sm:$0xff]
  %v132 = vld [vmem:[%s1 + $0x118] sm:$0xff]
  %v133 = vld [vmem:[%s1 + $0x120] sm:$0xff]
  %v134 = vld [vmem:[%s1 + $0x128] sm:$0xff]
  %v135 = vld [vmem:[%s1 + $0x130] sm:$0xff]
  %v136 = vld [vmem:[%s1 + $0x138] sm:$0xff]
  %v137 = vld [vmem:[%s1 + $0x140] sm:$0xff]
  %v138 = vld [vmem:[%s1 + $0x148] sm:$0xff]
  %v139 = vld [vmem:[%s1 + $0x150] sm:$0xff]
  %v140 = vld [vmem:[%s1 + $0x158] sm:$0xff]
  %v141 = vld [vmem:[%s1 + $0x160] sm:$0xff]
  %v142 = vld [vmem:[%s1 + $0x168] sm:$0xff]
  %v143 = vld [vmem:[%s1 + $0x170] sm:$0xff]
  %v144 = vld [vmem:[%s1 + $0x178] sm:$0xff]
  %v145 = vld [vmem:[%s1 + $0x180] sm:$0xff]
  %v146 = vld [vmem:[%s1 + $0x188] sm:$0xff]
  %v147 = vld [vmem:[%s1 + $0x190] sm:$0xff]
  %v148 = vld [vmem:[%s1 + $0x198] sm:$0xff]
  %v149 = vld [vmem:[%s1 + $0x1a0] sm:$0xff]
  %v150 = vld [vmem:[%s1 + $0x1a8] sm:$0xff]
  %v151 = vld [vmem:[%s1 + $0x1b0] sm:$0xff]
  %v152 = vld [vmem:[%s1 + $0x1b8] sm:$0xff]
  %v153 = vld [vmem:[%s1 + $0x1c0] sm:$0xff]
  %v154 = vld [vmem:[%s1 + $0x1c8] sm:$0xff]
  %v155 = vld [vmem:[%s1 + $0x1d0] sm:$0xff]
  %v156 = vld [vmem:[%s1 + $0x1d8] sm:$0xff]
  %v157 = vld [vmem:[%s1 + $0x1e0] sm:$0xff]
  %v158 = vld [vmem:[%s1 + $0x1e8] sm:$0xff]
  %v159 = vld [vmem:[%s1 + $0x1f0] sm:$0xff]
  %v160 = vld [vmem:[%s1 + $0x1f8] sm:$0xff]
  %v161 = vld [vmem:[%s1 + $0x200] sm:$0xff]
  %v162 = vld [vmem:[%s1 + $0x208] sm:$0xff]
  %v163 = vld [vmem:[%s1 + $0x210] sm:$0xff]
  %v164 = vld [vmem:[%s1 + $0x218] sm:$0xff]
  %v165 = vld [vmem:[%s1 + $0x220] sm:$0xff]
  %v166 = vld [vmem:[%s1 + $0x228] sm:$0xff]
  %v167 = vld [vmem:[%s1 + $0x230] sm:$0xff]
  %v168 = vld [vmem:[%s1 + $0x238] sm:$0xff]
  %v241 = vunpack.c.l.b16 %v97
  %v242 = vunpack.c.h.b16 %v97
  %v243 = vunpack.c.l.b16 %v98
  %v244 = vunpack.c.h.b16 %v98
  %v245 = vunpack.c.l.b16 %v99
  %v246 = vunpack.c.h.b16 %v99
  %v247 = vunpack.c.l.b16 %v100
  %v248 = vunpack.c.h.b16 %v100
  %v249 = vunpack.c.l.b16 %v101
  %v250 = vunpack.c.h.b16 %v101
  %v251 = vunpack.c.l.b16 %v102
  %v252 = vunpack.c.h.b16 %v102
  %v253 = vunpack.c.l.b16 %v103
  %v254 = vunpack.c.h.b16 %v103
  %v255 = vunpack.c.l.b16 %v104
  %v256 = vunpack.c.h.b16 %v104
  %v257 = vunpack.c.l.b16 %v105
  %v258 = vunpack.c.h.b16 %v105
  %v259 = vunpack.c.l.b16 %v106
  %v260 = vunpack.c.h.b16 %v106
  %v261 = vunpack.c.l.b16 %v107
  %v262 = vunpack.c.h.b16 %v107
  %v263 = vunpack.c.l.b16 %v108
  %v264 = vunpack.c.h.b16 %v108
  %v265 = vunpack.c.l.b16 %v109
  %v266 = vunpack.c.h.b16 %v109
  %v267 = vunpack.c.l.b16 %v110
  %v268 = vunpack.c.h.b16 %v110
  %v269 = vunpack.c.l.b16 %v111
  %v270 = vunpack.c.h.b16 %v111
  %v271 = vunpack.c.l.b16 %v112
  %v272 = vunpack.c.h.b16 %v112
  %v273 = vunpack.c.l.b16 %v113
  %v274 = vunpack.c.h.b16 %v113
  %v275 = vunpack.c.l.b16 %v114
  %v276 = vunpack.c.h.b16 %v114
  %v277 = vunpack.c.l.b16 %v115
  %v278 = vunpack.c.h.b16 %v115
  %v279 = vunpack.c.l.b16 %v116
  %v280 = vunpack.c.h.b16 %v116
  %v281 = vunpack.c.l.b16 %v117
  %v282 = vunpack.c.h.b16 %v117
  %v283 = vunpack.c.l.b16 %v118
  %v284 = vunpack.c.h.b16 %v118
  %v285 = vunpack.c.l.b16 %v119
  %v286 = vunpack.c.h.b16 %v119
  %v287 = vunpack.c.l.b16 %v120
  %v288 = vunpack.c.h.b16 %v120
  %v289 = vunpack.c.l.b16 %v121
  %v290 = vunpack.c.h.b16 %v121
  %v291 = vunpack.c.l.b16 %v122
  %v292 = vunpack.c.h.b16 %v122
  %v293 = vunpack.c.l.b16 %v123
  %v294 = vunpack.c.h.b16 %v123
  %v295 = vunpack.c.l.b16 %v124
  %v296 = vunpack.c.h.b16 %v124
  %v297 = vunpack.c.l.b16 %v125
  %v298 = vunpack.c.h.b16 %v125
  %v299 = vunpack.c.l.b16 %v126
  %v300 = vunpack.c.h.b16 %v126
  %v301 = vunpack.c.l.b16 %v127
  %v302 = vunpack.c.h.b16 %v127
  %v303 = vunpack.c.l.b16 %v128
  %v304 = vunpack.c.h.b16 %v128
  %v305 = vunpack.c.l.b16 %v129
  %v306 = vunpack.c.h.b16 %v129
  %v307 = vunpack.c.l.b16 %v130
  %v308 = vunpack.c.h.b16 %v130
  %v309 = vunpack.c.l.b16 %v131
  %v310 = vunpack.c.h.b16 %v131
  %v311 = vunpack.c.l.b16 %v132
  %v312 = vunpack.c.h.b16 %v132
  %v313 = vunpack.c.l.b16 %v133
  %v314 = vunpack.c.h.b16 %v133
  %v315 = vunpack.c.l.b16 %v134
  %v316 = vunpack.c.h.b16 %v134
  %v317 = vunpack.c.l.b16 %v135
  %v318 = vunpack.c.h.b16 %v135
  %v319 = vunpack.c.l.b16 %v136
  %v320 = vunpack.c.h.b16 %v136
  %v321 = vunpack.c.l.b16 %v137
  %v322 = vunpack.c.h.b16 %v137
  %v323 = vunpack.c.l.b16 %v138
  %v324 = vunpack.c.h.b16 %v138
  %v325 = vunpack.c.l.b16 %v139
  %v326 = vunpack.c.h.b16 %v139
  %v327 = vunpack.c.l.b16 %v140
  %v328 = vunpack.c.h.b16 %v140
  %v329 = vunpack.c.l.b16 %v141
  %v330 = vunpack.c.h.b16 %v141
  %v331 = vunpack.c.l.b16 %v142
  %v332 = vunpack.c.h.b16 %v142
  %v333 = vunpack.c.l.b16 %v143
  %v334 = vunpack.c.h.b16 %v143
  %v335 = vunpack.c.l.b16 %v144
  %v336 = vunpack.c.h.b16 %v144
  %v337 = vunpack.c.l.b16 %v145
  %v338 = vunpack.c.h.b16 %v145
  %v339 = vunpack.c.l.b16 %v146
  %v340 = vunpack.c.h.b16 %v146
  %v341 = vunpack.c.l.b16 %v147
  %v342 = vunpack.c.h.b16 %v147
  %v343 = vunpack.c.l.b16 %v148
  %v344 = vunpack.c.h.b16 %v148
  %v345 = vunpack.c.l.b16 %v149
  %v346 = vunpack.c.h.b16 %v149
  %v347 = vunpack.c.l.b16 %v150
  %v348 = vunpack.c.h.b16 %v150
  %v349 = vunpack.c.l.b16 %v151
  %v350 = vunpack.c.h.b16 %v151
  %v351 = vunpack.c.l.b16 %v152
  %v352 = vunpack.c.h.b16 %v152
  %v353 = vunpack.c.l.b16 %v153
  %v354 = vunpack.c.h.b16 %v153
  %v355 = vunpack.c.l.b16 %v154
  %v356 = vunpack.c.h.b16 %v154
  %v357 = vunpack.c.l.b16 %v155
  %v358 = vunpack.c.h.b16 %v155
  %v359 = vunpack.c.l.b16 %v156
  %v360 = vunpack.c.h.b16 %v156
  %v361 = vunpack.c.l.b16 %v157
  %v362 = vunpack.c.h.b16 %v157
  %v363 = vunpack.c.l.b16 %v158
  %v364 = vunpack.c.h.b16 %v158
  %v365 = vunpack.c.l.b16 %v159
  %v366 = vunpack.c.h.b16 %v159
  %v367 = vunpack.c.l.b16 %v160
  %v368 = vunpack.c.h.b16 %v160
  %v369 = vunpack.c.l.b16 %v161
  %v370 = vunpack.c.h.b16 %v161
  %v371 = vunpack.c.l.b16 %v162
  %v372 = vunpack.c.h.b16 %v162
  %v373 = vunpack.c.l.b16 %v163
  %v374 = vunpack.c.h.b16 %v163
  %v375 = vunpack.c.l.b16 %v164
  %v376 = vunpack.c.h.b16 %v164
  %v377 = vunpack.c.l.b16 %v165
  %v378 = vunpack.c.h.b16 %v165
  %v379 = vunpack.c.l.b16 %v166
  %v380 = vunpack.c.h.b16 %v166
  %v381 = vunpack.c.l.b16 %v167
  %v382 = vunpack.c.h.b16 %v167
  %v383 = vunpack.c.l.b16 %v168
  %v384 = vunpack.c.h.b16 %v168
  %v385 = vpack.c.b16 %v257, %v241
  %v386 = vpack.c.b16 %v258, %v242
  %v387 = vpack.c.b16 %v259, %v243
  %v388 = vpack.c.b16 %v260, %v244
  %v389 = vpack.c.b16 %v261, %v245
  %v390 = vpack.c.b16 %v262, %v246
  %v391 = vpack.c.b16 %v263, %v247
  %v392 = vpack.c.b16 %v264, %v248
  %v393 = vpack.c.b16 %v265, %v249
  %v394 = vpack.c.b16 %v266, %v250
  %v395 = vpack.c.b16 %v267, %v251
  %v396 = vpack.c.b16 %v268, %v252
  %v397 = vpack.c.b16 %v269, %v253
  %v398 = vpack.c.b16 %v270, %v254
  %v399 = vpack.c.b16 %v271, %v255
  %v400 = vpack.c.b16 %v272, %v256
  %v401 = vpack.c.b16 %v289, %v273
  %v402 = vpack.c.b16 %v290, %v274
  %v403 = vpack.c.b16 %v291, %v275
  %v404 = vpack.c.b16 %v292, %v276
  %v405 = vpack.c.b16 %v293, %v277
  %v406 = vpack.c.b16 %v294, %v278
  %v407 = vpack.c.b16 %v295, %v279
  %v408 = vpack.c.b16 %v296, %v280
  %v409 = vpack.c.b16 %v297, %v281
  %v410 = vpack.c.b16 %v298, %v282
  %v411 = vpack.c.b16 %v299, %v283
  %v412 = vpack.c.b16 %v300, %v284
  %v413 = vpack.c.b16 %v301, %v285
  %v414 = vpack.c.b16 %v302, %v286
  %v415 = vpack.c.b16 %v303, %v287
  %v416 = vpack.c.b16 %v304, %v288
  %v417 = vpack.c.b16 %v321, %v305
  %v418 = vpack.c.b16 %v322, %v306
  %v419 = vpack.c.b16 %v323, %v307
  %v420 = vpack.c.b16 %v324, %v308
  %v421 = vpack.c.b16 %v325, %v309
  %v422 = vpack.c.b16 %v326, %v310
  %v423 = vpack.c.b16 %v327, %v311
  %v424 = vpack.c.b16 %v328, %v312
  %v425 = vpack.c.b16 %v329, %v313
  %v426 = vpack.c.b16 %v330, %v314
  %v427 = vpack.c.b16 %v331, %v315
  %v428 = vpack.c.b16 %v332, %v316
  %v429 = vpack.c.b16 %v333, %v317
  %v430 = vpack.c.b16 %v334, %v318
  %v431 = vpack.c.b16 %v335, %v319
  %v432 = vpack.c.b16 %v336, %v320
  %v433 = vpack.c.b16 %v353, %v337
  %v434 = vpack.c.b16 %v354, %v338
  %v435 = vpack.c.b16 %v355, %v339
  %v436 = vpack.c.b16 %v356, %v340
  %v437 = vpack.c.b16 %v357, %v341
  %v438 = vpack.c.b16 %v358, %v342
  %v439 = vpack.c.b16 %v359, %v343
  %v440 = vpack.c.b16 %v360, %v344
  %v441 = vpack.c.b16 %v361, %v345
  %v442 = vpack.c.b16 %v362, %v346
  %v443 = vpack.c.b16 %v363, %v347
  %v444 = vpack.c.b16 %v364, %v348
  %v445 = vpack.c.b16 %v365, %v349
  %v446 = vpack.c.b16 %v366, %v350
  %v447 = vpack.c.b16 %v367, %v351
  %v448 = vpack.c.b16 %v368, %v352
  %v449 = vpack.c.b16 %v369, %v369
  %v450 = vpack.c.b16 %v370, %v370
  %v451 = vpack.c.b16 %v371, %v371
  %v452 = vpack.c.b16 %v372, %v372
  %v453 = vpack.c.b16 %v373, %v373
  %v454 = vpack.c.b16 %v374, %v374
  %v455 = vpack.c.b16 %v375, %v375
  %v456 = vpack.c.b16 %v376, %v376
  %v457 = vpack.c.b16 %v377, %v377
  %v458 = vpack.c.b16 %v378, %v378
  %v459 = vpack.c.b16 %v379, %v379
  %v460 = vpack.c.b16 %v380, %v380
  %v461 = vpack.c.b16 %v381, %v381
  %v462 = vpack.c.b16 %v382, %v382
  %v463 = vpack.c.b16 %v383, %v383
  %v464 = vpack.c.b16 %v384, %v384
  %vm529 = vcmask 588800
  %v531 = vsel %vm529, %v96, 0
  %vm533 = vcmask 1043456
  %v535 = vsel %vm533, %v449, 0
  %v538 = vsel %vm533, %v450, 0
  %v541 = vsel %vm533, %v451, 0
  %v544 = vsel %vm533, %v452, 0
  %v547 = vsel %vm533, %v453, 0
  %v550 = vsel %vm533, %v454, 0
  %v553 = vsel %vm533, %v455, 0
  %v556 = vsel %vm533, %v456, 0
  %v559 = vsel %vm533, %v457, 0
  %v562 = vsel %vm533, %v458, 0
  %v565 = vsel %vm533, %v459, 0
  %v568 = vsel %vm533, %v460, 0
  %v571 = vsel %vm533, %v461, 0
  %v574 = vsel %vm533, %v462, 0
  %v577 = vsel %vm533, %v463, 0
  %v580 = vsel %vm533, %v464, 0
  %582 = vmatpush.bf16.msra.mxu0 0
  %583 = vmatpush.bf16.msra.mxu0 0
  %584 = vmatpush.bf16.msra.mxu0 0
  %585 = vmatpush.bf16.msra.mxu0 %v535
  %586 = vmatpush.bf16.msra.mxu0 %v433
  %587 = vmatpush.bf16.msra.mxu0 %v417
  %588 = vmatpush.bf16.msra.mxu0 %v401
  %589 = vmatpush.bf16.msra.mxu0 %v385
  %590 = vmatmul.bf16.gmra.mxu0 %v531
  %v591 = vpop.f32.mrf.mxu0
  %v592 = vadd.f32 0.0, %v591
  %v593 = vpop.f32.mrf.mxu0
  %594 = vdwg.mxu0
  %595 = vmatpush.bf16.msra.mxu0 0
  %596 = vmatpush.bf16.msra.mxu0 0
  %597 = vmatpush.bf16.msra.mxu0 0
  %598 = vmatpush.bf16.msra.mxu0 %v538
  %599 = vmatpush.bf16.msra.mxu0 %v434
  %600 = vmatpush.bf16.msra.mxu0 %v418
  %601 = vmatpush.bf16.msra.mxu0 %v402
  %602 = vmatpush.bf16.msra.mxu0 %v386
  %603 = vmatmul.bf16.gmra.mxu0 %v531
  %v604 = vpop.f32.mrf.mxu0
  %v605 = vadd.f32 0.0, %v604
  %v606 = vpop.f32.mrf.mxu0
  %607 = vdwg.mxu0
  %608 = vmatpush.bf16.msra.mxu0 0
  %609 = vmatpush.bf16.msra.mxu0 0
  %610 = vmatpush.bf16.msra.mxu0 0
  %611 = vmatpush.bf16.msra.mxu0 %v541
  %612 = vmatpush.bf16.msra.mxu0 %v435
  %613 = vmatpush.bf16.msra.mxu0 %v419
  %614 = vmatpush.bf16.msra.mxu0 %v403
  %615 = vmatpush.bf16.msra.mxu0 %v387
  %616 = vmatmul.bf16.gmra.mxu0 %v531
  %v617 = vpop.f32.mrf.mxu0
  %v618 = vadd.f32 0.0, %v617
  %v619 = vpop.f32.mrf.mxu0
  %620 = vdwg.mxu0
  %621 = vmatpush.bf16.msra.mxu0 0
  %622 = vmatpush.bf16.msra.mxu0 0
  %623 = vmatpush.bf16.msra.mxu0 0
  %624 = vmatpush.bf16.msra.mxu0 %v544
  %625 = vmatpush.bf16.msra.mxu0 %v436
  %626 = vmatpush.bf16.msra.mxu0 %v420
  %627 = vmatpush.bf16.msra.mxu0 %v404
  %628 = vmatpush.bf16.msra.mxu0 %v388
  %629 = vmatmul.bf16.gmra.mxu0 %v531
  %v630 = vpop.f32.mrf.mxu0
  %v631 = vadd.f32 0.0, %v630
  %v632 = vpop.f32.mrf.mxu0
  %633 = vdwg.mxu0
  %634 = vmatpush.bf16.msra.mxu0 0
  %635 = vmatpush.bf16.msra.mxu0 0
  %636 = vmatpush.bf16.msra.mxu0 0
  %637 = vmatpush.bf16.msra.mxu0 %v547
  %638 = vmatpush.bf16.msra.mxu0 %v437
  %639 = vmatpush.bf16.msra.mxu0 %v421
  %640 = vmatpush.bf16.msra.mxu0 %v405
  %641 = vmatpush.bf16.msra.mxu0 %v389
  %642 = vmatmul.bf16.gmra.mxu0 %v531
  %v643 = vpop.f32.mrf.mxu0
  %v644 = vadd.f32 0.0, %v643
  %v645 = vpop.f32.mrf.mxu0
  %646 = vdwg.mxu0
  %647 = vmatpush.bf16.msra.mxu0 0
  %648 = vmatpush.bf16.msra.mxu0 0
  %649 = vmatpush.bf16.msra.mxu0 0
  %650 = vmatpush.bf16.msra.mxu0 %v550
  %651 = vmatpush.bf16.msra.mxu0 %v438
  %652 = vmatpush.bf16.msra.mxu0 %v422
  %653 = vmatpush.bf16.msra.mxu0 %v406
  %654 = vmatpush.bf16.msra.mxu0 %v390
  %655 = vmatmul.bf16.gmra.mxu0 %v531
  %v656 = vpop.f32.mrf.mxu0
  %v657 = vadd.f32 0.0, %v656
  %v658 = vpop.f32.mrf.mxu0
  %659 = vdwg.mxu0
  %660 = vmatpush.bf16.msra.mxu0 0
  %661 = vmatpush.bf16.msra.mxu0 0
  %662 = vmatpush.bf16.msra.mxu0 0
  %663 = vmatpush.bf16.msra.mxu0 %v553
  %664 = vmatpush.bf16.msra.mxu0 %v439
  %665 = vmatpush.bf16.msra.mxu0 %v423
  %666 = vmatpush.bf16.msra.mxu0 %v407
  %667 = vmatpush.bf16.msra.mxu0 %v391
  %668 = vmatmul.bf16.gmra.mxu0 %v531
  %v669 = vpop.f32.mrf.mxu0
  %v670 = vadd.f32 0.0, %v669
  %v671 = vpop.f32.mrf.mxu0
  %672 = vdwg.mxu0
  %673 = vmatpush.bf16.msra.mxu0 0
  %674 = vmatpush.bf16.msra.mxu0 0
  %675 = vmatpush.bf16.msra.mxu0 0
  %676 = vmatpush.bf16.msra.mxu0 %v556
  %677 = vmatpush.bf16.msra.mxu0 %v440
  %678 = vmatpush.bf16.msra.mxu0 %v424
  %679 = vmatpush.bf16.msra.mxu0 %v408
  %680 = vmatpush.bf16.msra.mxu0 %v392
  %681 = vmatmul.bf16.gmra.mxu0 %v531
  %v682 = vpop.f32.mrf.mxu0
  %v683 = vadd.f32 0.0, %v682
  %v684 = vpop.f32.mrf.mxu0
  %685 = vdwg.mxu0
  %686 = vmatpush.bf16.msra.mxu0 0
  %687 = vmatpush.bf16.msra.mxu0 0
  %688 = vmatpush.bf16.msra.mxu0 0
  %689 = vmatpush.bf16.msra.mxu0 %v559
  %690 = vmatpush.bf16.msra.mxu0 %v441
  %691 = vmatpush.bf16.msra.mxu0 %v425
  %692 = vmatpush.bf16.msra.mxu0 %v409
  %693 = vmatpush.bf16.msra.mxu0 %v393
  %694 = vmatmul.bf16.gmra.mxu0 %v531
  %v695 = vpop.f32.mrf.mxu0
  %v696 = vadd.f32 0.0, %v695
  %v697 = vpop.f32.mrf.mxu0
  %698 = vdwg.mxu0
  %699 = vmatpush.bf16.msra.mxu0 0
  %700 = vmatpush.bf16.msra.mxu0 0
  %701 = vmatpush.bf16.msra.mxu0 0
  %702 = vmatpush.bf16.msra.mxu0 %v562
  %703 = vmatpush.bf16.msra.mxu0 %v442
  %704 = vmatpush.bf16.msra.mxu0 %v426
  %705 = vmatpush.bf16.msra.mxu0 %v410
  %706 = vmatpush.bf16.msra.mxu0 %v394
  %707 = vmatmul.bf16.gmra.mxu0 %v531
  %v708 = vpop.f32.mrf.mxu0
  %v709 = vadd.f32 0.0, %v708
  %v710 = vpop.f32.mrf.mxu0
  %711 = vdwg.mxu0
  %712 = vmatpush.bf16.msra.mxu0 0
  %713 = vmatpush.bf16.msra.mxu0 0
  %714 = vmatpush.bf16.msra.mxu0 0
  %715 = vmatpush.bf16.msra.mxu0 %v565
  %716 = vmatpush.bf16.msra.mxu0 %v443
  %717 = vmatpush.bf16.msra.mxu0 %v427
  %718 = vmatpush.bf16.msra.mxu0 %v411
  %719 = vmatpush.bf16.msra.mxu0 %v395
  %720 = vmatmul.bf16.gmra.mxu0 %v531
  %v721 = vpop.f32.mrf.mxu0
  %v722 = vadd.f32 0.0, %v721
  %v723 = vpop.f32.mrf.mxu0
  %724 = vdwg.mxu0
  %725 = vmatpush.bf16.msra.mxu0 0
  %726 = vmatpush.bf16.msra.mxu0 0
  %727 = vmatpush.bf16.msra.mxu0 0
  %728 = vmatpush.bf16.msra.mxu0 %v568
  %729 = vmatpush.bf16.msra.mxu0 %v444
  %730 = vmatpush.bf16.msra.mxu0 %v428
  %731 = vmatpush.bf16.msra.mxu0 %v412
  %732 = vmatpush.bf16.msra.mxu0 %v396
  %733 = vmatmul.bf16.gmra.mxu0 %v531
  %v734 = vpop.f32.mrf.mxu0
  %v735 = vadd.f32 0.0, %v734
  %v736 = vpop.f32.mrf.mxu0
  %737 = vdwg.mxu0
  %738 = vmatpush.bf16.msra.mxu0 0
  %739 = vmatpush.bf16.msra.mxu0 0
  %740 = vmatpush.bf16.msra.mxu0 0
  %741 = vmatpush.bf16.msra.mxu0 %v571
  %742 = vmatpush.bf16.msra.mxu0 %v445
  %743 = vmatpush.bf16.msra.mxu0 %v429
  %744 = vmatpush.bf16.msra.mxu0 %v413
  %745 = vmatpush.bf16.msra.mxu0 %v397
  %746 = vmatmul.bf16.gmra.mxu0 %v531
  %v747 = vpop.f32.mrf.mxu0
  %v748 = vadd.f32 0.0, %v747
  %v749 = vpop.f32.mrf.mxu0
  %750 = vdwg.mxu0
  %751 = vmatpush.bf16.msra.mxu0 0
  %752 = vmatpush.bf16.msra.mxu0 0
  %753 = vmatpush.bf16.msra.mxu0 0
  %754 = vmatpush.bf16.msra.mxu0 %v574
  %755 = vmatpush.bf16.msra.mxu0 %v446
  %756 = vmatpush.bf16.msra.mxu0 %v430
  %757 = vmatpush.bf16.msra.mxu0 %v414
  %758 = vmatpush.bf16.msra.mxu0 %v398
  %759 = vmatmul.bf16.gmra.mxu0 %v531
  %v760 = vpop.f32.mrf.mxu0
  %v761 = vadd.f32 0.0, %v760
  %v762 = vpop.f32.mrf.mxu0
  %763 = vdwg.mxu0
  %764 = vmatpush.bf16.msra.mxu0 0
  %765 = vmatpush.bf16.msra.mxu0 0
  %766 = vmatpush.bf16.msra.mxu0 0
  %767 = vmatpush.bf16.msra.mxu0 %v577
  %768 = vmatpush.bf16.msra.mxu0 %v447
  %769 = vmatpush.bf16.msra.mxu0 %v431
  %770 = vmatpush.bf16.msra.mxu0 %v415
  %771 = vmatpush.bf16.msra.mxu0 %v399
  %772 = vmatmul.bf16.gmra.mxu0 %v531
  %v773 = vpop.f32.mrf.mxu0
  %v774 = vadd.f32 0.0, %v773
  %v775 = vpop.f32.mrf.mxu0
  %776 = vdwg.mxu0
  %777 = vmatpush.bf16.msra.mxu0 0
  %778 = vmatpush.bf16.msra.mxu0 0
  %779 = vmatpush.bf16.msra.mxu0 0
  %780 = vmatpush.bf16.msra.mxu0 %v580
  %781 = vmatpush.bf16.msra.mxu0 %v448
  %782 = vmatpush.bf16.msra.mxu0 %v432
  %783 = vmatpush.bf16.msra.mxu0 %v416
  %784 = vmatpush.bf16.msra.mxu0 %v400
  %785 = vmatmul.bf16.gmra.mxu0 %v531
  %v786 = vpop.f32.mrf.mxu0
  %v787 = vadd.f32 0.0, %v786
  %v788 = vpop.f32.mrf.mxu0
  %789 = vdwg.mxu0
  %v862 = vunpack.c.l.b16 %v24
  %v863 = vunpack.c.h.b16 %v24
  %v864 = vunpack.c.l.b16 %v25
  %v865 = vunpack.c.h.b16 %v25
  %v866 = vunpack.c.l.b16 %v26
  %v867 = vunpack.c.h.b16 %v26
  %v868 = vunpack.c.l.b16 %v27
  %v869 = vunpack.c.h.b16 %v27
  %v870 = vunpack.c.l.b16 %v28
  %v871 = vunpack.c.h.b16 %v28
  %v872 = vunpack.c.l.b16 %v29
  %v873 = vunpack.c.h.b16 %v29
  %v874 = vunpack.c.l.b16 %v30
  %v875 = vunpack.c.h.b16 %v30
  %v876 = vunpack.c.l.b16 %v31
  %v877 = vunpack.c.h.b16 %v31
  %v878 = vunpack.c.l.b16 %v32
  %v879 = vunpack.c.h.b16 %v32
  %v880 = vunpack.c.l.b16 %v33
  %v881 = vunpack.c.h.b16 %v33
  %v882 = vunpack.c.l.b16 %v34
  %v883 = vunpack.c.h.b16 %v34
  %v884 = vunpack.c.l.b16 %v35
  %v885 = vunpack.c.h.b16 %v35
  %v886 = vunpack.c.l.b16 %v36
  %v887 = vunpack.c.h.b16 %v36
  %v888 = vunpack.c.l.b16 %v37
  %v889 = vunpack.c.h.b16 %v37
  %v890 = vunpack.c.l.b16 %v38
  %v891 = vunpack.c.h.b16 %v38
  %v892 = vunpack.c.l.b16 %v39
  %v893 = vunpack.c.h.b16 %v39
  %v894 = vunpack.c.l.b16 %v40
  %v895 = vunpack.c.h.b16 %v40
  %v896 = vunpack.c.l.b16 %v41
  %v897 = vunpack.c.h.b16 %v41
  %v898 = vunpack.c.l.b16 %v42
  %v899 = vunpack.c.h.b16 %v42
  %v900 = vunpack.c.l.b16 %v43
  %v901 = vunpack.c.h.b16 %v43
  %v902 = vunpack.c.l.b16 %v44
  %v903 = vunpack.c.h.b16 %v44
  %v904 = vunpack.c.l.b16 %v45
  %v905 = vunpack.c.h.b16 %v45
  %v906 = vunpack.c.l.b16 %v46
  %v907 = vunpack.c.h.b16 %v46
  %v908 = vunpack.c.l.b16 %v47
  %v909 = vunpack.c.h.b16 %v47
  %v910 = vunpack.c.l.b16 %v48
  %v911 = vunpack.c.h.b16 %v48
  %v912 = vunpack.c.l.b16 %v49
  %v913 = vunpack.c.h.b16 %v49
  %v914 = vunpack.c.l.b16 %v50
  %v915 = vunpack.c.h.b16 %v50
  %v916 = vunpack.c.l.b16 %v51
  %v917 = vunpack.c.h.b16 %v51
  %v918 = vunpack.c.l.b16 %v52
  %v919 = vunpack.c.h.b16 %v52
  %v920 = vunpack.c.l.b16 %v53
  %v921 = vunpack.c.h.b16 %v53
  %v922 = vunpack.c.l.b16 %v54
  %v923 = vunpack.c.h.b16 %v54
  %v924 = vunpack.c.l.b16 %v55
  %v925 = vunpack.c.h.b16 %v55
  %v926 = vunpack.c.l.b16 %v56
  %v927 = vunpack.c.h.b16 %v56
  %v928 = vunpack.c.l.b16 %v57
  %v929 = vunpack.c.h.b16 %v57
  %v930 = vunpack.c.l.b16 %v58
  %v931 = vunpack.c.h.b16 %v58
  %v932 = vunpack.c.l.b16 %v59
  %v933 = vunpack.c.h.b16 %v59
  %v934 = vunpack.c.l.b16 %v60
  %v935 = vunpack.c.h.b16 %v60
  %v936 = vunpack.c.l.b16 %v61
  %v937 = vunpack.c.h.b16 %v61
  %v938 = vunpack.c.l.b16 %v62
  %v939 = vunpack.c.h.b16 %v62
  %v940 = vunpack.c.l.b16 %v63
  %v941 = vunpack.c.h.b16 %v63
  %v942 = vunpack.c.l.b16 %v64
  %v943 = vunpack.c.h.b16 %v64
  %v944 = vunpack.c.l.b16 %v65
  %v945 = vunpack.c.h.b16 %v65
  %v946 = vunpack.c.l.b16 %v66
  %v947 = vunpack.c.h.b16 %v66
  %v948 = vunpack.c.l.b16 %v67
  %v949 = vunpack.c.h.b16 %v67
  %v950 = vunpack.c.l.b16 %v68
  %v951 = vunpack.c.h.b16 %v68
  %v952 = vunpack.c.l.b16 %v69
  %v953 = vunpack.c.h.b16 %v69
  %v954 = vunpack.c.l.b16 %v70
  %v955 = vunpack.c.h.b16 %v70
  %v956 = vunpack.c.l.b16 %v71
  %v957 = vunpack.c.h.b16 %v71
  %v958 = vunpack.c.l.b16 %v72
  %v959 = vunpack.c.h.b16 %v72
  %v960 = vunpack.c.l.b16 %v73
  %v961 = vunpack.c.h.b16 %v73
  %v962 = vunpack.c.l.b16 %v74
  %v963 = vunpack.c.h.b16 %v74
  %v964 = vunpack.c.l.b16 %v75
  %v965 = vunpack.c.h.b16 %v75
  %v966 = vunpack.c.l.b16 %v76
  %v967 = vunpack.c.h.b16 %v76
  %v968 = vunpack.c.l.b16 %v77
  %v969 = vunpack.c.h.b16 %v77
  %v970 = vunpack.c.l.b16 %v78
  %v971 = vunpack.c.h.b16 %v78
  %v972 = vunpack.c.l.b16 %v79
  %v973 = vunpack.c.h.b16 %v79
  %v974 = vunpack.c.l.b16 %v80
  %v975 = vunpack.c.h.b16 %v80
  %v976 = vunpack.c.l.b16 %v81
  %v977 = vunpack.c.h.b16 %v81
  %v978 = vunpack.c.l.b16 %v82
  %v979 = vunpack.c.h.b16 %v82
  %v980 = vunpack.c.l.b16 %v83
  %v981 = vunpack.c.h.b16 %v83
  %v982 = vunpack.c.l.b16 %v84
  %v983 = vunpack.c.h.b16 %v84
  %v984 = vunpack.c.l.b16 %v85
  %v985 = vunpack.c.h.b16 %v85
  %v986 = vunpack.c.l.b16 %v86
  %v987 = vunpack.c.h.b16 %v86
  %v988 = vunpack.c.l.b16 %v87
  %v989 = vunpack.c.h.b16 %v87
  %v990 = vunpack.c.l.b16 %v88
  %v991 = vunpack.c.h.b16 %v88
  %v992 = vunpack.c.l.b16 %v89
  %v993 = vunpack.c.h.b16 %v89
  %v994 = vunpack.c.l.b16 %v90
  %v995 = vunpack.c.h.b16 %v90
  %v996 = vunpack.c.l.b16 %v91
  %v997 = vunpack.c.h.b16 %v91
  %v998 = vunpack.c.l.b16 %v92
  %v999 = vunpack.c.h.b16 %v92
  %v1000 = vunpack.c.l.b16 %v93
  %v1001 = vunpack.c.h.b16 %v93
  %v1002 = vunpack.c.l.b16 %v94
  %v1003 = vunpack.c.h.b16 %v94
  %v1004 = vunpack.c.l.b16 %v95
  %v1005 = vunpack.c.h.b16 %v95
  %v1006 = vpack.c.b16 %v878, %v862
  %v1007 = vpack.c.b16 %v879, %v863
  %v1008 = vpack.c.b16 %v880, %v864
  %v1009 = vpack.c.b16 %v881, %v865
  %v1010 = vpack.c.b16 %v882, %v866
  %v1011 = vpack.c.b16 %v883, %v867
  %v1012 = vpack.c.b16 %v884, %v868
  %v1013 = vpack.c.b16 %v885, %v869
  %v1014 = vpack.c.b16 %v886, %v870
  %v1015 = vpack.c.b16 %v887, %v871
  %v1016 = vpack.c.b16 %v888, %v872
  %v1017 = vpack.c.b16 %v889, %v873
  %v1018 = vpack.c.b16 %v890, %v874
  %v1019 = vpack.c.b16 %v891, %v875
  %v1020 = vpack.c.b16 %v892, %v876
  %v1021 = vpack.c.b16 %v893, %v877
  %v1022 = vpack.c.b16 %v910, %v894
  %v1023 = vpack.c.b16 %v911, %v895
  %v1024 = vpack.c.b16 %v912, %v896
  %v1025 = vpack.c.b16 %v913, %v897
  %v1026 = vpack.c.b16 %v914, %v898
  %v1027 = vpack.c.b16 %v915, %v899
  %v1028 = vpack.c.b16 %v916, %v900
  %v1029 = vpack.c.b16 %v917, %v901
  %v1030 = vpack.c.b16 %v918, %v902
  %v1031 = vpack.c.b16 %v919, %v903
  %v1032 = vpack.c.b16 %v920, %v904
  %v1033 = vpack.c.b16 %v921, %v905
  %v1034 = vpack.c.b16 %v922, %v906
  %v1035 = vpack.c.b16 %v923, %v907
  %v1036 = vpack.c.b16 %v924, %v908
  %v1037 = vpack.c.b16 %v925, %v909
  %v1038 = vpack.c.b16 %v942, %v926
  %v1039 = vpack.c.b16 %v943, %v927
  %v1040 = vpack.c.b16 %v944, %v928
  %v1041 = vpack.c.b16 %v945, %v929
  %v1042 = vpack.c.b16 %v946, %v930
  %v1043 = vpack.c.b16 %v947, %v931
  %v1044 = vpack.c.b16 %v948, %v932
  %v1045 = vpack.c.b16 %v949, %v933
  %v1046 = vpack.c.b16 %v950, %v934
  %v1047 = vpack.c.b16 %v951, %v935
  %v1048 = vpack.c.b16 %v952, %v936
  %v1049 = vpack.c.b16 %v953, %v937
  %v1050 = vpack.c.b16 %v954, %v938
  %v1051 = vpack.c.b16 %v955, %v939
  %v1052 = vpack.c.b16 %v956, %v940
  %v1053 = vpack.c.b16 %v957, %v941
  %v1054 = vpack.c.b16 %v974, %v958
  %v1055 = vpack.c.b16 %v975, %v959
  %v1056 = vpack.c.b16 %v976, %v960
  %v1057 = vpack.c.b16 %v977, %v961
  %v1058 = vpack.c.b16 %v978, %v962
  %v1059 = vpack.c.b16 %v979, %v963
  %v1060 = vpack.c.b16 %v980, %v964
  %v1061 = vpack.c.b16 %v981, %v965
  %v1062 = vpack.c.b16 %v982, %v966
  %v1063 = vpack.c.b16 %v983, %v967
  %v1064 = vpack.c.b16 %v984, %v968
  %v1065 = vpack.c.b16 %v985, %v969
  %v1066 = vpack.c.b16 %v986, %v970
  %v1067 = vpack.c.b16 %v987, %v971
  %v1068 = vpack.c.b16 %v988, %v972
  %v1069 = vpack.c.b16 %v989, %v973
  %v1070 = vpack.c.b16 %v990, %v990
  %v1071 = vpack.c.b16 %v991, %v991
  %v1072 = vpack.c.b16 %v992, %v992
  %v1073 = vpack.c.b16 %v993, %v993
  %v1074 = vpack.c.b16 %v994, %v994
  %v1075 = vpack.c.b16 %v995, %v995
  %v1076 = vpack.c.b16 %v996, %v996
  %v1077 = vpack.c.b16 %v997, %v997
  %v1078 = vpack.c.b16 %v998, %v998
  %v1079 = vpack.c.b16 %v999, %v999
  %v1080 = vpack.c.b16 %v1000, %v1000
  %v1081 = vpack.c.b16 %v1001, %v1001
  %v1082 = vpack.c.b16 %v1002, %v1002
  %v1083 = vpack.c.b16 %v1003, %v1003
  %v1084 = vpack.c.b16 %v1004, %v1004
  %v1085 = vpack.c.b16 %v1005, %v1005
  %v1151 = vsel %vm529, %v23, 0
  %v1154 = vsel %vm533, %v1070, 0
  %v1157 = vsel %vm533, %v1071, 0
  %v1160 = vsel %vm533, %v1072, 0
  %v1163 = vsel %vm533, %v1073, 0
  %v1166 = vsel %vm533, %v1074, 0
  %v1169 = vsel %vm533, %v1075, 0
  %v1172 = vsel %vm533, %v1076, 0
  %v1175 = vsel %vm533, %v1077, 0
  %v1178 = vsel %vm533, %v1078, 0
  %v1181 = vsel %vm533, %v1079, 0
  %v1184 = vsel %vm533, %v1080, 0
  %v1187 = vsel %vm533, %v1081, 0
  %v1190 = vsel %vm533, %v1082, 0
  %v1193 = vsel %vm533, %v1083, 0
  %v1196 = vsel %vm533, %v1084, 0
  %v1199 = vsel %vm533, %v1085, 0
  %1201 = vmatpush.bf16.msra.mxu0 0
  %1202 = vmatpush.bf16.msra.mxu0 0
  %1203 = vmatpush.bf16.msra.mxu0 0
  %1204 = vmatpush.bf16.msra.mxu0 %v1154
  %1205 = vmatpush.bf16.msra.mxu0 %v1054
  %1206 = vmatpush.bf16.msra.mxu0 %v1038
  %1207 = vmatpush.bf16.msra.mxu0 %v1022
  %1208 = vmatpush.bf16.msra.mxu0 %v1006
  %1209 = vmatmul.bf16.gmra.mxu0 %v1151
  %v1210 = vpop.f32.mrf.mxu0
  %v1211 = vadd.f32 %v592, %v1210
  %v1212 = vpop.f32.mrf.mxu0
  %1213 = vdwg.mxu0
  %1214 = vmatpush.bf16.msra.mxu0 0
  %1215 = vmatpush.bf16.msra.mxu0 0
  %1216 = vmatpush.bf16.msra.mxu0 0
  %1217 = vmatpush.bf16.msra.mxu0 %v1157
  %1218 = vmatpush.bf16.msra.mxu0 %v1055
  %1219 = vmatpush.bf16.msra.mxu0 %v1039
  %1220 = vmatpush.bf16.msra.mxu0 %v1023
  %1221 = vmatpush.bf16.msra.mxu0 %v1007
  %1222 = vmatmul.bf16.gmra.mxu0 %v1151
  %v1223 = vpop.f32.mrf.mxu0
  %v1224 = vadd.f32 %v605, %v1223
  %v1225 = vpop.f32.mrf.mxu0
  %1226 = vdwg.mxu0
  %1227 = vmatpush.bf16.msra.mxu0 0
  %1228 = vmatpush.bf16.msra.mxu0 0
  %1229 = vmatpush.bf16.msra.mxu0 0
  %1230 = vmatpush.bf16.msra.mxu0 %v1160
  %1231 = vmatpush.bf16.msra.mxu0 %v1056
  %1232 = vmatpush.bf16.msra.mxu0 %v1040
  %1233 = vmatpush.bf16.msra.mxu0 %v1024
  %1234 = vmatpush.bf16.msra.mxu0 %v1008
  %1235 = vmatmul.bf16.gmra.mxu0 %v1151
  %v1236 = vpop.f32.mrf.mxu0
  %v1237 = vadd.f32 %v618, %v1236
  %v1238 = vpop.f32.mrf.mxu0
  %1239 = vdwg.mxu0
  %1240 = vmatpush.bf16.msra.mxu0 0
  %1241 = vmatpush.bf16.msra.mxu0 0
  %1242 = vmatpush.bf16.msra.mxu0 0
  %1243 = vmatpush.bf16.msra.mxu0 %v1163
  %1244 = vmatpush.bf16.msra.mxu0 %v1057
  %1245 = vmatpush.bf16.msra.mxu0 %v1041
  %1246 = vmatpush.bf16.msra.mxu0 %v1025
  %1247 = vmatpush.bf16.msra.mxu0 %v1009
  %1248 = vmatmul.bf16.gmra.mxu0 %v1151
  %v1249 = vpop.f32.mrf.mxu0
  %v1250 = vadd.f32 %v631, %v1249
  %v1251 = vpop.f32.mrf.mxu0
  %1252 = vdwg.mxu0
  %1253 = vmatpush.bf16.msra.mxu0 0
  %1254 = vmatpush.bf16.msra.mxu0 0
  %1255 = vmatpush.bf16.msra.mxu0 0
  %1256 = vmatpush.bf16.msra.mxu0 %v1166
  %1257 = vmatpush.bf16.msra.mxu0 %v1058
  %1258 = vmatpush.bf16.msra.mxu0 %v1042
  %1259 = vmatpush.bf16.msra.mxu0 %v1026
  %1260 = vmatpush.bf16.msra.mxu0 %v1010
  %1261 = vmatmul.bf16.gmra.mxu0 %v1151
  %v1262 = vpop.f32.mrf.mxu0
  %v1263 = vadd.f32 %v644, %v1262
  %v1264 = vpop.f32.mrf.mxu0
  %1265 = vdwg.mxu0
  %1266 = vmatpush.bf16.msra.mxu0 0
  %1267 = vmatpush.bf16.msra.mxu0 0
  %1268 = vmatpush.bf16.msra.mxu0 0
  %1269 = vmatpush.bf16.msra.mxu0 %v1169
  %1270 = vmatpush.bf16.msra.mxu0 %v1059
  %1271 = vmatpush.bf16.msra.mxu0 %v1043
  %1272 = vmatpush.bf16.msra.mxu0 %v1027
  %1273 = vmatpush.bf16.msra.mxu0 %v1011
  %1274 = vmatmul.bf16.gmra.mxu0 %v1151
  %v1275 = vpop.f32.mrf.mxu0
  %v1276 = vadd.f32 %v657, %v1275
  %v1277 = vpop.f32.mrf.mxu0
  %1278 = vdwg.mxu0
  %1279 = vmatpush.bf16.msra.mxu0 0
  %1280 = vmatpush.bf16.msra.mxu0 0
  %1281 = vmatpush.bf16.msra.mxu0 0
  %1282 = vmatpush.bf16.msra.mxu0 %v1172
  %1283 = vmatpush.bf16.msra.mxu0 %v1060
  %1284 = vmatpush.bf16.msra.mxu0 %v1044
  %1285 = vmatpush.bf16.msra.mxu0 %v1028
  %1286 = vmatpush.bf16.msra.mxu0 %v1012
  %1287 = vmatmul.bf16.gmra.mxu0 %v1151
  %v1288 = vpop.f32.mrf.mxu0
  %v1289 = vadd.f32 %v670, %v1288
  %v1290 = vpop.f32.mrf.mxu0
  %1291 = vdwg.mxu0
  %1292 = vmatpush.bf16.msra.mxu0 0
  %1293 = vmatpush.bf16.msra.mxu0 0
  %1294 = vmatpush.bf16.msra.mxu0 0
  %1295 = vmatpush.bf16.msra.mxu0 %v1175
  %1296 = vmatpush.bf16.msra.mxu0 %v1061
  %1297 = vmatpush.bf16.msra.mxu0 %v1045
  %1298 = vmatpush.bf16.msra.mxu0 %v1029
  %1299 = vmatpush.bf16.msra.mxu0 %v1013
  %1300 = vmatmul.bf16.gmra.mxu0 %v1151
  %v1301 = vpop.f32.mrf.mxu0
  %v1302 = vadd.f32 %v683, %v1301
  %v1303 = vpop.f32.mrf.mxu0
  %1304 = vdwg.mxu0
  %1305 = vmatpush.bf16.msra.mxu0 0
  %1306 = vmatpush.bf16.msra.mxu0 0
  %1307 = vmatpush.bf16.msra.mxu0 0
  %1308 = vmatpush.bf16.msra.mxu0 %v1178
  %1309 = vmatpush.bf16.msra.mxu0 %v1062
  %1310 = vmatpush.bf16.msra.mxu0 %v1046
  %1311 = vmatpush.bf16.msra.mxu0 %v1030
  %1312 = vmatpush.bf16.msra.mxu0 %v1014
  %1313 = vmatmul.bf16.gmra.mxu0 %v1151
  %v1314 = vpop.f32.mrf.mxu0
  %v1315 = vadd.f32 %v696, %v1314
  %v1316 = vpop.f32.mrf.mxu0
  %1317 = vdwg.mxu0
  %1318 = vmatpush.bf16.msra.mxu0 0
  %1319 = vmatpush.bf16.msra.mxu0 0
  %1320 = vmatpush.bf16.msra.mxu0 0
  %1321 = vmatpush.bf16.msra.mxu0 %v1181
  %1322 = vmatpush.bf16.msra.mxu0 %v1063
  %1323 = vmatpush.bf16.msra.mxu0 %v1047
  %1324 = vmatpush.bf16.msra.mxu0 %v1031
  %1325 = vmatpush.bf16.msra.mxu0 %v1015
  %1326 = vmatmul.bf16.gmra.mxu0 %v1151
  %v1327 = vpop.f32.mrf.mxu0
  %v1328 = vadd.f32 %v709, %v1327
  %v1329 = vpop.f32.mrf.mxu0
  %1330 = vdwg.mxu0
  %1331 = vmatpush.bf16.msra.mxu0 0
  %1332 = vmatpush.bf16.msra.mxu0 0
  %1333 = vmatpush.bf16.msra.mxu0 0
  %1334 = vmatpush.bf16.msra.mxu0 %v1184
  %1335 = vmatpush.bf16.msra.mxu0 %v1064
  %1336 = vmatpush.bf16.msra.mxu0 %v1048
  %1337 = vmatpush.bf16.msra.mxu0 %v1032
  %1338 = vmatpush.bf16.msra.mxu0 %v1016
  %1339 = vmatmul.bf16.gmra.mxu0 %v1151
  %v1340 = vpop.f32.mrf.mxu0
  %v1341 = vadd.f32 %v722, %v1340
  %v1342 = vpop.f32.mrf.mxu0
  %1343 = vdwg.mxu0
  %1344 = vmatpush.bf16.msra.mxu0 0
  %1345 = vmatpush.bf16.msra.mxu0 0
  %1346 = vmatpush.bf16.msra.mxu0 0
  %1347 = vmatpush.bf16.msra.mxu0 %v1187
  %1348 = vmatpush.bf16.msra.mxu0 %v1065
  %1349 = vmatpush.bf16.msra.mxu0 %v1049
  %1350 = vmatpush.bf16.msra.mxu0 %v1033
  %1351 = vmatpush.bf16.msra.mxu0 %v1017
  %1352 = vmatmul.bf16.gmra.mxu0 %v1151
  %v1353 = vpop.f32.mrf.mxu0
  %v1354 = vadd.f32 %v735, %v1353
  %v1355 = vpop.f32.mrf.mxu0
  %1356 = vdwg.mxu0
  %1357 = vmatpush.bf16.msra.mxu0 0
  %1358 = vmatpush.bf16.msra.mxu0 0
  %1359 = vmatpush.bf16.msra.mxu0 0
  %1360 = vmatpush.bf16.msra.mxu0 %v1190
  %1361 = vmatpush.bf16.msra.mxu0 %v1066
  %1362 = vmatpush.bf16.msra.mxu0 %v1050
  %1363 = vmatpush.bf16.msra.mxu0 %v1034
  %1364 = vmatpush.bf16.msra.mxu0 %v1018
  %1365 = vmatmul.bf16.gmra.mxu0 %v1151
  %v1366 = vpop.f32.mrf.mxu0
  %v1367 = vadd.f32 %v748, %v1366
  %v1368 = vpop.f32.mrf.mxu0
  %1369 = vdwg.mxu0
  %1370 = vmatpush.bf16.msra.mxu0 0
  %1371 = vmatpush.bf16.msra.mxu0 0
  %1372 = vmatpush.bf16.msra.mxu0 0
  %1373 = vmatpush.bf16.msra.mxu0 %v1193
  %1374 = vmatpush.bf16.msra.mxu0 %v1067
  %1375 = vmatpush.bf16.msra.mxu0 %v1051
  %1376 = vmatpush.bf16.msra.mxu0 %v1035
  %1377 = vmatpush.bf16.msra.mxu0 %v1019
  %1378 = vmatmul.bf16.gmra.mxu0 %v1151
  %v1379 = vpop.f32.mrf.mxu0
  %v1380 = vadd.f32 %v761, %v1379
  %v1381 = vpop.f32.mrf.mxu0
  %1382 = vdwg.mxu0
  %1383 = vmatpush.bf16.msra.mxu0 0
  %1384 = vmatpush.bf16.msra.mxu0 0
  %1385 = vmatpush.bf16.msra.mxu0 0
  %1386 = vmatpush.bf16.msra.mxu0 %v1196
  %1387 = vmatpush.bf16.msra.mxu0 %v1068
  %1388 = vmatpush.bf16.msra.mxu0 %v1052
  %1389 = vmatpush.bf16.msra.mxu0 %v1036
  %1390 = vmatpush.bf16.msra.mxu0 %v1020
  %1391 = vmatmul.bf16.gmra.mxu0 %v1151
  %v1392 = vpop.f32.mrf.mxu0
  %v1393 = vadd.f32 %v774, %v1392
  %v1394 = vpop.f32.mrf.mxu0
  %1395 = vdwg.mxu0
  %1396 = vmatpush.bf16.msra.mxu0 0
  %1397 = vmatpush.bf16.msra.mxu0 0
  %1398 = vmatpush.bf16.msra.mxu0 0
  %1399 = vmatpush.bf16.msra.mxu0 %v1199
  %1400 = vmatpush.bf16.msra.mxu0 %v1069
  %1401 = vmatpush.bf16.msra.mxu0 %v1053
  %1402 = vmatpush.bf16.msra.mxu0 %v1037
  %1403 = vmatpush.bf16.msra.mxu0 %v1021
  %1404 = vmatmul.bf16.gmra.mxu0 %v1151
  %v1405 = vpop.f32.mrf.mxu0
  %v1406 = vadd.f32 %v787, %v1405
  %v1407 = vpop.f32.mrf.mxu0
  %1408 = vdwg.mxu0
  %v1409 = vld [vmem:[#allocation2] sm:$0x1]
  %1411 = vset.pattern.permute.xlu0 0
  %1412 = vperm.xlu0 %1411, %v1409
  %v1413 = vpop.permute.xlu0 %1412
  %v1415 = vperm.slane %v1413, 0
  %v1416 = vadd.f32 %v1211, %v1415
  %v1417 = vadd.f32 %v1224, %v1415
  %v1418 = vadd.f32 %v1237, %v1415
  %v1419 = vadd.f32 %v1250, %v1415
  %v1420 = vadd.f32 %v1263, %v1415
  %v1421 = vadd.f32 %v1276, %v1415
  %v1422 = vadd.f32 %v1289, %v1415
  %v1423 = vadd.f32 %v1302, %v1415
  %v1424 = vadd.f32 %v1315, %v1415
  %v1425 = vadd.f32 %v1328, %v1415
  %v1426 = vadd.f32 %v1341, %v1415
  %v1427 = vadd.f32 %v1354, %v1415
  %v1428 = vadd.f32 %v1367, %v1415
  %v1429 = vadd.f32 %v1380, %v1415
  %v1430 = vadd.f32 %v1393, %v1415
  %v1431 = vadd.f32 %v1406, %v1415
  %v1432 = vtanh.pop %v1416
  %v1433 = vtanh.pop %v1417
  %v1434 = vtanh.pop %v1418
  %v1435 = vtanh.pop %v1419
  %v1436 = vtanh.pop %v1420
  %v1437 = vtanh.pop %v1421
  %v1438 = vtanh.pop %v1422
  %v1439 = vtanh.pop %v1423
  %v1440 = vtanh.pop %v1424
  %v1441 = vtanh.pop %v1425
  %v1442 = vtanh.pop %v1426
  %v1443 = vtanh.pop %v1427
  %v1444 = vtanh.pop %v1428
  %v1445 = vtanh.pop %v1429
  %v1446 = vtanh.pop %v1430
  %v1447 = vtanh.pop %v1431
  %v1464 = vrot.slane %v1433, 7
  %v1465 = vrot.slane %v1434, 6
  %v1466 = vrot.slane %v1435, 5
  %v1467 = vrot.slane %v1436, 4
  %v1468 = vrot.slane %v1437, 3
  %v1469 = vrot.slane %v1438, 2
  %v1470 = vrot.slane %v1439, 1
  %v1471 = vrot.slane %v1441, 7
  %v1472 = vrot.slane %v1442, 6
  %v1473 = vrot.slane %v1443, 5
  %v1474 = vrot.slane %v1444, 4
  %v1475 = vrot.slane %v1445, 3
  %v1476 = vrot.slane %v1446, 2
  %v1477 = vrot.slane %v1447, 1
  %vm1478 = vcmask 1040384
  %v1479 = vsel %vm1478, %v1432, %v1464
  %vm1480 = vcmask 1042434
  %v1481 = vsel %vm1480, %v1465, %v1466
  %vm1482 = vcmask 1041408
  %v1483 = vsel %vm1482, %v1479, %v1481
  %vm1484 = vcmask 1044484
  %v1485 = vsel %vm1484, %v1467, %v1468
  %vm1486 = vcmask 1046534
  %v1487 = vsel %vm1486, %v1469, %v1470
  %vm1488 = vcmask 1045508
  %v1489 = vsel %vm1488, %v1485, %v1487
  %v1490 = vsel %vm533, %v1483, %v1489
  %v1491 = vsel %vm1478, %v1440, %v1471
  %v1492 = vsel %vm1480, %v1472, %v1473
  %v1493 = vsel %vm1482, %v1491, %v1492
  %v1494 = vsel %vm1484, %v1474, %v1475
  %v1495 = vsel %vm1486, %v1476, %v1477
  %v1496 = vsel %vm1488, %v1494, %v1495
  %v1497 = vsel %vm533, %v1493, %v1496
  %1500 = vst [vmem:[%s5] sm:$0xff] %v1490
  %1501 = vst [vmem:[%s5 + $0x8] sm:$0xff] %v1497
  // Predicated region
  $region22: #{generator_forward.11} parent=0 // pred_check
    _
  $region23: #{generator_forward.11} parent=0 // pred_check_branch
    %1503 = sbr.rel (0) target = $region25
  $region24: #{generator_forward.11} parent=0 // pred_region
    _
  $region25: #{generator_forward.11} parent=0 // pred_fallthru
    _
  // Predicated region
  $region26: #{generator_forward.11} parent=0 // pred_check
    _
  $region27: #{generator_forward.11} parent=0 // pred_check_branch
    %1505 = sbr.rel (0) target = $region29
  $region28: #{generator_forward.11} parent=0 // pred_region
    _
  $region29: #{generator_forward.11} parent=0 // pred_fallthru
    _

</llo_original>
